<compile_context>
chip_gen: v7x
topology: tpu7x:2x2x1
jax: 0.10.0
libtpu: 0.0.40
codegen_flags: <defaults>
</compile_context>

<pallas_src>
import functools
import math

import jax
import jax.numpy as jnp
from jax import lax
from jax.experimental import pallas as pl
from jax.experimental.pallas import tpu as pltpu

NHEAD = 8          # nn.TransformerEncoderLayer(nhead=8)
LN_EPS = 1e-5      # default layer_norm_eps / nn.LayerNorm eps
C_PAD = 128        # lane-dense padded class dimension per head


def _layer_norm(x, w, b):
    mu = jnp.mean(x, axis=-1, keepdims=True)
    var = jnp.mean((x - mu) ** 2, axis=-1, keepdims=True)
    return (x - mu) * lax.rsqrt(var + LN_EPS) * w + b


# ---------------------------------------------------------------------------
# Fused kernel: 2-layer post-norm TransformerEncoder (unrolled) + 3 cls heads.
#   x:        (R, E) f32, R = attn_len * n_attn_batch, rows b-major (b*S_pad + s)
#   headmask: (E, E) bf16 block-diagonal ones over the 16-lane head segments
#   encoder weights stacked (n_layers, ...), head weights stacked (3, ...)
#   output:   (8*attn_len, 3*C_PAD) f32 lane-dense logits slab
# ---------------------------------------------------------------------------
def _make_fused_kernel(n_attn_batch, attn_len, e, n_layers, n_cls_heads, c_pad):
    L = attn_len          # attention sequence length (= batch size B)
    S = n_attn_batch      # attention batch (= padded token count S_pad)
    R = S * L

    def kernel(x_ref, mask_ref,
               wqkv_ref, bqkv_ref, wo_ref, bo_ref, ln1w_ref, ln1b_ref,
               w1_ref, b1_ref, w2_ref, b2_ref, ln2w_ref, ln2b_ref,
               hw1_ref, hb1_ref, hlnw_ref, hlnb_ref, hw2_ref, hb2_ref,
               o_ref):
        x = x_ref[...]                    # (R, E) f32 residual stream, VMEM-resident
        mask = mask_ref[...]              # (E, E) bf16 block-diag ones (16-lane heads)

        def shift_group(t, o):
            # Attention-group member at sequence offset +o.  Rows are b-major so the
            # partner row is (r + o*S) mod R: a single whole-array sublane rotation
            # (XLU), no lane slicing / relayout.  Correct under either rotation sign
            # convention because k and v are rotated identically per offset and the
            # softmax runs over all offsets.
            if o == 0:
                return t
            return pltpu.roll(t, shift=(R - o * S) % R, axis=0)

        # -------------------- 2 encoder layers, fully unrolled --------------------
        for l in range(n_layers):
            xb = x.astype(jnp.bfloat16)
            # fused QKV projection; 1/sqrt(dh) pre-folded into the Q weight columns
            qkv = (jnp.dot(xb, wqkv_ref[l], preferred_element_type=jnp.float32)
                   + bqkv_ref[l])
            q = qkv[:, :e]                # aligned 128-lane slices: no relayout
            k = qkv[:, e:2 * e]
            v = qkv[:, 2 * e:]

            # lane-resident multi-head attention over the L group members
            scores, values = [], []
            for o in range(L):
                k_o = shift_group(k, o)
                values.append(shift_group(v, o))
                # (q*k_o) @ blockdiag-ones: per-head dot product, broadcast back onto
                # the 16 lanes of each head in one MXU pass (M=R, K=N=128).
                scores.append(jnp.dot((q * k_o).astype(jnp.bfloat16), mask,
                                      preferred_element_type=jnp.float32))
            m = functools.reduce(jnp.maximum, scores)
            exps = [jnp.exp(s - m) for s in scores]
            denom = functools.reduce(jnp.add, exps)
            attn = functools.reduce(jnp.add,
                                    [p * vv for p, vv in zip(exps, values)])
            attn = attn * pl.reciprocal(denom, approx=True)   # EUP; ~1e-3 rel err

            attn = (jnp.dot(attn.astype(jnp.bfloat16), wo_ref[l],
                            preferred_element_type=jnp.float32) + bo_ref[l])

            # post-norm residual 1 (dropout p=0.1 is identity at eval)
            h1 = _layer_norm(x + attn, ln1w_ref[l], ln1b_ref[l])

            # feed-forward (ReLU)
            hidden = (jnp.dot(h1.astype(jnp.bfloat16), w1_ref[l],
                              preferred_element_type=jnp.float32) + b1_ref[l])
            hidden = jnp.maximum(hidden, 0.0)
            hidden = (jnp.dot(hidden.astype(jnp.bfloat16), w2_ref[l],
                              preferred_element_type=jnp.float32) + b2_ref[l])

            # post-norm residual 2
            x = _layer_norm(h1 + hidden, ln2w_ref[l], ln2b_ref[l])

        # -------------------- fused classification heads --------------------------
        # pooled token of example b is row b*S (s = 0).  Take the 8-row-aligned slab
        # at the head of every example block so all loads/stores stay unmasked; the
        # wanted rows (every 8th) are selected outside the kernel.
        pooled = jnp.concatenate([x[b * S:b * S + 8] for b in range(L)], axis=0)
        pooled_b = pooled.astype(jnp.bfloat16)                 # (8*L, E)
        for j in range(n_cls_heads):
            h = (jnp.dot(pooled_b, hw1_ref[j], preferred_element_type=jnp.float32)
                 + hb1_ref[j])
            h = _layer_norm(h, hlnw_ref[j], hlnb_ref[j])
            h = jnp.maximum(h, 0.0)        # Dropout(p=0.1) = identity at eval; ReLU
            h = (jnp.dot(h.astype(jnp.bfloat16), hw2_ref[j],
                         preferred_element_type=jnp.float32) + hb2_ref[j])
            o_ref[:, j * c_pad:(j + 1) * c_pad] = h            # aligned unmasked store

    return kernel


def fused_encoder_and_heads(x2d, headmask, enc, heads, *, n_attn_batch, attn_len,
                            c_pad=C_PAD):
    r, e = x2d.shape
    assert r == n_attn_batch * attn_len
    n_layers = enc['wqkv'].shape[0]
    ff = enc['w1'].shape[-1]
    n_cls_heads = heads['w1'].shape[0]
    pooled_rows = 8 * attn_len

    kernel = _make_fused_kernel(n_attn_batch, attn_len, e, n_layers, n_cls_heads,
                                c_pad)

    enc_order = ('wqkv', 'bqkv', 'wo', 'bo', 'ln1w', 'ln1b',
                 'w1', 'b1', 'w2', 'b2', 'ln2w', 'ln2b')
    head_order = ('w1', 'b1', 'lnw', 'lnb', 'w2', 'b2')
    operands = [x2d, headmask] + [enc[k] for k in enc_order] \
        + [heads[k] for k in head_order]

    def full_spec(a):
        return pl.BlockSpec(a.shape, lambda i, _n=a.ndim: (0,) * _n)

    # advisory cost hint for the XLA scheduler
    flops = (n_layers * (2 * r * e * (3 * e) + attn_len * 2 * r * e * e
                         + 2 * r * e * e + 4 * r * e * ff)
             + n_cls_heads * (2 * pooled_rows * e * e + 2 * pooled_rows * e * c_pad))
    transcendentals = n_layers * (attn_len + 1) * r * e
    bytes_accessed = (sum(int(a.size) * a.dtype.itemsize for a in operands)
                      + pooled_rows * n_cls_heads * c_pad * 4)

    return pl.pallas_call(
        kernel,
        grid=(1,),
        out_shape=jax.ShapeDtypeStruct((pooled_rows, n_cls_heads * c_pad),
                                       jnp.float32),
        in_specs=[full_spec(a) for a in operands],
        out_specs=pl.BlockSpec((pooled_rows, n_cls_heads * c_pad),
                               lambda i: (0, 0)),
        compiler_params=pltpu.CompilerParams(
            dimension_semantics=("arbitrary",),   # single step; no TC sharding
            vmem_limit_bytes=8 * 1024 * 1024),    # actual footprint ~1-3 MiB
        cost_estimate=pl.CostEstimate(flops=flops,
                                      transcendentals=transcendentals,
                                      bytes_accessed=bytes_accessed),
    )(*operands)


# ---------------------------------------------------------------------------
# Parameter construction (deterministic, synthetic). MXU operands stored bf16,
# biases / LayerNorm params f32. Per-layer / per-head params stacked.
# ---------------------------------------------------------------------------
def init_params(key, H=128, FF=256, n_classes=(6, 5, 4), vocab=100,
                patch_dim=3 * 8 * 8, n_layers=2, c_pad=C_PAD):
    keys = iter(jax.random.split(key, 64))
    dh = H // NHEAD

    def w(shape, dtype=jnp.bfloat16, scale=0.02):
        return (scale * jax.random.normal(next(keys), shape, jnp.float32)).astype(dtype)

    params = {
        'text_emb': w((vocab, H), jnp.float32),
        'patch_proj': w((patch_dim, H), jnp.float32),
        'patch_bias': jnp.zeros((H,), jnp.float32),
        'cls_token': w((1, 1, H), jnp.float32),
        # block-diagonal 0/1 mask: segment-sums + re-broadcasts the 16-lane head chunks
        'headmask': (jnp.arange(H)[:, None] // dh
                     == jnp.arange(H)[None, :] // dh).astype(jnp.bfloat16),
    }

    def make_wqkv():
        m = 0.02 * jax.random.normal(next(keys), (H, 3 * H), jnp.float32)
        # fold the 1/sqrt(dh) attention scale into the Q columns (when importing real
        # PyTorch weights, transpose in_proj_weight and fold the scale into the Q
        # rows/bias the same way).
        m = m.at[:, :H].multiply(1.0 / math.sqrt(dh))
        return m.astype(jnp.bfloat16)

    def stack(make):
        return jnp.stack([make() for _ in range(n_layers)], axis=0)

    params['encoder'] = {
        'wqkv': stack(make_wqkv),
        'bqkv': jnp.zeros((n_layers, 1, 3 * H), jnp.float32),
        'wo':   stack(lambda: w((H, H))),
        'bo':   jnp.zeros((n_layers, 1, H), jnp.float32),
        'ln1w': jnp.ones((n_layers, 1, H), jnp.float32),
        'ln1b': jnp.zeros((n_layers, 1, H), jnp.float32),
        'w1':   stack(lambda: w((H, FF))),
        'b1':   jnp.zeros((n_layers, 1, FF), jnp.float32),
        'w2':   stack(lambda: w((FF, H))),
        'b2':   jnp.zeros((n_layers, 1, H), jnp.float32),
        'ln2w': jnp.ones((n_layers, 1, H), jnp.float32),
        'ln2b': jnp.zeros((n_layers, 1, H), jnp.float32),
    }

    # three heads; final-linear columns zero-padded to a lane-dense width c_pad
    w1s, w2s = [], []
    for c in n_classes:
        w1s.append(w((H, H)))
        w2_full = jnp.zeros((H, c_pad), jnp.float32)
        w2_full = w2_full.at[:, :c].set(
            0.02 * jax.random.normal(next(keys), (H, c), jnp.float32))
        w2s.append(w2_full.astype(jnp.bfloat16))
    nh = len(n_classes)
    params['heads'] = {
        'w1': jnp.stack(w1s),
        'b1': jnp.zeros((nh, 1, H), jnp.float32),
        'lnw': jnp.ones((nh, 1, H), jnp.float32),
        'lnb': jnp.zeros((nh, 1, H), jnp.float32),
        'w2': jnp.stack(w2s),
        'b2': jnp.zeros((nh, 1, c_pad), jnp.float32),
    }
    return params


# ---------------------------------------------------------------------------
# Backbone stand-ins + full forward pass (glue in XLA, hot path in the kernel)
# ---------------------------------------------------------------------------
def _backbone_features(params, input_ids, pixel_values):
    H = params['text_emb'].shape[1]
    B = input_ids.shape[0]

    # TODO(synk): xlm-roberta-large text backbone replaced by a deterministic
    # embedding lookup (pretrained HF model cannot be reproduced in-script).
    text_hidden = jnp.take(params['text_emb'], input_ids, axis=0)        # (B, S_t, H)

    # TODO(synk): ViTModel image backbone replaced by its patch-embedding +
    # CLS-token stage only (NCHW input, patch size 8).
    _, C, Hi, Wi = pixel_values.shape
    P = 8
    patches = pixel_values.reshape(B, C, Hi // P, P, Wi // P, P)
    patches = jnp.transpose(patches, (0, 2, 4, 1, 3, 5)).reshape(
        B, (Hi // P) * (Wi // P), C * P * P)
    img_tokens = patches @ params['patch_proj'] + params['patch_bias']   # (B, n_patch, H)
    cls_tok = jnp.broadcast_to(params['cls_token'], (B, 1, H))
    image_hidden = jnp.concatenate([cls_tok, img_tokens], axis=1)        # (B, 1+n_patch, H)

    # torch.cat([...], dim=1)
    return jnp.concatenate([text_hidden, image_hidden], axis=1).astype(jnp.float32)


def tour_classifier_forward(params, input_ids, attention_mask, pixel_values,
                            n_classes=(6, 5, 4)):
    del attention_mask  # only consumed by the HF text backbone in the original
    concat = _backbone_features(params, input_ids, pixel_values)         # (B, S, H)
    B, S, H = concat.shape

    # nn.TransformerEncoder(batch_first=False) on a (B,S,H) tensor: dim0 (B) is the
    # attention sequence, dim1 (S) the attention batch.  Pad S to a multiple of 8
    # (padded groups never interact with real groups) and flatten b-major, so the
    # attention partner of row r at offset o is row r + o*S_pad (a pure sublane roll).
    S_pad = ((S + 7) // 8) * 8
    x = concat
    if S_pad != S:
        x = jnp.concatenate([x, jnp.zeros((B, S_pad - S, H), jnp.float32)], axis=1)
    x2d = x.reshape(B * S_pad, H)                    # free reshape in XLA

    slab = fused_encoder_and_heads(x2d, params['headmask'], params['encoder'],
                                   params['heads'], n_attn_batch=S_pad,
                                   attn_len=B, c_pad=C_PAD)              # (8*B, 3*C_PAD)

    # outputs[:, 0] == row b*S_pad == slab row 8*b (head of each 8-row slab)
    logits = slab[::8]                                                   # (B, 3*C_PAD)
    n1, n2, n3 = n_classes
    return (logits[:, :n1],
            logits[:, C_PAD:C_PAD + n2],
            logits[:, 2 * C_PAD:2 * C_PAD + n3])


# ---------------------------------------------------------------------------
# Pure-JAX f32 reference (encoder + heads) for a correctness check
# ---------------------------------------------------------------------------
def reference_logits(params, concat, n_classes):
    B, S, H = concat.shape
    dh = H // NHEAD
    enc = params['encoder']
    x = concat.astype(jnp.float32)
    for l in range(enc['wqkv'].shape[0]):
        qkv = x @ enc['wqkv'][l].astype(jnp.float32) + enc['bqkv'][l][0]
        q, k, v = (t.reshape(B, S, NHEAD, dh) for t in
                   (qkv[..., :H], qkv[..., H:2 * H], qkv[..., 2 * H:]))
        scores = jnp.einsum('bsnd,csnd->snbc', q, k)   # attention over the B axis
        p = jax.nn.softmax(scores, axis=-1)
        attn = jnp.einsum('snbc,csnd->bsnd', p, v).reshape(B, S, H)
        attn = attn @ enc['wo'][l].astype(jnp.float32) + enc['bo'][l][0]
        h1 = _layer_norm(x + attn, enc['ln1w'][l][0], enc['ln1b'][l][0])
        ffn = jnp.maximum(h1 @ enc['w1'][l].astype(jnp.float32) + enc['b1'][l][0], 0.0)
        ffn = ffn @ enc['w2'][l].astype(jnp.float32) + enc['b2'][l][0]
        x = _layer_norm(h1 + ffn, enc['ln2w'][l][0], enc['ln2b'][l][0])
    pooled = x[:, 0]
    heads = params['heads']
    outs = []
    for j, c in enumerate(n_classes):
        h = pooled @ heads['w1'][j].astype(jnp.float32) + heads['b1'][j][0]
        h = _layer_norm(h, heads['lnw'][j][0], heads['lnb'][j][0])
        h = jnp.maximum(h, 0.0)
        outs.append(h @ heads['w2'][j].astype(jnp.float32)[:, :c]
                    + heads['b2'][j][0, :c])
    return tuple(outs)


if __name__ == "__main__":
    key = jax.random.PRNGKey(0)
    k_ids, k_px, k_par = jax.random.split(key, 3)

    B, S_text, H, FF, vocab = 2, 8, 128, 256, 100
    input_ids = jax.random.randint(k_ids, (B, S_text), 0, vocab, dtype=jnp.int32)
    attention_mask = jnp.ones((B, S_text), jnp.int32)
    pixel_values = jax.random.normal(k_px, (B, 3, 16, 16), jnp.float32)   # NCHW

    params = init_params(k_par, H=H, FF=FF, n_classes=(6, 5, 4), vocab=vocab)

    fwd = jax.jit(lambda p, ii, am, px: tour_classifier_forward(p, ii, am, px,
                                                                n_classes=(6, 5, 4)))
    out1, out2, out3 = fwd(params, input_ids, attention_mask, pixel_values)
    jax.block_until_ready((out1, out2, out3))
    assert out1.shape == (B, 6) and out2.shape == (B, 5) and out3.shape == (B, 4)

    # pure-JAX f32 reference; loose tolerance (kernel uses bf16 MXU operands and an
    # approximate EUP reciprocal in the softmax)
    concat = _backbone_features(params, input_ids, pixel_values)
    ref1, ref2, ref3 = reference_logits(params, concat, (6, 5, 4))
    max_err = max(float(jnp.max(jnp.abs(a - b)))
                  for a, b in ((out1, ref1), (out2, ref2), (out3, ref3)))
    assert max_err < 5e-2, f"kernel/reference mismatch: max |diff| = {max_err}"
    print("KERNEL_OK")
</pallas_src>

<mosaic_0001>
module attributes {stable_mosaic.version = 11 : i64} {
  func.func @kernel(%arg0: i32, %arg1: memref<32x128xf32, #tpu.memory_space<vmem>>, %arg2: memref<128x128xbf16, #tpu.memory_space<vmem>>, %arg3: memref<2x128x384xbf16, #tpu.memory_space<vmem>>, %arg4: memref<2x1x384xf32, #tpu.memory_space<vmem>>, %arg5: memref<2x128x128xbf16, #tpu.memory_space<vmem>>, %arg6: memref<2x1x128xf32, #tpu.memory_space<vmem>>, %arg7: memref<2x1x128xf32, #tpu.memory_space<vmem>>, %arg8: memref<2x1x128xf32, #tpu.memory_space<vmem>>, %arg9: memref<2x128x256xbf16, #tpu.memory_space<vmem>>, %arg10: memref<2x1x256xf32, #tpu.memory_space<vmem>>, %arg11: memref<2x256x128xbf16, #tpu.memory_space<vmem>>, %arg12: memref<2x1x128xf32, #tpu.memory_space<vmem>>, %arg13: memref<2x1x128xf32, #tpu.memory_space<vmem>>, %arg14: memref<2x1x128xf32, #tpu.memory_space<vmem>>, %arg15: memref<3x128x128xbf16, #tpu.memory_space<vmem>>, %arg16: memref<3x1x128xf32, #tpu.memory_space<vmem>>, %arg17: memref<3x1x128xf32, #tpu.memory_space<vmem>>, %arg18: memref<3x1x128xf32, #tpu.memory_space<vmem>>, %arg19: memref<3x128x128xbf16, #tpu.memory_space<vmem>>, %arg20: memref<3x1x128xf32, #tpu.memory_space<vmem>>, %arg21: memref<16x384xf32, #tpu.memory_space<vmem>>) attributes {dimension_semantics = [#tpu.dimension_semantics<arbitrary>], iteration_bounds = array<i64: 1>, scalar_prefetch = 0 : i64, scratch_operands = 0 : i64, tpu.core_type = #tpu.core_type<tc>, window_params = [{pipeline_mode = #tpu.pipeline_mode<synchronous>, transform_indices = @transform_0, window_bounds = array<i64: 32, 128>}, {pipeline_mode = #tpu.pipeline_mode<synchronous>, transform_indices = @transform_1, window_bounds = array<i64: 128, 128>}, {pipeline_mode = #tpu.pipeline_mode<synchronous>, transform_indices = @transform_2, window_bounds = array<i64: 2, 128, 384>}, {pipeline_mode = #tpu.pipeline_mode<synchronous>, transform_indices = @transform_3, window_bounds = array<i64: 2, 1, 384>}, {pipeline_mode = #tpu.pipeline_mode<synchronous>, transform_indices = @transform_4, window_bounds = array<i64: 2, 128, 128>}, {pipeline_mode = #tpu.pipeline_mode<synchronous>, transform_indices = @transform_5, window_bounds = array<i64: 2, 1, 128>}, {pipeline_mode = #tpu.pipeline_mode<synchronous>, transform_indices = @transform_6, window_bounds = array<i64: 2, 1, 128>}, {pipeline_mode = #tpu.pipeline_mode<synchronous>, transform_indices = @transform_7, window_bounds = array<i64: 2, 1, 128>}, {pipeline_mode = #tpu.pipeline_mode<synchronous>, transform_indices = @transform_8, window_bounds = array<i64: 2, 128, 256>}, {pipeline_mode = #tpu.pipeline_mode<synchronous>, transform_indices = @transform_9, window_bounds = array<i64: 2, 1, 256>}, {pipeline_mode = #tpu.pipeline_mode<synchronous>, transform_indices = @transform_10, window_bounds = array<i64: 2, 256, 128>}, {pipeline_mode = #tpu.pipeline_mode<synchronous>, transform_indices = @transform_11, window_bounds = array<i64: 2, 1, 128>}, {pipeline_mode = #tpu.pipeline_mode<synchronous>, transform_indices = @transform_12, window_bounds = array<i64: 2, 1, 128>}, {pipeline_mode = #tpu.pipeline_mode<synchronous>, transform_indices = @transform_13, window_bounds = array<i64: 2, 1, 128>}, {pipeline_mode = #tpu.pipeline_mode<synchronous>, transform_indices = @transform_14, window_bounds = array<i64: 3, 128, 128>}, {pipeline_mode = #tpu.pipeline_mode<synchronous>, transform_indices = @transform_15, window_bounds = array<i64: 3, 1, 128>}, {pipeline_mode = #tpu.pipeline_mode<synchronous>, transform_indices = @transform_16, window_bounds = array<i64: 3, 1, 128>}, {pipeline_mode = #tpu.pipeline_mode<synchronous>, transform_indices = @transform_17, window_bounds = array<i64: 3, 1, 128>}, {pipeline_mode = #tpu.pipeline_mode<synchronous>, transform_indices = @transform_18, window_bounds = array<i64: 3, 128, 128>}, {pipeline_mode = #tpu.pipeline_mode<synchronous>, transform_indices = @transform_19, window_bounds = array<i64: 3, 1, 128>}, {pipeline_mode = #tpu.pipeline_mode<synchronous>, transform_indices = @transform_20, window_bounds = array<i64: 16, 384>}]} {
    %c0 = arith.constant 0 : index
    %c0_0 = arith.constant 0 : index
    %0 = vector.load %arg1[%c0, %c0_0] : memref<32x128xf32, #tpu.memory_space<vmem>>, vector<32x128xf32>
    %c0_1 = arith.constant 0 : index
    %c0_2 = arith.constant 0 : index
    %1 = vector.load %arg2[%c0_1, %c0_2] : memref<128x128xbf16, #tpu.memory_space<vmem>>, vector<128x128xbf16>
    %2 = arith.truncf %0 : vector<32x128xf32> to vector<32x128xbf16>
    %c0_3 = arith.constant 0 : index
    %c0_4 = arith.constant 0 : index
    %c0_5 = arith.constant 0 : index
    %3 = vector.load %arg3[%c0_3, %c0_4, %c0_5] : memref<2x128x384xbf16, #tpu.memory_space<vmem>>, vector<1x128x384xbf16>
    %4 = vector.shape_cast %3 : vector<1x128x384xbf16> to vector<128x384xbf16>
    %cst = arith.constant dense<0.000000e+00> : vector<32x384xf32>
    %5 = tpu.matmul %2, %4, %cst {dimension_numbers = #tpu.dot_dimension_numbers<[1], [0], [0], [1], [0, 0, 1, 1], [], []>} : vector<32x128xbf16>, vector<128x384xbf16>, vector<32x384xf32> -> vector<32x384xf32>
    %c0_6 = arith.constant 0 : index
    %c0_7 = arith.constant 0 : index
    %c0_8 = arith.constant 0 : index
    %6 = vector.load %arg4[%c0_6, %c0_7, %c0_8] : memref<2x1x384xf32, #tpu.memory_space<vmem>>, vector<1x1x384xf32>
    %7 = vector.shape_cast %6 : vector<1x1x384xf32> to vector<1x384xf32>
    %8 = vector.broadcast %7 : vector<1x384xf32> to vector<32x384xf32>
    %9 = arith.addf %5, %8 : vector<32x384xf32>
    %10 = vector.extract_strided_slice %9 {offsets = [0, 0], sizes = [32, 128], strides = [1, 1]} : vector<32x384xf32> to vector<32x128xf32>
    %11 = vector.extract_strided_slice %9 {offsets = [0, 128], sizes = [32, 128], strides = [1, 1]} : vector<32x384xf32> to vector<32x128xf32>
    %12 = vector.extract_strided_slice %9 {offsets = [0, 256], sizes = [32, 128], strides = [1, 1]} : vector<32x384xf32> to vector<32x128xf32>
    %13 = arith.mulf %10, %11 : vector<32x128xf32>
    %14 = arith.truncf %13 : vector<32x128xf32> to vector<32x128xbf16>
    %cst_9 = arith.constant dense<0.000000e+00> : vector<32x128xf32>
    %15 = tpu.matmul %14, %1, %cst_9 {dimension_numbers = #tpu.dot_dimension_numbers<[1], [0], [0], [1], [0, 0, 1, 1], [], []>} : vector<32x128xbf16>, vector<128x128xbf16>, vector<32x128xf32> -> vector<32x128xf32>
    %c16_i32 = arith.constant 16 : i32
    %16 = tpu.dynamic_rotate %11 by %c16_i32 dim 0 : vector<32x128xf32>, i32 -> vector<32x128xf32>
    %c16_i32_10 = arith.constant 16 : i32
    %17 = tpu.dynamic_rotate %12 by %c16_i32_10 dim 0 : vector<32x128xf32>, i32 -> vector<32x128xf32>
    %18 = arith.mulf %10, %16 : vector<32x128xf32>
    %19 = arith.truncf %18 : vector<32x128xf32> to vector<32x128xbf16>
    %cst_11 = arith.constant dense<0.000000e+00> : vector<32x128xf32>
    %20 = tpu.matmul %19, %1, %cst_11 {dimension_numbers = #tpu.dot_dimension_numbers<[1], [0], [0], [1], [0, 0, 1, 1], [], []>} : vector<32x128xbf16>, vector<128x128xbf16>, vector<32x128xf32> -> vector<32x128xf32>
    %21 = arith.maximumf %15, %20 : vector<32x128xf32>
    %22 = arith.subf %15, %21 : vector<32x128xf32>
    %23 = math.exp %22 : vector<32x128xf32>
    %24 = arith.subf %20, %21 : vector<32x128xf32>
    %25 = math.exp %24 : vector<32x128xf32>
    %26 = arith.addf %23, %25 : vector<32x128xf32>
    %27 = arith.mulf %23, %12 : vector<32x128xf32>
    %28 = arith.mulf %25, %17 : vector<32x128xf32>
    %29 = arith.addf %27, %28 : vector<32x128xf32>
    %30 = tpu.reciprocal %26 {approx = true} : vector<32x128xf32> -> vector<32x128xf32>
    %31 = arith.mulf %29, %30 : vector<32x128xf32>
    %32 = arith.truncf %31 : vector<32x128xf32> to vector<32x128xbf16>
    %c0_12 = arith.constant 0 : index
    %c0_13 = arith.constant 0 : index
    %c0_14 = arith.constant 0 : index
    %33 = vector.load %arg5[%c0_12, %c0_13, %c0_14] : memref<2x128x128xbf16, #tpu.memory_space<vmem>>, vector<1x128x128xbf16>
    %34 = vector.shape_cast %33 : vector<1x128x128xbf16> to vector<128x128xbf16>
    %cst_15 = arith.constant dense<0.000000e+00> : vector<32x128xf32>
    %35 = tpu.matmul %32, %34, %cst_15 {dimension_numbers = #tpu.dot_dimension_numbers<[1], [0], [0], [1], [0, 0, 1, 1], [], []>} : vector<32x128xbf16>, vector<128x128xbf16>, vector<32x128xf32> -> vector<32x128xf32>
    %c0_16 = arith.constant 0 : index
    %c0_17 = arith.constant 0 : index
    %c0_18 = arith.constant 0 : index
    %36 = vector.load %arg6[%c0_16, %c0_17, %c0_18] : memref<2x1x128xf32, #tpu.memory_space<vmem>>, vector<1x1x128xf32>
    %37 = vector.shape_cast %36 : vector<1x1x128xf32> to vector<1x128xf32>
    %38 = vector.broadcast %37 : vector<1x128xf32> to vector<32x128xf32>
    %39 = arith.addf %35, %38 : vector<32x128xf32>
    %40 = arith.addf %0, %39 : vector<32x128xf32>
    %c0_19 = arith.constant 0 : index
    %c0_20 = arith.constant 0 : index
    %c0_21 = arith.constant 0 : index
    %41 = vector.load %arg7[%c0_19, %c0_20, %c0_21] : memref<2x1x128xf32, #tpu.memory_space<vmem>>, vector<1x1x128xf32>
    %42 = vector.shape_cast %41 : vector<1x1x128xf32> to vector<1x128xf32>
    %c0_22 = arith.constant 0 : index
    %c0_23 = arith.constant 0 : index
    %c0_24 = arith.constant 0 : index
    %43 = vector.load %arg8[%c0_22, %c0_23, %c0_24] : memref<2x1x128xf32, #tpu.memory_space<vmem>>, vector<1x1x128xf32>
    %44 = vector.shape_cast %43 : vector<1x1x128xf32> to vector<1x128xf32>
    %cst_25 = arith.constant dense<0.000000e+00> : vector<32xf32>
    %45 = vector.multi_reduction <add>, %40, %cst_25 [1] : vector<32x128xf32> to vector<32xf32>
    %46 = vector.shape_cast %45 : vector<32xf32> to vector<32x1xf32>
    %cst_26 = arith.constant 1.280000e+02 : f32
    %47 = vector.broadcast %cst_26 : f32 to vector<32x1xf32>
    %48 = arith.divf %46, %47 : vector<32x1xf32>
    %49 = vector.broadcast %48 : vector<32x1xf32> to vector<32x128xf32>
    %50 = arith.subf %40, %49 : vector<32x128xf32>
    %51 = arith.mulf %50, %50 : vector<32x128xf32>
    %cst_27 = arith.constant dense<0.000000e+00> : vector<32xf32>
    %52 = vector.multi_reduction <add>, %51, %cst_27 [1] : vector<32x128xf32> to vector<32xf32>
    %53 = vector.shape_cast %52 : vector<32xf32> to vector<32x1xf32>
    %cst_28 = arith.constant 1.280000e+02 : f32
    %54 = vector.broadcast %cst_28 : f32 to vector<32x1xf32>
    %55 = arith.divf %53, %54 : vector<32x1xf32>
    %56 = vector.broadcast %48 : vector<32x1xf32> to vector<32x128xf32>
    %57 = arith.subf %40, %56 : vector<32x128xf32>
    %cst_29 = arith.constant 9.99999974E-6 : f32
    %58 = vector.broadcast %cst_29 : f32 to vector<32x1xf32>
    %59 = arith.addf %55, %58 : vector<32x1xf32>
    %60 = math.rsqrt %59 : vector<32x1xf32>
    %61 = vector.broadcast %60 : vector<32x1xf32> to vector<32x128xf32>
    %62 = arith.mulf %57, %61 : vector<32x128xf32>
    %63 = vector.broadcast %42 : vector<1x128xf32> to vector<32x128xf32>
    %64 = arith.mulf %62, %63 : vector<32x128xf32>
    %65 = vector.broadcast %44 : vector<1x128xf32> to vector<32x128xf32>
    %66 = arith.addf %64, %65 : vector<32x128xf32>
    %67 = arith.truncf %66 : vector<32x128xf32> to vector<32x128xbf16>
    %c0_30 = arith.constant 0 : index
    %c0_31 = arith.constant 0 : index
    %c0_32 = arith.constant 0 : index
    %68 = vector.load %arg9[%c0_30, %c0_31, %c0_32] : memref<2x128x256xbf16, #tpu.memory_space<vmem>>, vector<1x128x256xbf16>
    %69 = vector.shape_cast %68 : vector<1x128x256xbf16> to vector<128x256xbf16>
    %cst_33 = arith.constant dense<0.000000e+00> : vector<32x256xf32>
    %70 = tpu.matmul %67, %69, %cst_33 {dimension_numbers = #tpu.dot_dimension_numbers<[1], [0], [0], [1], [0, 0, 1, 1], [], []>} : vector<32x128xbf16>, vector<128x256xbf16>, vector<32x256xf32> -> vector<32x256xf32>
    %c0_34 = arith.constant 0 : index
    %c0_35 = arith.constant 0 : index
    %c0_36 = arith.constant 0 : index
    %71 = vector.load %arg10[%c0_34, %c0_35, %c0_36] : memref<2x1x256xf32, #tpu.memory_space<vmem>>, vector<1x1x256xf32>
    %72 = vector.shape_cast %71 : vector<1x1x256xf32> to vector<1x256xf32>
    %73 = vector.broadcast %72 : vector<1x256xf32> to vector<32x256xf32>
    %74 = arith.addf %70, %73 : vector<32x256xf32>
    %cst_37 = arith.constant 0.000000e+00 : f32
    %75 = vector.broadcast %cst_37 : f32 to vector<32x256xf32>
    %76 = arith.maximumf %74, %75 : vector<32x256xf32>
    %77 = arith.truncf %76 : vector<32x256xf32> to vector<32x256xbf16>
    %c0_38 = arith.constant 0 : index
    %c0_39 = arith.constant 0 : index
    %c0_40 = arith.constant 0 : index
    %78 = vector.load %arg11[%c0_38, %c0_39, %c0_40] : memref<2x256x128xbf16, #tpu.memory_space<vmem>>, vector<1x256x128xbf16>
    %79 = vector.shape_cast %78 : vector<1x256x128xbf16> to vector<256x128xbf16>
    %cst_41 = arith.constant dense<0.000000e+00> : vector<32x128xf32>
    %80 = tpu.matmul %77, %79, %cst_41 {dimension_numbers = #tpu.dot_dimension_numbers<[1], [0], [0], [1], [0, 0, 1, 1], [], []>} : vector<32x256xbf16>, vector<256x128xbf16>, vector<32x128xf32> -> vector<32x128xf32>
    %c0_42 = arith.constant 0 : index
    %c0_43 = arith.constant 0 : index
    %c0_44 = arith.constant 0 : index
    %81 = vector.load %arg12[%c0_42, %c0_43, %c0_44] : memref<2x1x128xf32, #tpu.memory_space<vmem>>, vector<1x1x128xf32>
    %82 = vector.shape_cast %81 : vector<1x1x128xf32> to vector<1x128xf32>
    %83 = vector.broadcast %82 : vector<1x128xf32> to vector<32x128xf32>
    %84 = arith.addf %80, %83 : vector<32x128xf32>
    %85 = arith.addf %66, %84 : vector<32x128xf32>
    %c0_45 = arith.constant 0 : index
    %c0_46 = arith.constant 0 : index
    %c0_47 = arith.constant 0 : index
    %86 = vector.load %arg13[%c0_45, %c0_46, %c0_47] : memref<2x1x128xf32, #tpu.memory_space<vmem>>, vector<1x1x128xf32>
    %87 = vector.shape_cast %86 : vector<1x1x128xf32> to vector<1x128xf32>
    %c0_48 = arith.constant 0 : index
    %c0_49 = arith.constant 0 : index
    %c0_50 = arith.constant 0 : index
    %88 = vector.load %arg14[%c0_48, %c0_49, %c0_50] : memref<2x1x128xf32, #tpu.memory_space<vmem>>, vector<1x1x128xf32>
    %89 = vector.shape_cast %88 : vector<1x1x128xf32> to vector<1x128xf32>
    %cst_51 = arith.constant dense<0.000000e+00> : vector<32xf32>
    %90 = vector.multi_reduction <add>, %85, %cst_51 [1] : vector<32x128xf32> to vector<32xf32>
    %91 = vector.shape_cast %90 : vector<32xf32> to vector<32x1xf32>
    %cst_52 = arith.constant 1.280000e+02 : f32
    %92 = vector.broadcast %cst_52 : f32 to vector<32x1xf32>
    %93 = arith.divf %91, %92 : vector<32x1xf32>
    %94 = vector.broadcast %93 : vector<32x1xf32> to vector<32x128xf32>
    %95 = arith.subf %85, %94 : vector<32x128xf32>
    %96 = arith.mulf %95, %95 : vector<32x128xf32>
    %cst_53 = arith.constant dense<0.000000e+00> : vector<32xf32>
    %97 = vector.multi_reduction <add>, %96, %cst_53 [1] : vector<32x128xf32> to vector<32xf32>
    %98 = vector.shape_cast %97 : vector<32xf32> to vector<32x1xf32>
    %cst_54 = arith.constant 1.280000e+02 : f32
    %99 = vector.broadcast %cst_54 : f32 to vector<32x1xf32>
    %100 = arith.divf %98, %99 : vector<32x1xf32>
    %101 = vector.broadcast %93 : vector<32x1xf32> to vector<32x128xf32>
    %102 = arith.subf %85, %101 : vector<32x128xf32>
    %cst_55 = arith.constant 9.99999974E-6 : f32
    %103 = vector.broadcast %cst_55 : f32 to vector<32x1xf32>
    %104 = arith.addf %100, %103 : vector<32x1xf32>
    %105 = math.rsqrt %104 : vector<32x1xf32>
    %106 = vector.broadcast %105 : vector<32x1xf32> to vector<32x128xf32>
    %107 = arith.mulf %102, %106 : vector<32x128xf32>
    %108 = vector.broadcast %87 : vector<1x128xf32> to vector<32x128xf32>
    %109 = arith.mulf %107, %108 : vector<32x128xf32>
    %110 = vector.broadcast %89 : vector<1x128xf32> to vector<32x128xf32>
    %111 = arith.addf %109, %110 : vector<32x128xf32>
    %112 = arith.truncf %111 : vector<32x128xf32> to vector<32x128xbf16>
    %c1 = arith.constant 1 : index
    %c0_56 = arith.constant 0 : index
    %c0_57 = arith.constant 0 : index
    %113 = vector.load %arg3[%c1, %c0_56, %c0_57] : memref<2x128x384xbf16, #tpu.memory_space<vmem>>, vector<1x128x384xbf16>
    %114 = vector.shape_cast %113 : vector<1x128x384xbf16> to vector<128x384xbf16>
    %cst_58 = arith.constant dense<0.000000e+00> : vector<32x384xf32>
    %115 = tpu.matmul %112, %114, %cst_58 {dimension_numbers = #tpu.dot_dimension_numbers<[1], [0], [0], [1], [0, 0, 1, 1], [], []>} : vector<32x128xbf16>, vector<128x384xbf16>, vector<32x384xf32> -> vector<32x384xf32>
    %c1_59 = arith.constant 1 : index
    %c0_60 = arith.constant 0 : index
    %c0_61 = arith.constant 0 : index
    %116 = vector.load %arg4[%c1_59, %c0_60, %c0_61] : memref<2x1x384xf32, #tpu.memory_space<vmem>>, vector<1x1x384xf32>
    %117 = vector.shape_cast %116 : vector<1x1x384xf32> to vector<1x384xf32>
    %118 = vector.broadcast %117 : vector<1x384xf32> to vector<32x384xf32>
    %119 = arith.addf %115, %118 : vector<32x384xf32>
    %120 = vector.extract_strided_slice %119 {offsets = [0, 0], sizes = [32, 128], strides = [1, 1]} : vector<32x384xf32> to vector<32x128xf32>
    %121 = vector.extract_strided_slice %119 {offsets = [0, 128], sizes = [32, 128], strides = [1, 1]} : vector<32x384xf32> to vector<32x128xf32>
    %122 = vector.extract_strided_slice %119 {offsets = [0, 256], sizes = [32, 128], strides = [1, 1]} : vector<32x384xf32> to vector<32x128xf32>
    %123 = arith.mulf %120, %121 : vector<32x128xf32>
    %124 = arith.truncf %123 : vector<32x128xf32> to vector<32x128xbf16>
    %cst_62 = arith.constant dense<0.000000e+00> : vector<32x128xf32>
    %125 = tpu.matmul %124, %1, %cst_62 {dimension_numbers = #tpu.dot_dimension_numbers<[1], [0], [0], [1], [0, 0, 1, 1], [], []>} : vector<32x128xbf16>, vector<128x128xbf16>, vector<32x128xf32> -> vector<32x128xf32>
    %c16_i32_63 = arith.constant 16 : i32
    %126 = tpu.dynamic_rotate %121 by %c16_i32_63 dim 0 : vector<32x128xf32>, i32 -> vector<32x128xf32>
    %c16_i32_64 = arith.constant 16 : i32
    %127 = tpu.dynamic_rotate %122 by %c16_i32_64 dim 0 : vector<32x128xf32>, i32 -> vector<32x128xf32>
    %128 = arith.mulf %120, %126 : vector<32x128xf32>
    %129 = arith.truncf %128 : vector<32x128xf32> to vector<32x128xbf16>
    %cst_65 = arith.constant dense<0.000000e+00> : vector<32x128xf32>
    %130 = tpu.matmul %129, %1, %cst_65 {dimension_numbers = #tpu.dot_dimension_numbers<[1], [0], [0], [1], [0, 0, 1, 1], [], []>} : vector<32x128xbf16>, vector<128x128xbf16>, vector<32x128xf32> -> vector<32x128xf32>
    %131 = arith.maximumf %125, %130 : vector<32x128xf32>
    %132 = arith.subf %125, %131 : vector<32x128xf32>
    %133 = math.exp %132 : vector<32x128xf32>
    %134 = arith.subf %130, %131 : vector<32x128xf32>
    %135 = math.exp %134 : vector<32x128xf32>
    %136 = arith.addf %133, %135 : vector<32x128xf32>
    %137 = arith.mulf %133, %122 : vector<32x128xf32>
    %138 = arith.mulf %135, %127 : vector<32x128xf32>
    %139 = arith.addf %137, %138 : vector<32x128xf32>
    %140 = tpu.reciprocal %136 {approx = true} : vector<32x128xf32> -> vector<32x128xf32>
    %141 = arith.mulf %139, %140 : vector<32x128xf32>
    %142 = arith.truncf %141 : vector<32x128xf32> to vector<32x128xbf16>
    %c1_66 = arith.constant 1 : index
    %c0_67 = arith.constant 0 : index
    %c0_68 = arith.constant 0 : index
    %143 = vector.load %arg5[%c1_66, %c0_67, %c0_68] : memref<2x128x128xbf16, #tpu.memory_space<vmem>>, vector<1x128x128xbf16>
    %144 = vector.shape_cast %143 : vector<1x128x128xbf16> to vector<128x128xbf16>
    %cst_69 = arith.constant dense<0.000000e+00> : vector<32x128xf32>
    %145 = tpu.matmul %142, %144, %cst_69 {dimension_numbers = #tpu.dot_dimension_numbers<[1], [0], [0], [1], [0, 0, 1, 1], [], []>} : vector<32x128xbf16>, vector<128x128xbf16>, vector<32x128xf32> -> vector<32x128xf32>
    %c1_70 = arith.constant 1 : index
    %c0_71 = arith.constant 0 : index
    %c0_72 = arith.constant 0 : index
    %146 = vector.load %arg6[%c1_70, %c0_71, %c0_72] : memref<2x1x128xf32, #tpu.memory_space<vmem>>, vector<1x1x128xf32>
    %147 = vector.shape_cast %146 : vector<1x1x128xf32> to vector<1x128xf32>
    %148 = vector.broadcast %147 : vector<1x128xf32> to vector<32x128xf32>
    %149 = arith.addf %145, %148 : vector<32x128xf32>
    %150 = arith.addf %111, %149 : vector<32x128xf32>
    %c1_73 = arith.constant 1 : index
    %c0_74 = arith.constant 0 : index
    %c0_75 = arith.constant 0 : index
    %151 = vector.load %arg7[%c1_73, %c0_74, %c0_75] : memref<2x1x128xf32, #tpu.memory_space<vmem>>, vector<1x1x128xf32>
    %152 = vector.shape_cast %151 : vector<1x1x128xf32> to vector<1x128xf32>
    %c1_76 = arith.constant 1 : index
    %c0_77 = arith.constant 0 : index
    %c0_78 = arith.constant 0 : index
    %153 = vector.load %arg8[%c1_76, %c0_77, %c0_78] : memref<2x1x128xf32, #tpu.memory_space<vmem>>, vector<1x1x128xf32>
    %154 = vector.shape_cast %153 : vector<1x1x128xf32> to vector<1x128xf32>
    %cst_79 = arith.constant dense<0.000000e+00> : vector<32xf32>
    %155 = vector.multi_reduction <add>, %150, %cst_79 [1] : vector<32x128xf32> to vector<32xf32>
    %156 = vector.shape_cast %155 : vector<32xf32> to vector<32x1xf32>
    %cst_80 = arith.constant 1.280000e+02 : f32
    %157 = vector.broadcast %cst_80 : f32 to vector<32x1xf32>
    %158 = arith.divf %156, %157 : vector<32x1xf32>
    %159 = vector.broadcast %158 : vector<32x1xf32> to vector<32x128xf32>
    %160 = arith.subf %150, %159 : vector<32x128xf32>
    %161 = arith.mulf %160, %160 : vector<32x128xf32>
    %cst_81 = arith.constant dense<0.000000e+00> : vector<32xf32>
    %162 = vector.multi_reduction <add>, %161, %cst_81 [1] : vector<32x128xf32> to vector<32xf32>
    %163 = vector.shape_cast %162 : vector<32xf32> to vector<32x1xf32>
    %cst_82 = arith.constant 1.280000e+02 : f32
    %164 = vector.broadcast %cst_82 : f32 to vector<32x1xf32>
    %165 = arith.divf %163, %164 : vector<32x1xf32>
    %166 = vector.broadcast %158 : vector<32x1xf32> to vector<32x128xf32>
    %167 = arith.subf %150, %166 : vector<32x128xf32>
    %cst_83 = arith.constant 9.99999974E-6 : f32
    %168 = vector.broadcast %cst_83 : f32 to vector<32x1xf32>
    %169 = arith.addf %165, %168 : vector<32x1xf32>
    %170 = math.rsqrt %169 : vector<32x1xf32>
    %171 = vector.broadcast %170 : vector<32x1xf32> to vector<32x128xf32>
    %172 = arith.mulf %167, %171 : vector<32x128xf32>
    %173 = vector.broadcast %152 : vector<1x128xf32> to vector<32x128xf32>
    %174 = arith.mulf %172, %173 : vector<32x128xf32>
    %175 = vector.broadcast %154 : vector<1x128xf32> to vector<32x128xf32>
    %176 = arith.addf %174, %175 : vector<32x128xf32>
    %177 = arith.truncf %176 : vector<32x128xf32> to vector<32x128xbf16>
    %c1_84 = arith.constant 1 : index
    %c0_85 = arith.constant 0 : index
    %c0_86 = arith.constant 0 : index
    %178 = vector.load %arg9[%c1_84, %c0_85, %c0_86] : memref<2x128x256xbf16, #tpu.memory_space<vmem>>, vector<1x128x256xbf16>
    %179 = vector.shape_cast %178 : vector<1x128x256xbf16> to vector<128x256xbf16>
    %cst_87 = arith.constant dense<0.000000e+00> : vector<32x256xf32>
    %180 = tpu.matmul %177, %179, %cst_87 {dimension_numbers = #tpu.dot_dimension_numbers<[1], [0], [0], [1], [0, 0, 1, 1], [], []>} : vector<32x128xbf16>, vector<128x256xbf16>, vector<32x256xf32> -> vector<32x256xf32>
    %c1_88 = arith.constant 1 : index
    %c0_89 = arith.constant 0 : index
    %c0_90 = arith.constant 0 : index
    %181 = vector.load %arg10[%c1_88, %c0_89, %c0_90] : memref<2x1x256xf32, #tpu.memory_space<vmem>>, vector<1x1x256xf32>
    %182 = vector.shape_cast %181 : vector<1x1x256xf32> to vector<1x256xf32>
    %183 = vector.broadcast %182 : vector<1x256xf32> to vector<32x256xf32>
    %184 = arith.addf %180, %183 : vector<32x256xf32>
    %cst_91 = arith.constant 0.000000e+00 : f32
    %185 = vector.broadcast %cst_91 : f32 to vector<32x256xf32>
    %186 = arith.maximumf %184, %185 : vector<32x256xf32>
    %187 = arith.truncf %186 : vector<32x256xf32> to vector<32x256xbf16>
    %c1_92 = arith.constant 1 : index
    %c0_93 = arith.constant 0 : index
    %c0_94 = arith.constant 0 : index
    %188 = vector.load %arg11[%c1_92, %c0_93, %c0_94] : memref<2x256x128xbf16, #tpu.memory_space<vmem>>, vector<1x256x128xbf16>
    %189 = vector.shape_cast %188 : vector<1x256x128xbf16> to vector<256x128xbf16>
    %cst_95 = arith.constant dense<0.000000e+00> : vector<32x128xf32>
    %190 = tpu.matmul %187, %189, %cst_95 {dimension_numbers = #tpu.dot_dimension_numbers<[1], [0], [0], [1], [0, 0, 1, 1], [], []>} : vector<32x256xbf16>, vector<256x128xbf16>, vector<32x128xf32> -> vector<32x128xf32>
    %c1_96 = arith.constant 1 : index
    %c0_97 = arith.constant 0 : index
    %c0_98 = arith.constant 0 : index
    %191 = vector.load %arg12[%c1_96, %c0_97, %c0_98] : memref<2x1x128xf32, #tpu.memory_space<vmem>>, vector<1x1x128xf32>
    %192 = vector.shape_cast %191 : vector<1x1x128xf32> to vector<1x128xf32>
    %193 = vector.broadcast %192 : vector<1x128xf32> to vector<32x128xf32>
    %194 = arith.addf %190, %193 : vector<32x128xf32>
    %195 = arith.addf %176, %194 : vector<32x128xf32>
    %c1_99 = arith.constant 1 : index
    %c0_100 = arith.constant 0 : index
    %c0_101 = arith.constant 0 : index
    %196 = vector.load %arg13[%c1_99, %c0_100, %c0_101] : memref<2x1x128xf32, #tpu.memory_space<vmem>>, vector<1x1x128xf32>
    %197 = vector.shape_cast %196 : vector<1x1x128xf32> to vector<1x128xf32>
    %c1_102 = arith.constant 1 : index
    %c0_103 = arith.constant 0 : index
    %c0_104 = arith.constant 0 : index
    %198 = vector.load %arg14[%c1_102, %c0_103, %c0_104] : memref<2x1x128xf32, #tpu.memory_space<vmem>>, vector<1x1x128xf32>
    %199 = vector.shape_cast %198 : vector<1x1x128xf32> to vector<1x128xf32>
    %cst_105 = arith.constant dense<0.000000e+00> : vector<32xf32>
    %200 = vector.multi_reduction <add>, %195, %cst_105 [1] : vector<32x128xf32> to vector<32xf32>
    %201 = vector.shape_cast %200 : vector<32xf32> to vector<32x1xf32>
    %cst_106 = arith.constant 1.280000e+02 : f32
    %202 = vector.broadcast %cst_106 : f32 to vector<32x1xf32>
    %203 = arith.divf %201, %202 : vector<32x1xf32>
    %204 = vector.broadcast %203 : vector<32x1xf32> to vector<32x128xf32>
    %205 = arith.subf %195, %204 : vector<32x128xf32>
    %206 = arith.mulf %205, %205 : vector<32x128xf32>
    %cst_107 = arith.constant dense<0.000000e+00> : vector<32xf32>
    %207 = vector.multi_reduction <add>, %206, %cst_107 [1] : vector<32x128xf32> to vector<32xf32>
    %208 = vector.shape_cast %207 : vector<32xf32> to vector<32x1xf32>
    %cst_108 = arith.constant 1.280000e+02 : f32
    %209 = vector.broadcast %cst_108 : f32 to vector<32x1xf32>
    %210 = arith.divf %208, %209 : vector<32x1xf32>
    %211 = vector.broadcast %203 : vector<32x1xf32> to vector<32x128xf32>
    %212 = arith.subf %195, %211 : vector<32x128xf32>
    %cst_109 = arith.constant 9.99999974E-6 : f32
    %213 = vector.broadcast %cst_109 : f32 to vector<32x1xf32>
    %214 = arith.addf %210, %213 : vector<32x1xf32>
    %215 = math.rsqrt %214 : vector<32x1xf32>
    %216 = vector.broadcast %215 : vector<32x1xf32> to vector<32x128xf32>
    %217 = arith.mulf %212, %216 : vector<32x128xf32>
    %218 = vector.broadcast %197 : vector<1x128xf32> to vector<32x128xf32>
    %219 = arith.mulf %217, %218 : vector<32x128xf32>
    %220 = vector.broadcast %199 : vector<1x128xf32> to vector<32x128xf32>
    %221 = arith.addf %219, %220 : vector<32x128xf32>
    %222 = vector.extract_strided_slice %221 {offsets = [0, 0], sizes = [8, 128], strides = [1, 1]} : vector<32x128xf32> to vector<8x128xf32>
    %223 = vector.extract_strided_slice %221 {offsets = [16, 0], sizes = [8, 128], strides = [1, 1]} : vector<32x128xf32> to vector<8x128xf32>
    %224 = tpu.concatenate %222, %223 in 0 : vector<8x128xf32>, vector<8x128xf32> -> vector<16x128xf32>
    %225 = arith.truncf %224 : vector<16x128xf32> to vector<16x128xbf16>
    %c0_110 = arith.constant 0 : index
    %c0_111 = arith.constant 0 : index
    %c0_112 = arith.constant 0 : index
    %226 = vector.load %arg15[%c0_110, %c0_111, %c0_112] : memref<3x128x128xbf16, #tpu.memory_space<vmem>>, vector<1x128x128xbf16>
    %227 = vector.shape_cast %226 : vector<1x128x128xbf16> to vector<128x128xbf16>
    %cst_113 = arith.constant dense<0.000000e+00> : vector<16x128xf32>
    %228 = tpu.matmul %225, %227, %cst_113 {dimension_numbers = #tpu.dot_dimension_numbers<[1], [0], [0], [1], [0, 0, 1, 1], [], []>} : vector<16x128xbf16>, vector<128x128xbf16>, vector<16x128xf32> -> vector<16x128xf32>
    %c0_114 = arith.constant 0 : index
    %c0_115 = arith.constant 0 : index
    %c0_116 = arith.constant 0 : index
    %229 = vector.load %arg16[%c0_114, %c0_115, %c0_116] : memref<3x1x128xf32, #tpu.memory_space<vmem>>, vector<1x1x128xf32>
    %230 = vector.shape_cast %229 : vector<1x1x128xf32> to vector<1x128xf32>
    %231 = vector.broadcast %230 : vector<1x128xf32> to vector<16x128xf32>
    %232 = arith.addf %228, %231 : vector<16x128xf32>
    %c0_117 = arith.constant 0 : index
    %c0_118 = arith.constant 0 : index
    %c0_119 = arith.constant 0 : index
    %233 = vector.load %arg17[%c0_117, %c0_118, %c0_119] : memref<3x1x128xf32, #tpu.memory_space<vmem>>, vector<1x1x128xf32>
    %234 = vector.shape_cast %233 : vector<1x1x128xf32> to vector<1x128xf32>
    %c0_120 = arith.constant 0 : index
    %c0_121 = arith.constant 0 : index
    %c0_122 = arith.constant 0 : index
    %235 = vector.load %arg18[%c0_120, %c0_121, %c0_122] : memref<3x1x128xf32, #tpu.memory_space<vmem>>, vector<1x1x128xf32>
    %236 = vector.shape_cast %235 : vector<1x1x128xf32> to vector<1x128xf32>
    %cst_123 = arith.constant dense<0.000000e+00> : vector<16xf32>
    %237 = vector.multi_reduction <add>, %232, %cst_123 [1] : vector<16x128xf32> to vector<16xf32>
    %238 = vector.shape_cast %237 : vector<16xf32> to vector<16x1xf32>
    %cst_124 = arith.constant 1.280000e+02 : f32
    %239 = vector.broadcast %cst_124 : f32 to vector<16x1xf32>
    %240 = arith.divf %238, %239 : vector<16x1xf32>
    %241 = vector.broadcast %240 : vector<16x1xf32> to vector<16x128xf32>
    %242 = arith.subf %232, %241 : vector<16x128xf32>
    %243 = arith.mulf %242, %242 : vector<16x128xf32>
    %cst_125 = arith.constant dense<0.000000e+00> : vector<16xf32>
    %244 = vector.multi_reduction <add>, %243, %cst_125 [1] : vector<16x128xf32> to vector<16xf32>
    %245 = vector.shape_cast %244 : vector<16xf32> to vector<16x1xf32>
    %cst_126 = arith.constant 1.280000e+02 : f32
    %246 = vector.broadcast %cst_126 : f32 to vector<16x1xf32>
    %247 = arith.divf %245, %246 : vector<16x1xf32>
    %248 = vector.broadcast %240 : vector<16x1xf32> to vector<16x128xf32>
    %249 = arith.subf %232, %248 : vector<16x128xf32>
    %cst_127 = arith.constant 9.99999974E-6 : f32
    %250 = vector.broadcast %cst_127 : f32 to vector<16x1xf32>
    %251 = arith.addf %247, %250 : vector<16x1xf32>
    %252 = math.rsqrt %251 : vector<16x1xf32>
    %253 = vector.broadcast %252 : vector<16x1xf32> to vector<16x128xf32>
    %254 = arith.mulf %249, %253 : vector<16x128xf32>
    %255 = vector.broadcast %234 : vector<1x128xf32> to vector<16x128xf32>
    %256 = arith.mulf %254, %255 : vector<16x128xf32>
    %257 = vector.broadcast %236 : vector<1x128xf32> to vector<16x128xf32>
    %258 = arith.addf %256, %257 : vector<16x128xf32>
    %cst_128 = arith.constant 0.000000e+00 : f32
    %259 = vector.broadcast %cst_128 : f32 to vector<16x128xf32>
    %260 = arith.maximumf %258, %259 : vector<16x128xf32>
    %261 = arith.truncf %260 : vector<16x128xf32> to vector<16x128xbf16>
    %c0_129 = arith.constant 0 : index
    %c0_130 = arith.constant 0 : index
    %c0_131 = arith.constant 0 : index
    %262 = vector.load %arg19[%c0_129, %c0_130, %c0_131] : memref<3x128x128xbf16, #tpu.memory_space<vmem>>, vector<1x128x128xbf16>
    %263 = vector.shape_cast %262 : vector<1x128x128xbf16> to vector<128x128xbf16>
    %cst_132 = arith.constant dense<0.000000e+00> : vector<16x128xf32>
    %264 = tpu.matmul %261, %263, %cst_132 {dimension_numbers = #tpu.dot_dimension_numbers<[1], [0], [0], [1], [0, 0, 1, 1], [], []>} : vector<16x128xbf16>, vector<128x128xbf16>, vector<16x128xf32> -> vector<16x128xf32>
    %c0_133 = arith.constant 0 : index
    %c0_134 = arith.constant 0 : index
    %c0_135 = arith.constant 0 : index
    %265 = vector.load %arg20[%c0_133, %c0_134, %c0_135] : memref<3x1x128xf32, #tpu.memory_space<vmem>>, vector<1x1x128xf32>
    %266 = vector.shape_cast %265 : vector<1x1x128xf32> to vector<1x128xf32>
    %267 = vector.broadcast %266 : vector<1x128xf32> to vector<16x128xf32>
    %268 = arith.addf %264, %267 : vector<16x128xf32>
    %c0_136 = arith.constant 0 : index
    %c0_137 = arith.constant 0 : index
    %269 = vector.load %arg21[%c0_136, %c0_137] : memref<16x384xf32, #tpu.memory_space<vmem>>, vector<16x128xf32>
    tpu.vector_store %arg21[%c0_136, %c0_137], %268 {strides = array<i32>} : memref<16x384xf32, #tpu.memory_space<vmem>>, vector<16x128xf32>,
    %c1_138 = arith.constant 1 : index
    %c0_139 = arith.constant 0 : index
    %c0_140 = arith.constant 0 : index
    %270 = vector.load %arg15[%c1_138, %c0_139, %c0_140] : memref<3x128x128xbf16, #tpu.memory_space<vmem>>, vector<1x128x128xbf16>
    %271 = vector.shape_cast %270 : vector<1x128x128xbf16> to vector<128x128xbf16>
    %cst_141 = arith.constant dense<0.000000e+00> : vector<16x128xf32>
    %272 = tpu.matmul %225, %271, %cst_141 {dimension_numbers = #tpu.dot_dimension_numbers<[1], [0], [0], [1], [0, 0, 1, 1], [], []>} : vector<16x128xbf16>, vector<128x128xbf16>, vector<16x128xf32> -> vector<16x128xf32>
    %c1_142 = arith.constant 1 : index
    %c0_143 = arith.constant 0 : index
    %c0_144 = arith.constant 0 : index
    %273 = vector.load %arg16[%c1_142, %c0_143, %c0_144] : memref<3x1x128xf32, #tpu.memory_space<vmem>>, vector<1x1x128xf32>
    %274 = vector.shape_cast %273 : vector<1x1x128xf32> to vector<1x128xf32>
    %275 = vector.broadcast %274 : vector<1x128xf32> to vector<16x128xf32>
    %276 = arith.addf %272, %275 : vector<16x128xf32>
    %c1_145 = arith.constant 1 : index
    %c0_146 = arith.constant 0 : index
    %c0_147 = arith.constant 0 : index
    %277 = vector.load %arg17[%c1_145, %c0_146, %c0_147] : memref<3x1x128xf32, #tpu.memory_space<vmem>>, vector<1x1x128xf32>
    %278 = vector.shape_cast %277 : vector<1x1x128xf32> to vector<1x128xf32>
    %c1_148 = arith.constant 1 : index
    %c0_149 = arith.constant 0 : index
    %c0_150 = arith.constant 0 : index
    %279 = vector.load %arg18[%c1_148, %c0_149, %c0_150] : memref<3x1x128xf32, #tpu.memory_space<vmem>>, vector<1x1x128xf32>
    %280 = vector.shape_cast %279 : vector<1x1x128xf32> to vector<1x128xf32>
    %cst_151 = arith.constant dense<0.000000e+00> : vector<16xf32>
    %281 = vector.multi_reduction <add>, %276, %cst_151 [1] : vector<16x128xf32> to vector<16xf32>
    %282 = vector.shape_cast %281 : vector<16xf32> to vector<16x1xf32>
    %cst_152 = arith.constant 1.280000e+02 : f32
    %283 = vector.broadcast %cst_152 : f32 to vector<16x1xf32>
    %284 = arith.divf %282, %283 : vector<16x1xf32>
    %285 = vector.broadcast %284 : vector<16x1xf32> to vector<16x128xf32>
    %286 = arith.subf %276, %285 : vector<16x128xf32>
    %287 = arith.mulf %286, %286 : vector<16x128xf32>
    %cst_153 = arith.constant dense<0.000000e+00> : vector<16xf32>
    %288 = vector.multi_reduction <add>, %287, %cst_153 [1] : vector<16x128xf32> to vector<16xf32>
    %289 = vector.shape_cast %288 : vector<16xf32> to vector<16x1xf32>
    %cst_154 = arith.constant 1.280000e+02 : f32
    %290 = vector.broadcast %cst_154 : f32 to vector<16x1xf32>
    %291 = arith.divf %289, %290 : vector<16x1xf32>
    %292 = vector.broadcast %284 : vector<16x1xf32> to vector<16x128xf32>
    %293 = arith.subf %276, %292 : vector<16x128xf32>
    %cst_155 = arith.constant 9.99999974E-6 : f32
    %294 = vector.broadcast %cst_155 : f32 to vector<16x1xf32>
    %295 = arith.addf %291, %294 : vector<16x1xf32>
    %296 = math.rsqrt %295 : vector<16x1xf32>
    %297 = vector.broadcast %296 : vector<16x1xf32> to vector<16x128xf32>
    %298 = arith.mulf %293, %297 : vector<16x128xf32>
    %299 = vector.broadcast %278 : vector<1x128xf32> to vector<16x128xf32>
    %300 = arith.mulf %298, %299 : vector<16x128xf32>
    %301 = vector.broadcast %280 : vector<1x128xf32> to vector<16x128xf32>
    %302 = arith.addf %300, %301 : vector<16x128xf32>
    %cst_156 = arith.constant 0.000000e+00 : f32
    %303 = vector.broadcast %cst_156 : f32 to vector<16x128xf32>
    %304 = arith.maximumf %302, %303 : vector<16x128xf32>
    %305 = arith.truncf %304 : vector<16x128xf32> to vector<16x128xbf16>
    %c1_157 = arith.constant 1 : index
    %c0_158 = arith.constant 0 : index
    %c0_159 = arith.constant 0 : index
    %306 = vector.load %arg19[%c1_157, %c0_158, %c0_159] : memref<3x128x128xbf16, #tpu.memory_space<vmem>>, vector<1x128x128xbf16>
    %307 = vector.shape_cast %306 : vector<1x128x128xbf16> to vector<128x128xbf16>
    %cst_160 = arith.constant dense<0.000000e+00> : vector<16x128xf32>
    %308 = tpu.matmul %305, %307, %cst_160 {dimension_numbers = #tpu.dot_dimension_numbers<[1], [0], [0], [1], [0, 0, 1, 1], [], []>} : vector<16x128xbf16>, vector<128x128xbf16>, vector<16x128xf32> -> vector<16x128xf32>
    %c1_161 = arith.constant 1 : index
    %c0_162 = arith.constant 0 : index
    %c0_163 = arith.constant 0 : index
    %309 = vector.load %arg20[%c1_161, %c0_162, %c0_163] : memref<3x1x128xf32, #tpu.memory_space<vmem>>, vector<1x1x128xf32>
    %310 = vector.shape_cast %309 : vector<1x1x128xf32> to vector<1x128xf32>
    %311 = vector.broadcast %310 : vector<1x128xf32> to vector<16x128xf32>
    %312 = arith.addf %308, %311 : vector<16x128xf32>
    %c0_164 = arith.constant 0 : index
    %c128 = arith.constant 128 : index
    %313 = vector.load %arg21[%c0_164, %c128] : memref<16x384xf32, #tpu.memory_space<vmem>>, vector<16x128xf32>
    tpu.vector_store %arg21[%c0_164, %c128], %312 {strides = array<i32>} : memref<16x384xf32, #tpu.memory_space<vmem>>, vector<16x128xf32>,
    %c2 = arith.constant 2 : index
    %c0_165 = arith.constant 0 : index
    %c0_166 = arith.constant 0 : index
    %314 = vector.load %arg15[%c2, %c0_165, %c0_166] : memref<3x128x128xbf16, #tpu.memory_space<vmem>>, vector<1x128x128xbf16>
    %315 = vector.shape_cast %314 : vector<1x128x128xbf16> to vector<128x128xbf16>
    %cst_167 = arith.constant dense<0.000000e+00> : vector<16x128xf32>
    %316 = tpu.matmul %225, %315, %cst_167 {dimension_numbers = #tpu.dot_dimension_numbers<[1], [0], [0], [1], [0, 0, 1, 1], [], []>} : vector<16x128xbf16>, vector<128x128xbf16>, vector<16x128xf32> -> vector<16x128xf32>
    %c2_168 = arith.constant 2 : index
    %c0_169 = arith.constant 0 : index
    %c0_170 = arith.constant 0 : index
    %317 = vector.load %arg16[%c2_168, %c0_169, %c0_170] : memref<3x1x128xf32, #tpu.memory_space<vmem>>, vector<1x1x128xf32>
    %318 = vector.shape_cast %317 : vector<1x1x128xf32> to vector<1x128xf32>
    %319 = vector.broadcast %318 : vector<1x128xf32> to vector<16x128xf32>
    %320 = arith.addf %316, %319 : vector<16x128xf32>
    %c2_171 = arith.constant 2 : index
    %c0_172 = arith.constant 0 : index
    %c0_173 = arith.constant 0 : index
    %321 = vector.load %arg17[%c2_171, %c0_172, %c0_173] : memref<3x1x128xf32, #tpu.memory_space<vmem>>, vector<1x1x128xf32>
    %322 = vector.shape_cast %321 : vector<1x1x128xf32> to vector<1x128xf32>
    %c2_174 = arith.constant 2 : index
    %c0_175 = arith.constant 0 : index
    %c0_176 = arith.constant 0 : index
    %323 = vector.load %arg18[%c2_174, %c0_175, %c0_176] : memref<3x1x128xf32, #tpu.memory_space<vmem>>, vector<1x1x128xf32>
    %324 = vector.shape_cast %323 : vector<1x1x128xf32> to vector<1x128xf32>
    %cst_177 = arith.constant dense<0.000000e+00> : vector<16xf32>
    %325 = vector.multi_reduction <add>, %320, %cst_177 [1] : vector<16x128xf32> to vector<16xf32>
    %326 = vector.shape_cast %325 : vector<16xf32> to vector<16x1xf32>
    %cst_178 = arith.constant 1.280000e+02 : f32
    %327 = vector.broadcast %cst_178 : f32 to vector<16x1xf32>
    %328 = arith.divf %326, %327 : vector<16x1xf32>
    %329 = vector.broadcast %328 : vector<16x1xf32> to vector<16x128xf32>
    %330 = arith.subf %320, %329 : vector<16x128xf32>
    %331 = arith.mulf %330, %330 : vector<16x128xf32>
    %cst_179 = arith.constant dense<0.000000e+00> : vector<16xf32>
    %332 = vector.multi_reduction <add>, %331, %cst_179 [1] : vector<16x128xf32> to vector<16xf32>
    %333 = vector.shape_cast %332 : vector<16xf32> to vector<16x1xf32>
    %cst_180 = arith.constant 1.280000e+02 : f32
    %334 = vector.broadcast %cst_180 : f32 to vector<16x1xf32>
    %335 = arith.divf %333, %334 : vector<16x1xf32>
    %336 = vector.broadcast %328 : vector<16x1xf32> to vector<16x128xf32>
    %337 = arith.subf %320, %336 : vector<16x128xf32>
    %cst_181 = arith.constant 9.99999974E-6 : f32
    %338 = vector.broadcast %cst_181 : f32 to vector<16x1xf32>
    %339 = arith.addf %335, %338 : vector<16x1xf32>
    %340 = math.rsqrt %339 : vector<16x1xf32>
    %341 = vector.broadcast %340 : vector<16x1xf32> to vector<16x128xf32>
    %342 = arith.mulf %337, %341 : vector<16x128xf32>
    %343 = vector.broadcast %322 : vector<1x128xf32> to vector<16x128xf32>
    %344 = arith.mulf %342, %343 : vector<16x128xf32>
    %345 = vector.broadcast %324 : vector<1x128xf32> to vector<16x128xf32>
    %346 = arith.addf %344, %345 : vector<16x128xf32>
    %cst_182 = arith.constant 0.000000e+00 : f32
    %347 = vector.broadcast %cst_182 : f32 to vector<16x128xf32>
    %348 = arith.maximumf %346, %347 : vector<16x128xf32>
    %349 = arith.truncf %348 : vector<16x128xf32> to vector<16x128xbf16>
    %c2_183 = arith.constant 2 : index
    %c0_184 = arith.constant 0 : index
    %c0_185 = arith.constant 0 : index
    %350 = vector.load %arg19[%c2_183, %c0_184, %c0_185] : memref<3x128x128xbf16, #tpu.memory_space<vmem>>, vector<1x128x128xbf16>
    %351 = vector.shape_cast %350 : vector<1x128x128xbf16> to vector<128x128xbf16>
    %cst_186 = arith.constant dense<0.000000e+00> : vector<16x128xf32>
    %352 = tpu.matmul %349, %351, %cst_186 {dimension_numbers = #tpu.dot_dimension_numbers<[1], [0], [0], [1], [0, 0, 1, 1], [], []>} : vector<16x128xbf16>, vector<128x128xbf16>, vector<16x128xf32> -> vector<16x128xf32>
    %c2_187 = arith.constant 2 : index
    %c0_188 = arith.constant 0 : index
    %c0_189 = arith.constant 0 : index
    %353 = vector.load %arg20[%c2_187, %c0_188, %c0_189] : memref<3x1x128xf32, #tpu.memory_space<vmem>>, vector<1x1x128xf32>
    %354 = vector.shape_cast %353 : vector<1x1x128xf32> to vector<1x128xf32>
    %355 = vector.broadcast %354 : vector<1x128xf32> to vector<16x128xf32>
    %356 = arith.addf %352, %355 : vector<16x128xf32>
    %c0_190 = arith.constant 0 : index
    %c256 = arith.constant 256 : index
    %357 = vector.load %arg21[%c0_190, %c256] : memref<16x384xf32, #tpu.memory_space<vmem>>, vector<16x128xf32>
    tpu.vector_store %arg21[%c0_190, %c256], %356 {strides = array<i32>} : memref<16x384xf32, #tpu.memory_space<vmem>>, vector<16x128xf32>,
    return
  }
  func.func @transform_0(%arg0: i32) -> (i32, i32) {
    %c0_i32 = arith.constant 0 : i32
    %c0_i32_0 = arith.constant 0 : i32
    %c0_i32_1 = arith.constant 0 : i32
    return %c0_i32, %c0_i32_0 : i32, i32
  }
  func.func @transform_1(%arg0: i32) -> (i32, i32) {
    %c0_i32 = arith.constant 0 : i32
    %c0_i32_0 = arith.constant 0 : i32
    %c0_i32_1 = arith.constant 0 : i32
    return %c0_i32, %c0_i32_0 : i32, i32
  }
  func.func @transform_2(%arg0: i32) -> (i32, i32, i32) {
    %c0_i32 = arith.constant 0 : i32
    %c0_i32_0 = arith.constant 0 : i32
    %c0_i32_1 = arith.constant 0 : i32
    %c0_i32_2 = arith.constant 0 : i32
    return %c0_i32, %c0_i32_0, %c0_i32_1 : i32, i32, i32
  }
  func.func @transform_3(%arg0: i32) -> (i32, i32, i32) {
    %c0_i32 = arith.constant 0 : i32
    %c0_i32_0 = arith.constant 0 : i32
    %c0_i32_1 = arith.constant 0 : i32
    %c0_i32_2 = arith.constant 0 : i32
    return %c0_i32, %c0_i32_0, %c0_i32_1 : i32, i32, i32
  }
  func.func @transform_4(%arg0: i32) -> (i32, i32, i32) {
    %c0_i32 = arith.constant 0 : i32
    %c0_i32_0 = arith.constant 0 : i32
    %c0_i32_1 = arith.constant 0 : i32
    %c0_i32_2 = arith.constant 0 : i32
    return %c0_i32, %c0_i32_0, %c0_i32_1 : i32, i32, i32
  }
  func.func @transform_5(%arg0: i32) -> (i32, i32, i32) {
    %c0_i32 = arith.constant 0 : i32
    %c0_i32_0 = arith.constant 0 : i32
    %c0_i32_1 = arith.constant 0 : i32
    %c0_i32_2 = arith.constant 0 : i32
    return %c0_i32, %c0_i32_0, %c0_i32_1 : i32, i32, i32
  }
  func.func @transform_6(%arg0: i32) -> (i32, i32, i32) {
    %c0_i32 = arith.constant 0 : i32
    %c0_i32_0 = arith.constant 0 : i32
    %c0_i32_1 = arith.constant 0 : i32
    %c0_i32_2 = arith.constant 0 : i32
    return %c0_i32, %c0_i32_0, %c0_i32_1 : i32, i32, i32
  }
  func.func @transform_7(%arg0: i32) -> (i32, i32, i32) {
    %c0_i32 = arith.constant 0 : i32
    %c0_i32_0 = arith.constant 0 : i32
    %c0_i32_1 = arith.constant 0 : i32
    %c0_i32_2 = arith.constant 0 : i32
    return %c0_i32, %c0_i32_0, %c0_i32_1 : i32, i32, i32
  }
  func.func @transform_8(%arg0: i32) -> (i32, i32, i32) {
    %c0_i32 = arith.constant 0 : i32
    %c0_i32_0 = arith.constant 0 : i32
    %c0_i32_1 = arith.constant 0 : i32
    %c0_i32_2 = arith.constant 0 : i32
    return %c0_i32, %c0_i32_0, %c0_i32_1 : i32, i32, i32
  }
  func.func @transform_9(%arg0: i32) -> (i32, i32, i32) {
    %c0_i32 = arith.constant 0 : i32
    %c0_i32_0 = arith.constant 0 : i32
    %c0_i32_1 = arith.constant 0 : i32
    %c0_i32_2 = arith.constant 0 : i32
    return %c0_i32, %c0_i32_0, %c0_i32_1 : i32, i32, i32
  }
  func.func @transform_10(%arg0: i32) -> (i32, i32, i32) {
    %c0_i32 = arith.constant 0 : i32
    %c0_i32_0 = arith.constant 0 : i32
    %c0_i32_1 = arith.constant 0 : i32
    %c0_i32_2 = arith.constant 0 : i32
    return %c0_i32, %c0_i32_0, %c0_i32_1 : i32, i32, i32
  }
  func.func @transform_11(%arg0: i32) -> (i32, i32, i32) {
    %c0_i32 = arith.constant 0 : i32
    %c0_i32_0 = arith.constant 0 : i32
    %c0_i32_1 = arith.constant 0 : i32
    %c0_i32_2 = arith.constant 0 : i32
    return %c0_i32, %c0_i32_0, %c0_i32_1 : i32, i32, i32
  }
  func.func @transform_12(%arg0: i32) -> (i32, i32, i32) {
    %c0_i32 = arith.constant 0 : i32
    %c0_i32_0 = arith.constant 0 : i32
    %c0_i32_1 = arith.constant 0 : i32
    %c0_i32_2 = arith.constant 0 : i32
    return %c0_i32, %c0_i32_0, %c0_i32_1 : i32, i32, i32
  }
  func.func @transform_13(%arg0: i32) -> (i32, i32, i32) {
    %c0_i32 = arith.constant 0 : i32
    %c0_i32_0 = arith.constant 0 : i32
    %c0_i32_1 = arith.constant 0 : i32
    %c0_i32_2 = arith.constant 0 : i32
    return %c0_i32, %c0_i32_0, %c0_i32_1 : i32, i32, i32
  }
  func.func @transform_14(%arg0: i32) -> (i32, i32, i32) {
    %c0_i32 = arith.constant 0 : i32
    %c0_i32_0 = arith.constant 0 : i32
    %c0_i32_1 = arith.constant 0 : i32
    %c0_i32_2 = arith.constant 0 : i32
    return %c0_i32, %c0_i32_0, %c0_i32_1 : i32, i32, i32
  }
  func.func @transform_15(%arg0: i32) -> (i32, i32, i32) {
    %c0_i32 = arith.constant 0 : i32
    %c0_i32_0 = arith.constant 0 : i32
    %c0_i32_1 = arith.constant 0 : i32
    %c0_i32_2 = arith.constant 0 : i32
    return %c0_i32, %c0_i32_0, %c0_i32_1 : i32, i32, i32
  }
  func.func @transform_16(%arg0: i32) -> (i32, i32, i32) {
    %c0_i32 = arith.constant 0 : i32
    %c0_i32_0 = arith.constant 0 : i32
    %c0_i32_1 = arith.constant 0 : i32
    %c0_i32_2 = arith.constant 0 : i32
    return %c0_i32, %c0_i32_0, %c0_i32_1 : i32, i32, i32
  }
  func.func @transform_17(%arg0: i32) -> (i32, i32, i32) {
    %c0_i32 = arith.constant 0 : i32
    %c0_i32_0 = arith.constant 0 : i32
    %c0_i32_1 = arith.constant 0 : i32
    %c0_i32_2 = arith.constant 0 : i32
    return %c0_i32, %c0_i32_0, %c0_i32_1 : i32, i32, i32
  }
  func.func @transform_18(%arg0: i32) -> (i32, i32, i32) {
    %c0_i32 = arith.constant 0 : i32
    %c0_i32_0 = arith.constant 0 : i32
    %c0_i32_1 = arith.constant 0 : i32
    %c0_i32_2 = arith.constant 0 : i32
    return %c0_i32, %c0_i32_0, %c0_i32_1 : i32, i32, i32
  }
  func.func @transform_19(%arg0: i32) -> (i32, i32, i32) {
    %c0_i32 = arith.constant 0 : i32
    %c0_i32_0 = arith.constant 0 : i32
    %c0_i32_1 = arith.constant 0 : i32
    %c0_i32_2 = arith.constant 0 : i32
    return %c0_i32, %c0_i32_0, %c0_i32_1 : i32, i32, i32
  }
  func.func @transform_20(%arg0: i32) -> (i32, i32) {
    %c0_i32 = arith.constant 0 : i32
    %c0_i32_0 = arith.constant 0 : i32
    %c0_i32_1 = arith.constant 0 : i32
    return %c0_i32, %c0_i32_0 : i32, i32
  }
}

</mosaic_0001>

<llo_original>
// kernel: _lambda_.1
$region0: #{_lambda_.1}
  #allocation0 [shape = 'u32[]', space=smem, size = 0x4, offset = 0x4, fixed_abs, tag = 'smem constant byte address 0x4 - core index']
  #allocation1 [shape = 'u32[144,128]{1,0:T(1,128)}', space=vmem, size = 0x12000, scoped, tag = 'internal scratch']
  %s0 = inlined_call_operand.vmem [shape: f32[32,128], index: 0, kind: input, shape index: {}]
  %s1 = inlined_call_operand.hbm [shape: bf16[128,128], index: 1, kind: input, shape index: {}]
  %s2 = inlined_call_operand.vmem [shape: bf16[2,128,384], index: 2, kind: input, shape index: {}]
  %s3 = inlined_call_operand.vmem [shape: f32[2,1,384], index: 3, kind: input, shape index: {}]
  %s4 = inlined_call_operand.hbm [shape: bf16[2,128,128], index: 4, kind: input, shape index: {}]
  %s5 = inlined_call_operand.vmem [shape: f32[2,1,128], index: 5, kind: input, shape index: {}]
  %s6 = inlined_call_operand.vmem [shape: f32[2,1,128], index: 6, kind: input, shape index: {}]
  %s7 = inlined_call_operand.vmem [shape: f32[2,1,128], index: 7, kind: input, shape index: {}]
  %s8 = inlined_call_operand.vmem [shape: bf16[2,128,256], index: 8, kind: input, shape index: {}]
  %s9 = inlined_call_operand.vmem [shape: f32[2,1,256], index: 9, kind: input, shape index: {}]
  %s10 = inlined_call_operand.vmem [shape: bf16[2,256,128], index: 10, kind: input, shape index: {}]
  %s11 = inlined_call_operand.vmem [shape: f32[2,1,128], index: 11, kind: input, shape index: {}]
  %s12 = inlined_call_operand.hbm [shape: f32[2,1,128], index: 12, kind: input, shape index: {}]
  %s13 = inlined_call_operand.vmem [shape: f32[2,1,128], index: 13, kind: input, shape index: {}]
  %s14 = inlined_call_operand.hbm [shape: bf16[3,128,128], index: 14, kind: input, shape index: {}]
  %s15 = inlined_call_operand.hbm [shape: f32[3,1,128], index: 15, kind: input, shape index: {}]
  %s16 = inlined_call_operand.hbm [shape: f32[3,1,128], index: 16, kind: input, shape index: {}]
  %s17 = inlined_call_operand.hbm [shape: f32[3,1,128], index: 17, kind: input, shape index: {}]
  %s18 = inlined_call_operand.hbm [shape: bf16[3,128,128], index: 18, kind: input, shape index: {}]
  %s19 = inlined_call_operand.hbm [shape: f32[3,1,128], index: 19, kind: input, shape index: {}]
  %s20 = inlined_call_operand.vmem [shape: f32[16,384], index: 20, kind: output, shape index: {}]
  %s21 = sld [smem:[#allocation0]]
  $region126: #{_lambda_.1} parent=0
    _
  %s23 = ssub.s32 1, %s21
  %s24 = scalar_select 0, %s23, %s21
  $region1: #{_lambda_.1} parent=0
    #allocation2 [shape = 'u8[32768]{0}', space=vmem, size = 0x8000, scoped, tag = 'input window, operand 1, single buffered']
    #allocation3 [shape = 's32[1]{0}', space=sflag, size = 0x4, scoped, tag = 'scoped memory for _lambda_.1']
    #allocation4 [shape = 'u8[65536]{0}', space=vmem, size = 0x10000, scoped, tag = 'input window, operand 4, single buffered']
    #allocation5 [shape = 's32[1]{0}', space=sflag, size = 0x4, scoped, tag = 'scoped memory for _lambda_.1']
    #allocation6 [shape = 'u8[1024]{0}', space=vmem, size = 0x400, scoped, tag = 'input window, operand 12, single buffered']
    #allocation7 [shape = 'u8[98304]{0}', space=vmem, size = 0x18000, scoped, tag = 'input window, operand 14, single buffered']
    #allocation8 [shape = 's32[1]{0}', space=sflag, size = 0x4, scoped, tag = 'scoped memory for _lambda_.1']
    #allocation9 [shape = 'u8[1536]{0}', space=vmem, size = 0x800, scoped, tag = 'input window, operand 15, single buffered']
    #allocation10 [shape = 'u8[1536]{0}', space=vmem, size = 0x800, scoped, tag = 'input window, operand 16, single buffered']
    #allocation11 [shape = 's32[1]{0}', space=sflag, size = 0x4, scoped, tag = 'scoped memory for _lambda_.1']
    #allocation12 [shape = 'u8[1536]{0}', space=vmem, size = 0x800, scoped, tag = 'input window, operand 17, single buffered']
    #allocation13 [shape = 'u8[98304]{0}', space=vmem, size = 0x18000, scoped, tag = 'input window, operand 18, single buffered']
    #allocation14 [shape = 's32[1]{0}', space=sflag, size = 0x4, scoped, tag = 'scoped memory for _lambda_.1']
    #allocation15 [shape = 'u8[1536]{0}', space=vmem, size = 0x800, scoped, tag = 'input window, operand 19, single buffered']
    %25 = vsyncpa [#allocation3], 0
    %26 = vsyncpa [#allocation5], 0
    %27 = vsyncpa [#allocation8], 0
    %28 = vsyncpa [#allocation11], 0
    %29 = vsyncpa [#allocation14], 0
    // Predicated region
    $region2: #{_lambda_.1} parent=1 // pred_check
      _
    $region3: #{_lambda_.1} parent=1 // pred_check_branch
      %31 = sbr.rel (0) target = $region5
    $region4: #{_lambda_.1} parent=1 // pred_region
      _
    $region5: #{_lambda_.1} parent=1 // pred_fallthru
      _
    // Predicated region
    $region6: #{_lambda_.1} parent=1 // pred_check
      _
    $region7: #{_lambda_.1} parent=1 // pred_check_branch
      %33 = sbr.rel (0) target = $region9
    $region8: #{_lambda_.1} parent=1 // pred_region
      %s35 = ssub.s32 1024, 1024
      %36 = vsyncadd [#allocation3], %s35
      %s37 = sshll.u32 [#allocation2], 4
      %s38 = int_to_ptr.vmem [resolvable:$true] %s37
      %43 = dma.hbm_to_vmem [thread:$0]  %s1, 1024, %s38, [#allocation3], 64, 64, 4
    $region9: #{_lambda_.1} parent=1 // pred_fallthru
      _
    // Predicated region
    $region10: #{_lambda_.1} parent=1 // pred_check
      _
    $region11: #{_lambda_.1} parent=1 // pred_check_branch
      %45 = sbr.rel (0) target = $region13
    $region12: #{_lambda_.1} parent=1 // pred_region
      _
    $region13: #{_lambda_.1} parent=1 // pred_fallthru
      _
    // Predicated region
    $region14: #{_lambda_.1} parent=1 // pred_check
      _
    $region15: #{_lambda_.1} parent=1 // pred_check_branch
      %47 = sbr.rel (0) target = $region17
    $region16: #{_lambda_.1} parent=1 // pred_region
      _
    $region17: #{_lambda_.1} parent=1 // pred_fallthru
      _
    // Predicated region
    $region18: #{_lambda_.1} parent=1 // pred_check
      _
    $region19: #{_lambda_.1} parent=1 // pred_check_branch
      %49 = sbr.rel (0) target = $region21
    $region20: #{_lambda_.1} parent=1 // pred_region
      %s51 = ssub.s32 2048, 2048
      %52 = vsyncadd [#allocation5], %s51
      %s53 = sshll.u32 [#allocation4], 4
      %s54 = int_to_ptr.vmem [resolvable:$true] %s53
      %59 = dma.hbm_to_vmem [thread:$0]  %s4, 2048, %s54, [#allocation5], 64, 64, 4
    $region21: #{_lambda_.1} parent=1 // pred_fallthru
      _
    // Predicated region
    $region22: #{_lambda_.1} parent=1 // pred_check
      _
    $region23: #{_lambda_.1} parent=1 // pred_check_branch
      %61 = sbr.rel (0) target = $region25
    $region24: #{_lambda_.1} parent=1 // pred_region
      _
    $region25: #{_lambda_.1} parent=1 // pred_fallthru
      _
    // Predicated region
    $region26: #{_lambda_.1} parent=1 // pred_check
      _
    $region27: #{_lambda_.1} parent=1 // pred_check_branch
      %63 = sbr.rel (0) target = $region29
    $region28: #{_lambda_.1} parent=1 // pred_region
      _
    $region29: #{_lambda_.1} parent=1 // pred_fallthru
      _
    // Predicated region
    $region30: #{_lambda_.1} parent=1 // pred_check
      _
    $region31: #{_lambda_.1} parent=1 // pred_check_branch
      %65 = sbr.rel (0) target = $region33
    $region32: #{_lambda_.1} parent=1 // pred_region
      _
    $region33: #{_lambda_.1} parent=1 // pred_fallthru
      _
    // Predicated region
    $region34: #{_lambda_.1} parent=1 // pred_check
      _
    $region35: #{_lambda_.1} parent=1 // pred_check_branch
      %67 = sbr.rel (0) target = $region37
    $region36: #{_lambda_.1} parent=1 // pred_region
      _
    $region37: #{_lambda_.1} parent=1 // pred_fallthru
      _
    // Predicated region
    $region38: #{_lambda_.1} parent=1 // pred_check
      _
    $region39: #{_lambda_.1} parent=1 // pred_check_branch
      %69 = sbr.rel (0) target = $region41
    $region40: #{_lambda_.1} parent=1 // pred_region
      _
    $region41: #{_lambda_.1} parent=1 // pred_fallthru
      _
    // Predicated region
    $region42: #{_lambda_.1} parent=1 // pred_check
      _
    $region43: #{_lambda_.1} parent=1 // pred_check_branch
      %71 = sbr.rel (0) target = $region45
    $region44: #{_lambda_.1} parent=1 // pred_region
      _
    $region45: #{_lambda_.1} parent=1 // pred_fallthru
      _
    // Predicated region
    $region46: #{_lambda_.1} parent=1 // pred_check
      _
    $region47: #{_lambda_.1} parent=1 // pred_check_branch
      %73 = sbr.rel (0) target = $region49
    $region48: #{_lambda_.1} parent=1 // pred_region
      _
    $region49: #{_lambda_.1} parent=1 // pred_fallthru
      _
    // Predicated region
    $region50: #{_lambda_.1} parent=1 // pred_check
      _
    $region51: #{_lambda_.1} parent=1 // pred_check_branch
      %75 = sbr.rel (0) target = $region53
    $region52: #{_lambda_.1} parent=1 // pred_region
      %s77 = ssub.s32 32, 32
      %78 = vsyncadd [#allocation5], %s77
      %s79 = sshll.u32 [#allocation6], 4
      %s80 = int_to_ptr.vmem [resolvable:$true] %s79
      %85 = dma.hbm_to_vmem [thread:$0]  %s12, 32, %s80, [#allocation5], 16, 16, 1
    $region53: #{_lambda_.1} parent=1 // pred_fallthru
      _
    // Predicated region
    $region54: #{_lambda_.1} parent=1 // pred_check
      _
    $region55: #{_lambda_.1} parent=1 // pred_check_branch
      %87 = sbr.rel (0) target = $region57
    $region56: #{_lambda_.1} parent=1 // pred_region
      _
    $region57: #{_lambda_.1} parent=1 // pred_fallthru
      _
    // Predicated region
    $region58: #{_lambda_.1} parent=1 // pred_check
      _
    $region59: #{_lambda_.1} parent=1 // pred_check_branch
      %89 = sbr.rel (0) target = $region61
    $region60: #{_lambda_.1} parent=1 // pred_region
      %s91 = ssub.s32 3072, 3072
      %92 = vsyncadd [#allocation8], %s91
      %s93 = sshll.u32 [#allocation7], 4
      %s94 = int_to_ptr.vmem [resolvable:$true] %s93
      %99 = dma.hbm_to_vmem [thread:$0]  %s14, 3072, %s94, [#allocation8], 64, 64, 4
    $region61: #{_lambda_.1} parent=1 // pred_fallthru
      _
    // Predicated region
    $region62: #{_lambda_.1} parent=1 // pred_check
      _
    $region63: #{_lambda_.1} parent=1 // pred_check_branch
      %101 = sbr.rel (0) target = $region65
    $region64: #{_lambda_.1} parent=1 // pred_region
      %s103 = ssub.s32 48, 48
      %104 = vsyncadd [#allocation8], %s103
      %s105 = sshll.u32 [#allocation9], 4
      %s106 = int_to_ptr.vmem [resolvable:$true] %s105
      %111 = dma.hbm_to_vmem [thread:$0]  %s15, 48, %s106, [#allocation8], 16, 16, 1
    $region65: #{_lambda_.1} parent=1 // pred_fallthru
      _
    // Predicated region
    $region66: #{_lambda_.1} parent=1 // pred_check
      _
    $region67: #{_lambda_.1} parent=1 // pred_check_branch
      %113 = sbr.rel (0) target = $region69
    $region68: #{_lambda_.1} parent=1 // pred_region
      %s115 = ssub.s32 48, 48
      %116 = vsyncadd [#allocation11], %s115
      %s117 = sshll.u32 [#allocation10], 4
      %s118 = int_to_ptr.vmem [resolvable:$true] %s117
      %123 = dma.hbm_to_vmem [thread:$0]  %s16, 48, %s118, [#allocation11], 16, 16, 1
    $region69: #{_lambda_.1} parent=1 // pred_fallthru
      _
    // Predicated region
    $region70: #{_lambda_.1} parent=1 // pred_check
      _
    $region71: #{_lambda_.1} parent=1 // pred_check_branch
      %125 = sbr.rel (0) target = $region73
    $region72: #{_lambda_.1} parent=1 // pred_region
      %s127 = ssub.s32 48, 48
      %128 = vsyncadd [#allocation11], %s127
      %s129 = sshll.u32 [#allocation12], 4
      %s130 = int_to_ptr.vmem [resolvable:$true] %s129
      %135 = dma.hbm_to_vmem [thread:$0]  %s17, 48, %s130, [#allocation11], 16, 16, 1
    $region73: #{_lambda_.1} parent=1 // pred_fallthru
      _
    // Predicated region
    $region74: #{_lambda_.1} parent=1 // pred_check
      _
    $region75: #{_lambda_.1} parent=1 // pred_check_branch
      %137 = sbr.rel (0) target = $region77
    $region76: #{_lambda_.1} parent=1 // pred_region
      %s139 = ssub.s32 3072, 3072
      %140 = vsyncadd [#allocation14], %s139
      %s141 = sshll.u32 [#allocation13], 4
      %s142 = int_to_ptr.vmem [resolvable:$true] %s141
      %147 = dma.hbm_to_vmem [thread:$0]  %s18, 3072, %s142, [#allocation14], 64, 64, 4
    $region77: #{_lambda_.1} parent=1 // pred_fallthru
      _
    // Predicated region
    $region78: #{_lambda_.1} parent=1 // pred_check
      _
    $region79: #{_lambda_.1} parent=1 // pred_check_branch
      %149 = sbr.rel (0) target = $region81
    $region80: #{_lambda_.1} parent=1 // pred_region
      %s151 = ssub.s32 48, 48
      %152 = vsyncadd [#allocation14], %s151
      %s153 = sshll.u32 [#allocation15], 4
      %s154 = int_to_ptr.vmem [resolvable:$true] %s153
      %159 = dma.hbm_to_vmem [thread:$0]  %s19, 48, %s154, [#allocation14], 16, 16, 1
    $region81: #{_lambda_.1} parent=1 // pred_fallthru
      _
    // Predicated region
    $region82: #{_lambda_.1} parent=1 // pred_check
      _
    $region83: #{_lambda_.1} parent=1 // pred_check_branch
      %161 = sbr.rel (0) target = $region85
    $region84: #{_lambda_.1} parent=1 // pred_region
      %162 = dma.done [#allocation3], 1024
    $region85: #{_lambda_.1} parent=1 // pred_fallthru
      _
    // Predicated region
    $region86: #{_lambda_.1} parent=1 // pred_check
      _
    $region87: #{_lambda_.1} parent=1 // pred_check_branch
      %164 = sbr.rel (0) target = $region89
    $region88: #{_lambda_.1} parent=1 // pred_region
      %165 = dma.done [#allocation5], 2048
    $region89: #{_lambda_.1} parent=1 // pred_fallthru
      _
    // Predicated region
    $region90: #{_lambda_.1} parent=1 // pred_check
      _
    $region91: #{_lambda_.1} parent=1 // pred_check_branch
      %167 = sbr.rel (0) target = $region93
    $region92: #{_lambda_.1} parent=1 // pred_region
      %168 = dma.done [#allocation5], 32
    $region93: #{_lambda_.1} parent=1 // pred_fallthru
      _
    // Predicated region
    $region94: #{_lambda_.1} parent=1 // pred_check
      _
    $region95: #{_lambda_.1} parent=1 // pred_check_branch
      %170 = sbr.rel (0) target = $region97
    $region96: #{_lambda_.1} parent=1 // pred_region
      %171 = dma.done [#allocation8], 3072
    $region97: #{_lambda_.1} parent=1 // pred_fallthru
      _
    // Predicated region
    $region98: #{_lambda_.1} parent=1 // pred_check
      _
    $region99: #{_lambda_.1} parent=1 // pred_check_branch
      %173 = sbr.rel (0) target = $region101
    $region100: #{_lambda_.1} parent=1 // pred_region
      %174 = dma.done [#allocation8], 48
    $region101: #{_lambda_.1} parent=1 // pred_fallthru
      _
    // Predicated region
    $region102: #{_lambda_.1} parent=1 // pred_check
      _
    $region103: #{_lambda_.1} parent=1 // pred_check_branch
      %176 = sbr.rel (0) target = $region105
    $region104: #{_lambda_.1} parent=1 // pred_region
      %177 = dma.done [#allocation11], 48
    $region105: #{_lambda_.1} parent=1 // pred_fallthru
      _
    // Predicated region
    $region106: #{_lambda_.1} parent=1 // pred_check
      _
    $region107: #{_lambda_.1} parent=1 // pred_check_branch
      %179 = sbr.rel (0) target = $region109
    $region108: #{_lambda_.1} parent=1 // pred_region
      %180 = dma.done [#allocation11], 48
    $region109: #{_lambda_.1} parent=1 // pred_fallthru
      _
    // Predicated region
    $region110: #{_lambda_.1} parent=1 // pred_check
      _
    $region111: #{_lambda_.1} parent=1 // pred_check_branch
      %182 = sbr.rel (0) target = $region113
    $region112: #{_lambda_.1} parent=1 // pred_region
      %183 = dma.done [#allocation14], 3072
    $region113: #{_lambda_.1} parent=1 // pred_fallthru
      _
    // Predicated region
    $region114: #{_lambda_.1} parent=1 // pred_check
      _
    $region115: #{_lambda_.1} parent=1 // pred_check_branch
      %185 = sbr.rel (0) target = $region117
    $region116: #{_lambda_.1} parent=1 // pred_region
      %186 = dma.done [#allocation14], 48
    $region117: #{_lambda_.1} parent=1 // pred_fallthru
      _
    %v188 = vld [vmem:[%s0] sm:$0xff]
    %v189 = vld [vmem:[%s0 + $0x8] sm:$0xff]
    %v190 = vld [vmem:[%s0 + $0x10] sm:$0xff]
    %v191 = vld [vmem:[%s0 + $0x18] sm:$0xff]
    %v192 = vld [vmem:[#allocation2] sm:$0xf]
    %v193 = vld [vmem:[#allocation2 + $0x4] sm:$0xf]
    %v194 = vld [vmem:[#allocation2 + $0x8] sm:$0xf]
    %v195 = vld [vmem:[#allocation2 + $0xc] sm:$0xf]
    %v196 = vld [vmem:[#allocation2 + $0x10] sm:$0xf]
    %v197 = vld [vmem:[#allocation2 + $0x14] sm:$0xf]
    %v198 = vld [vmem:[#allocation2 + $0x18] sm:$0xf]
    %v199 = vld [vmem:[#allocation2 + $0x1c] sm:$0xf]
    %v200 = vld [vmem:[#allocation2 + $0x20] sm:$0xf]
    %v201 = vld [vmem:[#allocation2 + $0x24] sm:$0xf]
    %v202 = vld [vmem:[#allocation2 + $0x28] sm:$0xf]
    %v203 = vld [vmem:[#allocation2 + $0x2c] sm:$0xf]
    %v204 = vld [vmem:[#allocation2 + $0x30] sm:$0xf]
    %v205 = vld [vmem:[#allocation2 + $0x34] sm:$0xf]
    %v206 = vld [vmem:[#allocation2 + $0x38] sm:$0xf]
    %v207 = vld [vmem:[#allocation2 + $0x3c] sm:$0xf]
    %v208 = vpack.c.bf16 %v189, %v188
    %v209 = vpack.c.bf16 %v191, %v190
    %v210 = vld [vmem:[%s2] sm:$0xff]
    %v211 = vld [vmem:[%s2 + $0x8] sm:$0xf]
    %v212 = vld [vmem:[%s2 + $0xc] sm:$0xff]
    %v213 = vld [vmem:[%s2 + $0x14] sm:$0xf]
    %v214 = vld [vmem:[%s2 + $0x18] sm:$0xff]
    %v215 = vld [vmem:[%s2 + $0x20] sm:$0xf]
    %v216 = vld [vmem:[%s2 + $0x24] sm:$0xff]
    %v217 = vld [vmem:[%s2 + $0x2c] sm:$0xf]
    %v218 = vld [vmem:[%s2 + $0x30] sm:$0xff]
    %v219 = vld [vmem:[%s2 + $0x38] sm:$0xf]
    %v220 = vld [vmem:[%s2 + $0x3c] sm:$0xff]
    %v221 = vld [vmem:[%s2 + $0x44] sm:$0xf]
    %v222 = vld [vmem:[%s2 + $0x48] sm:$0xff]
    %v223 = vld [vmem:[%s2 + $0x50] sm:$0xf]
    %v224 = vld [vmem:[%s2 + $0x54] sm:$0xff]
    %v225 = vld [vmem:[%s2 + $0x5c] sm:$0xf]
    %v226 = vld [vmem:[%s2 + $0x60] sm:$0xff]
    %v227 = vld [vmem:[%s2 + $0x68] sm:$0xf]
    %v228 = vld [vmem:[%s2 + $0x6c] sm:$0xff]
    %v229 = vld [vmem:[%s2 + $0x74] sm:$0xf]
    %v230 = vld [vmem:[%s2 + $0x78] sm:$0xff]
    %v231 = vld [vmem:[%s2 + $0x80] sm:$0xf]
    %v232 = vld [vmem:[%s2 + $0x84] sm:$0xff]
    %v233 = vld [vmem:[%s2 + $0x8c] sm:$0xf]
    %v234 = vld [vmem:[%s2 + $0x90] sm:$0xff]
    %v235 = vld [vmem:[%s2 + $0x98] sm:$0xf]
    %v236 = vld [vmem:[%s2 + $0x9c] sm:$0xff]
    %v237 = vld [vmem:[%s2 + $0xa4] sm:$0xf]
    %v238 = vld [vmem:[%s2 + $0xa8] sm:$0xff]
    %v239 = vld [vmem:[%s2 + $0xb0] sm:$0xf]
    %v240 = vld [vmem:[%s2 + $0xb4] sm:$0xff]
    %v241 = vld [vmem:[%s2 + $0xbc] sm:$0xf]
    %v242 = vld [vmem:[%s3] sm:$0x7]
    %v244 = vlaneseq
    %v245 = vshrl.u32 %v244, 7
    %v246 = vsub.s32 0, %v245
    %v247 = vrot.slane %v242, %v246
    %v248 = vlaneseq
    %v249 = vshrl.u32 %v248, 7
    %v250 = vsub.s32 1, %v249
    %v251 = vrot.slane %v242, %v250
    %v252 = vlaneseq
    %v253 = vshrl.u32 %v252, 7
    %v254 = vsub.s32 2, %v253
    %v255 = vrot.slane %v242, %v254
    %v291 = vunpack.c.l.b16 %v210
    %v292 = vunpack.c.h.b16 %v210
    %v293 = vunpack.c.l.b16 %v211
    %v294 = vunpack.c.l.b16 %v212
    %v295 = vunpack.c.h.b16 %v212
    %v296 = vunpack.c.l.b16 %v213
    %v297 = vunpack.c.l.b16 %v214
    %v298 = vunpack.c.h.b16 %v214
    %v299 = vunpack.c.l.b16 %v215
    %v300 = vunpack.c.l.b16 %v216
    %v301 = vunpack.c.h.b16 %v216
    %v302 = vunpack.c.l.b16 %v217
    %v303 = vunpack.c.l.b16 %v218
    %v304 = vunpack.c.h.b16 %v218
    %v305 = vunpack.c.l.b16 %v219
    %v306 = vunpack.c.l.b16 %v220
    %v307 = vunpack.c.h.b16 %v220
    %v308 = vunpack.c.l.b16 %v221
    %v309 = vunpack.c.l.b16 %v222
    %v310 = vunpack.c.h.b16 %v222
    %v311 = vunpack.c.l.b16 %v223
    %v312 = vunpack.c.l.b16 %v224
    %v313 = vunpack.c.h.b16 %v224
    %v314 = vunpack.c.l.b16 %v225
    %v315 = vunpack.c.l.b16 %v226
    %v316 = vunpack.c.h.b16 %v226
    %v317 = vunpack.c.l.b16 %v227
    %v318 = vunpack.c.l.b16 %v228
    %v319 = vunpack.c.h.b16 %v228
    %v320 = vunpack.c.l.b16 %v229
    %v321 = vunpack.c.l.b16 %v230
    %v322 = vunpack.c.h.b16 %v230
    %v323 = vunpack.c.l.b16 %v231
    %v324 = vunpack.c.l.b16 %v232
    %v325 = vunpack.c.h.b16 %v232
    %v326 = vunpack.c.l.b16 %v233
    %v327 = vunpack.c.l.b16 %v234
    %v328 = vunpack.c.h.b16 %v234
    %v329 = vunpack.c.l.b16 %v235
    %v330 = vunpack.c.l.b16 %v236
    %v331 = vunpack.c.h.b16 %v236
    %v332 = vunpack.c.l.b16 %v237
    %v333 = vunpack.c.l.b16 %v238
    %v334 = vunpack.c.h.b16 %v238
    %v335 = vunpack.c.l.b16 %v239
    %v336 = vunpack.c.l.b16 %v240
    %v337 = vunpack.c.h.b16 %v240
    %v338 = vunpack.c.l.b16 %v241
    %v339 = vpack.c.b16 %v294, %v291
    %v340 = vpack.c.b16 %v295, %v292
    %v341 = vpack.c.b16 %v296, %v293
    %v342 = vpack.c.b16 %v300, %v297
    %v343 = vpack.c.b16 %v301, %v298
    %v344 = vpack.c.b16 %v302, %v299
    %v345 = vpack.c.b16 %v306, %v303
    %v346 = vpack.c.b16 %v307, %v304
    %v347 = vpack.c.b16 %v308, %v305
    %v348 = vpack.c.b16 %v312, %v309
    %v349 = vpack.c.b16 %v313, %v310
    %v350 = vpack.c.b16 %v314, %v311
    %v351 = vpack.c.b16 %v318, %v315
    %v352 = vpack.c.b16 %v319, %v316
    %v353 = vpack.c.b16 %v320, %v317
    %v354 = vpack.c.b16 %v324, %v321
    %v355 = vpack.c.b16 %v325, %v322
    %v356 = vpack.c.b16 %v326, %v323
    %v357 = vpack.c.b16 %v330, %v327
    %v358 = vpack.c.b16 %v331, %v328
    %v359 = vpack.c.b16 %v332, %v329
    %v360 = vpack.c.b16 %v336, %v333
    %v361 = vpack.c.b16 %v337, %v334
    %v362 = vpack.c.b16 %v338, %v335
    %387 = vmatprep.subr.bf16.mxu0 %v340
    %388 = vmatpush1.bf16.msra.mxu0 %v339
    %389 = vmatprep.subr.bf16.mxu0 %v343
    %390 = vmatpush1.bf16.msra.mxu0 %v342
    %391 = vmatprep.subr.bf16.mxu0 %v346
    %392 = vmatpush1.bf16.msra.mxu0 %v345
    %393 = vmatprep.subr.bf16.mxu0 %v349
    %394 = vmatpush1.bf16.msra.mxu0 %v348
    %395 = vmatprep.subr.bf16.mxu0 %v352
    %396 = vmatpush1.bf16.msra.mxu0 %v351
    %397 = vmatprep.subr.bf16.mxu0 %v355
    %398 = vmatpush1.bf16.msra.mxu0 %v354
    %399 = vmatprep.subr.bf16.mxu0 %v358
    %400 = vmatpush1.bf16.msra.mxu0 %v357
    %401 = vmatprep.subr.bf16.mxu0 %v361
    %402 = vmatpush1.bf16.msra.mxu0 %v360
    %403 = vmatprep.subr.bf16.mxu0 0
    %404 = vmatpush1.bf16.msra.mxu0 0
    %405 = vmatprep.subr.bf16.mxu0 0
    %406 = vmatpush1.bf16.msra.mxu0 0
    %407 = vmatprep.subr.bf16.mxu0 0
    %408 = vmatpush1.bf16.msra.mxu0 0
    %409 = vmatprep.subr.bf16.mxu0 0
    %410 = vmatpush1.bf16.msra.mxu0 0
    %411 = vmatprep.subr.bf16.mxu0 0
    %412 = vmatpush1.bf16.msra.mxu0 0
    %413 = vmatprep.subr.bf16.mxu0 0
    %414 = vmatpush1.bf16.msra.mxu0 0
    %415 = vmatprep.subr.bf16.mxu0 0
    %416 = vmatpush1.bf16.msra.mxu0 0
    %417 = vmatprep.subr.bf16.mxu0 0
    %418 = vmatpush1.bf16.msra.mxu0 0
    %419 = vmatprep.mubr.bf16.mxu0 0
    %420 = vmatmul.mubr.bf16.gmra.mrb[0].mxu0 %v208
    %v421 = vpop.f32.mrb[0].mxu0
    %v422 = vadd.f32 %v247, %v421
    %v423 = vpop.f32.mrb[0].mxu0
    %v424 = vadd.f32 %v251, %v423
    %v425 = vpop.f32.mrb[0].mxu0
    %v426 = vadd.f32 %v247, %v425
    %v427 = vpop.f32.mrb[0].mxu0
    %v428 = vadd.f32 %v251, %v427
    %429 = vmatprep.mubr.bf16.mxu0 0
    %430 = vmatmul.mubr.bf16.gmra.mrb[0].mxu0 %v209
    %v431 = vpop.f32.mrb[0].mxu0
    %v432 = vadd.f32 %v247, %v431
    %v433 = vpop.f32.mrb[0].mxu0
    %v434 = vadd.f32 %v251, %v433
    %v435 = vpop.f32.mrb[0].mxu0
    %v436 = vadd.f32 %v247, %v435
    %v437 = vpop.f32.mrb[0].mxu0
    %v438 = vadd.f32 %v251, %v437
    %439 = vdwg.mxu0
    %440 = vmatprep.subr.bf16.mxu0 0
    %441 = vmatpush1.bf16.msra.mxu0 %v341
    %442 = vmatprep.subr.bf16.mxu0 0
    %443 = vmatpush1.bf16.msra.mxu0 %v344
    %444 = vmatprep.subr.bf16.mxu0 0
    %445 = vmatpush1.bf16.msra.mxu0 %v347
    %446 = vmatprep.subr.bf16.mxu0 0
    %447 = vmatpush1.bf16.msra.mxu0 %v350
    %448 = vmatprep.subr.bf16.mxu0 0
    %449 = vmatpush1.bf16.msra.mxu0 %v353
    %450 = vmatprep.subr.bf16.mxu0 0
    %451 = vmatpush1.bf16.msra.mxu0 %v356
    %452 = vmatprep.subr.bf16.mxu0 0
    %453 = vmatpush1.bf16.msra.mxu0 %v359
    %454 = vmatprep.subr.bf16.mxu0 0
    %455 = vmatpush1.bf16.msra.mxu0 %v362
    %456 = vmatprep.subr.bf16.mxu0 0
    %457 = vmatpush1.bf16.msra.mxu0 0
    %458 = vmatprep.subr.bf16.mxu0 0
    %459 = vmatpush1.bf16.msra.mxu0 0
    %460 = vmatprep.subr.bf16.mxu0 0
    %461 = vmatpush1.bf16.msra.mxu0 0
    %462 = vmatprep.subr.bf16.mxu0 0
    %463 = vmatpush1.bf16.msra.mxu0 0
    %464 = vmatprep.subr.bf16.mxu0 0
    %465 = vmatpush1.bf16.msra.mxu0 0
    %466 = vmatprep.subr.bf16.mxu0 0
    %467 = vmatpush1.bf16.msra.mxu0 0
    %468 = vmatprep.subr.bf16.mxu0 0
    %469 = vmatpush1.bf16.msra.mxu0 0
    %470 = vmatprep.subr.bf16.mxu0 0
    %471 = vmatpush1.bf16.msra.mxu0 0
    %472 = vmatprep.mubr.bf16.mxu0 0
    %473 = vmatmul.mubr.bf16.gmra.mrb[0].mxu0 %v208
    %v474 = vpop.f32.mrb[0].mxu0
    %v475 = vadd.f32 %v255, %v474
    %v476 = vpop.f32.mrb[0].mxu0
    %v477 = vpop.f32.mrb[0].mxu0
    %v478 = vadd.f32 %v255, %v477
    %v479 = vpop.f32.mrb[0].mxu0
    %480 = vmatprep.mubr.bf16.mxu0 0
    %481 = vmatmul.mubr.bf16.gmra.mrb[0].mxu0 %v209
    %v482 = vpop.f32.mrb[0].mxu0
    %v483 = vadd.f32 %v255, %v482
    %v484 = vpop.f32.mrb[0].mxu0
    %v485 = vpop.f32.mrb[0].mxu0
    %v486 = vadd.f32 %v255, %v485
    %v487 = vpop.f32.mrb[0].mxu0
    %488 = vdwg.mxu0
    %v489 = vmul.f32 %v422, %v424
    %v490 = vmul.f32 %v426, %v428
    %v491 = vmul.f32 %v432, %v434
    %v492 = vmul.f32 %v436, %v438
    %v493 = vpack.c.bf16 %v490, %v489
    %v494 = vpack.c.bf16 %v492, %v491
    %v511 = vunpack.c.l.b16 %v192
    %v512 = vunpack.c.l.b16 %v193
    %v513 = vunpack.c.l.b16 %v194
    %v514 = vunpack.c.l.b16 %v195
    %v515 = vunpack.c.l.b16 %v196
    %v516 = vunpack.c.l.b16 %v197
    %v517 = vunpack.c.l.b16 %v198
    %v518 = vunpack.c.l.b16 %v199
    %v519 = vunpack.c.l.b16 %v200
    %v520 = vunpack.c.l.b16 %v201
    %v521 = vunpack.c.l.b16 %v202
    %v522 = vunpack.c.l.b16 %v203
    %v523 = vunpack.c.l.b16 %v204
    %v524 = vunpack.c.l.b16 %v205
    %v525 = vunpack.c.l.b16 %v206
    %v526 = vunpack.c.l.b16 %v207
    %v527 = vpack.c.b16 %v512, %v511
    %v528 = vpack.c.b16 %v514, %v513
    %v529 = vpack.c.b16 %v516, %v515
    %v530 = vpack.c.b16 %v518, %v517
    %v531 = vpack.c.b16 %v520, %v519
    %v532 = vpack.c.b16 %v522, %v521
    %v533 = vpack.c.b16 %v524, %v523
    %v534 = vpack.c.b16 %v526, %v525
    %543 = vmatprep.subr.bf16.mxu0 0
    %544 = vmatpush1.bf16.msra.mxu0 %v527
    %545 = vmatprep.subr.bf16.mxu0 0
    %546 = vmatpush1.bf16.msra.mxu0 %v528
    %547 = vmatprep.subr.bf16.mxu0 0
    %548 = vmatpush1.bf16.msra.mxu0 %v529
    %549 = vmatprep.subr.bf16.mxu0 0
    %550 = vmatpush1.bf16.msra.mxu0 %v530
    %551 = vmatprep.subr.bf16.mxu0 0
    %552 = vmatpush1.bf16.msra.mxu0 %v531
    %553 = vmatprep.subr.bf16.mxu0 0
    %554 = vmatpush1.bf16.msra.mxu0 %v532
    %555 = vmatprep.subr.bf16.mxu0 0
    %556 = vmatpush1.bf16.msra.mxu0 %v533
    %557 = vmatprep.subr.bf16.mxu0 0
    %558 = vmatpush1.bf16.msra.mxu0 %v534
    %559 = vmatprep.subr.bf16.mxu0 0
    %560 = vmatpush1.bf16.msra.mxu0 0
    %561 = vmatprep.subr.bf16.mxu0 0
    %562 = vmatpush1.bf16.msra.mxu0 0
    %563 = vmatprep.subr.bf16.mxu0 0
    %564 = vmatpush1.bf16.msra.mxu0 0
    %565 = vmatprep.subr.bf16.mxu0 0
    %566 = vmatpush1.bf16.msra.mxu0 0
    %567 = vmatprep.subr.bf16.mxu0 0
    %568 = vmatpush1.bf16.msra.mxu0 0
    %569 = vmatprep.subr.bf16.mxu0 0
    %570 = vmatpush1.bf16.msra.mxu0 0
    %571 = vmatprep.subr.bf16.mxu0 0
    %572 = vmatpush1.bf16.msra.mxu0 0
    %573 = vmatprep.subr.bf16.mxu0 0
    %574 = vmatpush1.bf16.msra.mxu0 0
    %575 = vmatprep.mubr.bf16.mxu0 0
    %576 = vmatmul.mubr.bf16.gmra.mrb[0].mxu0 %v493
    %v577 = vpop.f32.mrb[0].mxu0
    %v578 = vadd.f32 0.0, %v577
    %v579 = vpop.f32.mrb[0].mxu0
    %v580 = vpop.f32.mrb[0].mxu0
    %v581 = vadd.f32 0.0, %v580
    %v582 = vpop.f32.mrb[0].mxu0
    %583 = vmatprep.mubr.bf16.mxu0 0
    %584 = vmatmul.mubr.bf16.gmra.mrb[0].mxu0 %v494
    %v585 = vpop.f32.mrb[0].mxu0
    %v586 = vadd.f32 0.0, %v585
    %v587 = vpop.f32.mrb[0].mxu0
    %v588 = vpop.f32.mrb[0].mxu0
    %v589 = vadd.f32 0.0, %v588
    %v590 = vpop.f32.mrb[0].mxu0
    %591 = vdwg.mxu0
    %v592 = vmul.f32 %v422, %v434
    %v593 = vmul.f32 %v426, %v438
    %v594 = vmul.f32 %v432, %v424
    %v595 = vmul.f32 %v436, %v428
    %v596 = vpack.c.bf16 %v593, %v592
    %v597 = vpack.c.bf16 %v595, %v594
    %598 = vmatprep.subr.bf16.mxu0 0
    %599 = vmatpush1.bf16.msra.mxu0 %v527
    %600 = vmatprep.subr.bf16.mxu0 0
    %601 = vmatpush1.bf16.msra.mxu0 %v528
    %602 = vmatprep.subr.bf16.mxu0 0
    %603 = vmatpush1.bf16.msra.mxu0 %v529
    %604 = vmatprep.subr.bf16.mxu0 0
    %605 = vmatpush1.bf16.msra.mxu0 %v530
    %606 = vmatprep.subr.bf16.mxu0 0
    %607 = vmatpush1.bf16.msra.mxu0 %v531
    %608 = vmatprep.subr.bf16.mxu0 0
    %609 = vmatpush1.bf16.msra.mxu0 %v532
    %610 = vmatprep.subr.bf16.mxu0 0
    %611 = vmatpush1.bf16.msra.mxu0 %v533
    %612 = vmatprep.subr.bf16.mxu0 0
    %613 = vmatpush1.bf16.msra.mxu0 %v534
    %614 = vmatprep.subr.bf16.mxu0 0
    %615 = vmatpush1.bf16.msra.mxu0 0
    %616 = vmatprep.subr.bf16.mxu0 0
    %617 = vmatpush1.bf16.msra.mxu0 0
    %618 = vmatprep.subr.bf16.mxu0 0
    %619 = vmatpush1.bf16.msra.mxu0 0
    %620 = vmatprep.subr.bf16.mxu0 0
    %621 = vmatpush1.bf16.msra.mxu0 0
    %622 = vmatprep.subr.bf16.mxu0 0
    %623 = vmatpush1.bf16.msra.mxu0 0
    %624 = vmatprep.subr.bf16.mxu0 0
    %625 = vmatpush1.bf16.msra.mxu0 0
    %626 = vmatprep.subr.bf16.mxu0 0
    %627 = vmatpush1.bf16.msra.mxu0 0
    %628 = vmatprep.subr.bf16.mxu0 0
    %629 = vmatpush1.bf16.msra.mxu0 0
    %630 = vmatprep.mubr.bf16.mxu0 0
    %631 = vmatmul.mubr.bf16.gmra.mrb[0].mxu0 %v596
    %v632 = vpop.f32.mrb[0].mxu0
    %v633 = vadd.f32 0.0, %v632
    %v634 = vpop.f32.mrb[0].mxu0
    %v635 = vpop.f32.mrb[0].mxu0
    %v636 = vadd.f32 0.0, %v635
    %v637 = vpop.f32.mrb[0].mxu0
    %638 = vmatprep.mubr.bf16.mxu0 0
    %639 = vmatmul.mubr.bf16.gmra.mrb[0].mxu0 %v597
    %v640 = vpop.f32.mrb[0].mxu0
    %v641 = vadd.f32 0.0, %v640
    %v642 = vpop.f32.mrb[0].mxu0
    %v643 = vpop.f32.mrb[0].mxu0
    %v644 = vadd.f32 0.0, %v643
    %v645 = vpop.f32.mrb[0].mxu0
    %646 = vdwg.mxu0
    %v647 = vmax.f32 %v578, %v633
    %v648 = vmax.f32 %v581, %v636
    %v649 = vmax.f32 %v586, %v641
    %v650 = vmax.f32 %v589, %v644
    %v651 = vsub.f32 %v578, %v647
    %v652 = vsub.f32 %v581, %v648
    %v653 = vsub.f32 %v586, %v649
    %v654 = vsub.f32 %v589, %v650
    %v655 = vmul.f32 %v651, 1.442695
    %v656 = vpow.pop %v655
    %v657 = vmul.f32 %v652, 1.442695
    %v658 = vpow.pop %v657
    %v659 = vmul.f32 %v653, 1.442695
    %v660 = vpow.pop %v659
    %v661 = vmul.f32 %v654, 1.442695
    %v662 = vpow.pop %v661
    %v663 = vsub.f32 %v633, %v647
    %v664 = vsub.f32 %v636, %v648
    %v665 = vsub.f32 %v641, %v649
    %v666 = vsub.f32 %v644, %v650
    %v667 = vmul.f32 %v663, 1.442695
    %v668 = vpow.pop %v667
    %v669 = vmul.f32 %v664, 1.442695
    %v670 = vpow.pop %v669
    %v671 = vmul.f32 %v665, 1.442695
    %v672 = vpow.pop %v671
    %v673 = vmul.f32 %v666, 1.442695
    %v674 = vpow.pop %v673
    %v675 = vadd.f32 %v656, %v668
    %v676 = vadd.f32 %v658, %v670
    %v677 = vadd.f32 %v660, %v672
    %v678 = vadd.f32 %v662, %v674
    %v679 = vmul.f32 %v656, %v475
    %v680 = vmul.f32 %v658, %v478
    %v681 = vmul.f32 %v660, %v483
    %v682 = vmul.f32 %v662, %v486
    %v683 = vmul.f32 %v668, %v483
    %v684 = vmul.f32 %v670, %v486
    %v685 = vmul.f32 %v672, %v475
    %v686 = vmul.f32 %v674, %v478
    %v687 = vadd.f32 %v679, %v683
    %v688 = vadd.f32 %v680, %v684
    %v689 = vadd.f32 %v681, %v685
    %v690 = vadd.f32 %v682, %v686
    %v691 = vrcp.pop %v675
    %v692 = vrcp.pop %v676
    %v693 = vrcp.pop %v677
    %v694 = vrcp.pop %v678
    %v695 = vmul.f32 %v687, %v691
    %v696 = vmul.f32 %v688, %v692
    %v697 = vmul.f32 %v689, %v693
    %v698 = vmul.f32 %v690, %v694
    %v699 = vpack.c.bf16 %v696, %v695
    %v700 = vpack.c.bf16 %v698, %v697
    %v701 = vld [vmem:[#allocation4] sm:$0xf]
    %v702 = vld [vmem:[#allocation4 + $0x4] sm:$0xf]
    %v703 = vld [vmem:[#allocation4 + $0x8] sm:$0xf]
    %v704 = vld [vmem:[#allocation4 + $0xc] sm:$0xf]
    %v705 = vld [vmem:[#allocation4 + $0x10] sm:$0xf]
    %v706 = vld [vmem:[#allocation4 + $0x14] sm:$0xf]
    %v707 = vld [vmem:[#allocation4 + $0x18] sm:$0xf]
    %v708 = vld [vmem:[#allocation4 + $0x1c] sm:$0xf]
    %v709 = vld [vmem:[#allocation4 + $0x20] sm:$0xf]
    %v710 = vld [vmem:[#allocation4 + $0x24] sm:$0xf]
    %v711 = vld [vmem:[#allocation4 + $0x28] sm:$0xf]
    %v712 = vld [vmem:[#allocation4 + $0x2c] sm:$0xf]
    %v713 = vld [vmem:[#allocation4 + $0x30] sm:$0xf]
    %v714 = vld [vmem:[#allocation4 + $0x34] sm:$0xf]
    %v715 = vld [vmem:[#allocation4 + $0x38] sm:$0xf]
    %v716 = vld [vmem:[#allocation4 + $0x3c] sm:$0xf]
    %v717 = vld [vmem:[%s5] sm:$0x1]
    %v719 = vlaneseq
    %v720 = vshrl.u32 %v719, 7
    %v721 = vsub.s32 0, %v720
    %v722 = vrot.slane %v717, %v721
    %v740 = vunpack.c.l.b16 %v701
    %v741 = vunpack.c.l.b16 %v702
    %v742 = vunpack.c.l.b16 %v703
    %v743 = vunpack.c.l.b16 %v704
    %v744 = vunpack.c.l.b16 %v705
    %v745 = vunpack.c.l.b16 %v706
    %v746 = vunpack.c.l.b16 %v707
    %v747 = vunpack.c.l.b16 %v708
    %v748 = vunpack.c.l.b16 %v709
    %v749 = vunpack.c.l.b16 %v710
    %v750 = vunpack.c.l.b16 %v711
    %v751 = vunpack.c.l.b16 %v712
    %v752 = vunpack.c.l.b16 %v713
    %v753 = vunpack.c.l.b16 %v714
    %v754 = vunpack.c.l.b16 %v715
    %v755 = vunpack.c.l.b16 %v716
    %v756 = vpack.c.b16 %v741, %v740
    %v757 = vpack.c.b16 %v743, %v742
    %v758 = vpack.c.b16 %v745, %v744
    %v759 = vpack.c.b16 %v747, %v746
    %v760 = vpack.c.b16 %v749, %v748
    %v761 = vpack.c.b16 %v751, %v750
    %v762 = vpack.c.b16 %v753, %v752
    %v763 = vpack.c.b16 %v755, %v754
    %772 = vmatprep.subr.bf16.mxu0 0
    %773 = vmatpush1.bf16.msra.mxu0 %v756
    %774 = vmatprep.subr.bf16.mxu0 0
    %775 = vmatpush1.bf16.msra.mxu0 %v757
    %776 = vmatprep.subr.bf16.mxu0 0
    %777 = vmatpush1.bf16.msra.mxu0 %v758
    %778 = vmatprep.subr.bf16.mxu0 0
    %779 = vmatpush1.bf16.msra.mxu0 %v759
    %780 = vmatprep.subr.bf16.mxu0 0
    %781 = vmatpush1.bf16.msra.mxu0 %v760
    %782 = vmatprep.subr.bf16.mxu0 0
    %783 = vmatpush1.bf16.msra.mxu0 %v761
    %784 = vmatprep.subr.bf16.mxu0 0
    %785 = vmatpush1.bf16.msra.mxu0 %v762
    %786 = vmatprep.subr.bf16.mxu0 0
    %787 = vmatpush1.bf16.msra.mxu0 %v763
    %788 = vmatprep.subr.bf16.mxu0 0
    %789 = vmatpush1.bf16.msra.mxu0 0
    %790 = vmatprep.subr.bf16.mxu0 0
    %791 = vmatpush1.bf16.msra.mxu0 0
    %792 = vmatprep.subr.bf16.mxu0 0
    %793 = vmatpush1.bf16.msra.mxu0 0
    %794 = vmatprep.subr.bf16.mxu0 0
    %795 = vmatpush1.bf16.msra.mxu0 0
    %796 = vmatprep.subr.bf16.mxu0 0
    %797 = vmatpush1.bf16.msra.mxu0 0
    %798 = vmatprep.subr.bf16.mxu0 0
    %799 = vmatpush1.bf16.msra.mxu0 0
    %800 = vmatprep.subr.bf16.mxu0 0
    %801 = vmatpush1.bf16.msra.mxu0 0
    %802 = vmatprep.subr.bf16.mxu0 0
    %803 = vmatpush1.bf16.msra.mxu0 0
    %804 = vmatprep.mubr.bf16.mxu0 0
    %805 = vmatmul.mubr.bf16.gmra.mrb[0].mxu0 %v699
    %v806 = vpop.f32.mrb[0].mxu0
    %v807 = vadd.f32 %v722, %v806
    %v808 = vpop.f32.mrb[0].mxu0
    %v809 = vpop.f32.mrb[0].mxu0
    %v810 = vadd.f32 %v722, %v809
    %v811 = vpop.f32.mrb[0].mxu0
    %812 = vmatprep.mubr.bf16.mxu0 0
    %813 = vmatmul.mubr.bf16.gmra.mrb[0].mxu0 %v700
    %v814 = vpop.f32.mrb[0].mxu0
    %v815 = vadd.f32 %v722, %v814
    %v816 = vpop.f32.mrb[0].mxu0
    %v817 = vpop.f32.mrb[0].mxu0
    %v818 = vadd.f32 %v722, %v817
    %v819 = vpop.f32.mrb[0].mxu0
    %820 = vdwg.mxu0
    %v821 = vadd.f32 %v188, %v807
    %v822 = vadd.f32 %v189, %v810
    %v823 = vadd.f32 %v190, %v815
    %v824 = vadd.f32 %v191, %v818
    %v825 = vld [vmem:[%s6] sm:$0x1]
    %v826 = vld [vmem:[%s7] sm:$0x1]
    %827 = vadd.xlane.f32.xlu0 %v821
    %v828 = vpop.xlane.xlu0 %827
    %829 = vadd.xlane.f32.xlu0 %v822
    %v830 = vpop.xlane.xlu0 %829
    %831 = vadd.xlane.f32.xlu0 %v823
    %v832 = vpop.xlane.xlu0 %831
    %833 = vadd.xlane.f32.xlu0 %v824
    %v834 = vpop.xlane.xlu0 %833
    %v835 = vrcp.pop 128.0
    %v836 = vmul.f32 %v828, %v835
    %v837 = vmul.f32 %v830, %v835
    %v838 = vmul.f32 %v832, %v835
    %v839 = vmul.f32 %v834, %v835
    %v840 = vsub.f32 %v821, %v836
    %v841 = vsub.f32 %v822, %v837
    %v842 = vsub.f32 %v823, %v838
    %v843 = vsub.f32 %v824, %v839
    %v844 = vmul.f32 %v840, %v840
    %v845 = vmul.f32 %v841, %v841
    %v846 = vmul.f32 %v842, %v842
    %v847 = vmul.f32 %v843, %v843
    %848 = vadd.xlane.f32.xlu0 %v844
    %v849 = vpop.xlane.xlu0 %848
    %850 = vadd.xlane.f32.xlu0 %v845
    %v851 = vpop.xlane.xlu0 %850
    %852 = vadd.xlane.f32.xlu0 %v846
    %v853 = vpop.xlane.xlu0 %852
    %854 = vadd.xlane.f32.xlu0 %v847
    %v855 = vpop.xlane.xlu0 %854
    %v856 = vmul.f32 %v849, %v835
    %v857 = vmul.f32 %v851, %v835
    %v858 = vmul.f32 %v853, %v835
    %v859 = vmul.f32 %v855, %v835
    %v860 = vadd.f32 %v856, 1e-05
    %v861 = vadd.f32 %v857, 1e-05
    %v862 = vadd.f32 %v858, 1e-05
    %v863 = vadd.f32 %v859, 1e-05
    %v864 = vrsqrt.pop %v860
    %v865 = vrsqrt.pop %v861
    %v866 = vrsqrt.pop %v862
    %v867 = vrsqrt.pop %v863
    %v868 = vmul.f32 %v840, %v864
    %v869 = vmul.f32 %v841, %v865
    %v870 = vmul.f32 %v842, %v866
    %v871 = vmul.f32 %v843, %v867
    %v873 = vlaneseq
    %v874 = vshrl.u32 %v873, 7
    %v875 = vsub.s32 0, %v874
    %v876 = vrot.slane %v825, %v875
    %v878 = vmul.f32 %v868, %v876
    %v879 = vmul.f32 %v869, %v876
    %v880 = vmul.f32 %v870, %v876
    %v881 = vmul.f32 %v871, %v876
    %v883 = vlaneseq
    %v884 = vshrl.u32 %v883, 7
    %v885 = vsub.s32 0, %v884
    %v886 = vrot.slane %v826, %v885
    %v888 = vadd.f32 %v878, %v886
    %v889 = vadd.f32 %v879, %v886
    %v890 = vadd.f32 %v880, %v886
    %v891 = vadd.f32 %v881, %v886
    %v892 = vpack.c.bf16 %v889, %v888
    %v893 = vpack.c.bf16 %v891, %v890
    %v894 = vld [vmem:[%s8] sm:$0xff]
    %v895 = vld [vmem:[%s8 + $0x8] sm:$0xff]
    %v896 = vld [vmem:[%s8 + $0x10] sm:$0xff]
    %v897 = vld [vmem:[%s8 + $0x18] sm:$0xff]
    %v898 = vld [vmem:[%s8 + $0x20] sm:$0xff]
    %v899 = vld [vmem:[%s8 + $0x28] sm:$0xff]
    %v900 = vld [vmem:[%s8 + $0x30] sm:$0xff]
    %v901 = vld [vmem:[%s8 + $0x38] sm:$0xff]
    %v902 = vld [vmem:[%s8 + $0x40] sm:$0xff]
    %v903 = vld [vmem:[%s8 + $0x48] sm:$0xff]
    %v904 = vld [vmem:[%s8 + $0x50] sm:$0xff]
    %v905 = vld [vmem:[%s8 + $0x58] sm:$0xff]
    %v906 = vld [vmem:[%s8 + $0x60] sm:$0xff]
    %v907 = vld [vmem:[%s8 + $0x68] sm:$0xff]
    %v908 = vld [vmem:[%s8 + $0x70] sm:$0xff]
    %v909 = vld [vmem:[%s8 + $0x78] sm:$0xff]
    %v910 = vld [vmem:[%s9] sm:$0x3]
    %v912 = vlaneseq
    %v913 = vshrl.u32 %v912, 7
    %v914 = vsub.s32 0, %v913
    %v915 = vrot.slane %v910, %v914
    %v916 = vlaneseq
    %v917 = vshrl.u32 %v916, 7
    %v918 = vsub.s32 1, %v917
    %v919 = vrot.slane %v910, %v918
    %v938 = vunpack.c.l.b16 %v894
    %v939 = vunpack.c.h.b16 %v894
    %v940 = vunpack.c.l.b16 %v895
    %v941 = vunpack.c.h.b16 %v895
    %v942 = vunpack.c.l.b16 %v896
    %v943 = vunpack.c.h.b16 %v896
    %v944 = vunpack.c.l.b16 %v897
    %v945 = vunpack.c.h.b16 %v897
    %v946 = vunpack.c.l.b16 %v898
    %v947 = vunpack.c.h.b16 %v898
    %v948 = vunpack.c.l.b16 %v899
    %v949 = vunpack.c.h.b16 %v899
    %v950 = vunpack.c.l.b16 %v900
    %v951 = vunpack.c.h.b16 %v900
    %v952 = vunpack.c.l.b16 %v901
    %v953 = vunpack.c.h.b16 %v901
    %v954 = vunpack.c.l.b16 %v902
    %v955 = vunpack.c.h.b16 %v902
    %v956 = vunpack.c.l.b16 %v903
    %v957 = vunpack.c.h.b16 %v903
    %v958 = vunpack.c.l.b16 %v904
    %v959 = vunpack.c.h.b16 %v904
    %v960 = vunpack.c.l.b16 %v905
    %v961 = vunpack.c.h.b16 %v905
    %v962 = vunpack.c.l.b16 %v906
    %v963 = vunpack.c.h.b16 %v906
    %v964 = vunpack.c.l.b16 %v907
    %v965 = vunpack.c.h.b16 %v907
    %v966 = vunpack.c.l.b16 %v908
    %v967 = vunpack.c.h.b16 %v908
    %v968 = vunpack.c.l.b16 %v909
    %v969 = vunpack.c.h.b16 %v909
    %v970 = vpack.c.b16 %v940, %v938
    %v971 = vpack.c.b16 %v941, %v939
    %v972 = vpack.c.b16 %v944, %v942
    %v973 = vpack.c.b16 %v945, %v943
    %v974 = vpack.c.b16 %v948, %v946
    %v975 = vpack.c.b16 %v949, %v947
    %v976 = vpack.c.b16 %v952, %v950
    %v977 = vpack.c.b16 %v953, %v951
    %v978 = vpack.c.b16 %v956, %v954
    %v979 = vpack.c.b16 %v957, %v955
    %v980 = vpack.c.b16 %v960, %v958
    %v981 = vpack.c.b16 %v961, %v959
    %v982 = vpack.c.b16 %v964, %v962
    %v983 = vpack.c.b16 %v965, %v963
    %v984 = vpack.c.b16 %v968, %v966
    %v985 = vpack.c.b16 %v969, %v967
    %1002 = vmatprep.subr.bf16.mxu0 %v971
    %1003 = vmatpush1.bf16.msra.mxu0 %v970
    %1004 = vmatprep.subr.bf16.mxu0 %v973
    %1005 = vmatpush1.bf16.msra.mxu0 %v972
    %1006 = vmatprep.subr.bf16.mxu0 %v975
    %1007 = vmatpush1.bf16.msra.mxu0 %v974
    %1008 = vmatprep.subr.bf16.mxu0 %v977
    %1009 = vmatpush1.bf16.msra.mxu0 %v976
    %1010 = vmatprep.subr.bf16.mxu0 %v979
    %1011 = vmatpush1.bf16.msra.mxu0 %v978
    %1012 = vmatprep.subr.bf16.mxu0 %v981
    %1013 = vmatpush1.bf16.msra.mxu0 %v980
    %1014 = vmatprep.subr.bf16.mxu0 %v983
    %1015 = vmatpush1.bf16.msra.mxu0 %v982
    %1016 = vmatprep.subr.bf16.mxu0 %v985
    %1017 = vmatpush1.bf16.msra.mxu0 %v984
    %1018 = vmatprep.subr.bf16.mxu0 0
    %1019 = vmatpush1.bf16.msra.mxu0 0
    %1020 = vmatprep.subr.bf16.mxu0 0
    %1021 = vmatpush1.bf16.msra.mxu0 0
    %1022 = vmatprep.subr.bf16.mxu0 0
    %1023 = vmatpush1.bf16.msra.mxu0 0
    %1024 = vmatprep.subr.bf16.mxu0 0
    %1025 = vmatpush1.bf16.msra.mxu0 0
    %1026 = vmatprep.subr.bf16.mxu0 0
    %1027 = vmatpush1.bf16.msra.mxu0 0
    %1028 = vmatprep.subr.bf16.mxu0 0
    %1029 = vmatpush1.bf16.msra.mxu0 0
    %1030 = vmatprep.subr.bf16.mxu0 0
    %1031 = vmatpush1.bf16.msra.mxu0 0
    %1032 = vmatprep.subr.bf16.mxu0 0
    %1033 = vmatpush1.bf16.msra.mxu0 0
    %1034 = vmatprep.mubr.bf16.mxu0 0
    %1035 = vmatmul.mubr.bf16.gmra.mrb[0].mxu0 %v892
    %v1036 = vpop.f32.mrb[0].mxu0
    %v1037 = vadd.f32 %v915, %v1036
    %v1038 = vpop.f32.mrb[0].mxu0
    %v1039 = vadd.f32 %v919, %v1038
    %v1040 = vpop.f32.mrb[0].mxu0
    %v1041 = vadd.f32 %v915, %v1040
    %v1042 = vpop.f32.mrb[0].mxu0
    %v1043 = vadd.f32 %v919, %v1042
    %1044 = vmatprep.mubr.bf16.mxu0 0
    %1045 = vmatmul.mubr.bf16.gmra.mrb[0].mxu0 %v893
    %v1046 = vpop.f32.mrb[0].mxu0
    %v1047 = vadd.f32 %v915, %v1046
    %v1048 = vpop.f32.mrb[0].mxu0
    %v1049 = vadd.f32 %v919, %v1048
    %v1050 = vpop.f32.mrb[0].mxu0
    %v1051 = vadd.f32 %v915, %v1050
    %v1052 = vpop.f32.mrb[0].mxu0
    %v1053 = vadd.f32 %v919, %v1052
    %1054 = vdwg.mxu0
    %v1055 = vmax.f32 %v1037, 0.0
    %v1056 = vmax.f32 %v1039, 0.0
    %v1057 = vmax.f32 %v1041, 0.0
    %v1058 = vmax.f32 %v1043, 0.0
    %v1059 = vmax.f32 %v1047, 0.0
    %v1060 = vmax.f32 %v1049, 0.0
    %v1061 = vmax.f32 %v1051, 0.0
    %v1062 = vmax.f32 %v1053, 0.0
    %v1063 = vpack.c.bf16 %v1057, %v1055
    %v1064 = vpack.c.bf16 %v1058, %v1056
    %v1065 = vpack.c.bf16 %v1061, %v1059
    %v1066 = vpack.c.bf16 %v1062, %v1060
    %v1067 = vld [vmem:[%s10] sm:$0xf]
    %v1068 = vld [vmem:[%s10 + $0x4] sm:$0xf]
    %v1069 = vld [vmem:[%s10 + $0x8] sm:$0xf]
    %v1070 = vld [vmem:[%s10 + $0xc] sm:$0xf]
    %v1071 = vld [vmem:[%s10 + $0x10] sm:$0xf]
    %v1072 = vld [vmem:[%s10 + $0x14] sm:$0xf]
    %v1073 = vld [vmem:[%s10 + $0x18] sm:$0xf]
    %v1074 = vld [vmem:[%s10 + $0x1c] sm:$0xf]
    %v1075 = vld [vmem:[%s10 + $0x20] sm:$0xf]
    %v1076 = vld [vmem:[%s10 + $0x24] sm:$0xf]
    %v1077 = vld [vmem:[%s10 + $0x28] sm:$0xf]
    %v1078 = vld [vmem:[%s10 + $0x2c] sm:$0xf]
    %v1079 = vld [vmem:[%s10 + $0x30] sm:$0xf]
    %v1080 = vld [vmem:[%s10 + $0x34] sm:$0xf]
    %v1081 = vld [vmem:[%s10 + $0x38] sm:$0xf]
    %v1082 = vld [vmem:[%s10 + $0x3c] sm:$0xf]
    %v1083 = vld [vmem:[%s10 + $0x40] sm:$0xf]
    %v1084 = vld [vmem:[%s10 + $0x44] sm:$0xf]
    %v1085 = vld [vmem:[%s10 + $0x48] sm:$0xf]
    %v1086 = vld [vmem:[%s10 + $0x4c] sm:$0xf]
    %v1087 = vld [vmem:[%s10 + $0x50] sm:$0xf]
    %v1088 = vld [vmem:[%s10 + $0x54] sm:$0xf]
    %v1089 = vld [vmem:[%s10 + $0x58] sm:$0xf]
    %v1090 = vld [vmem:[%s10 + $0x5c] sm:$0xf]
    %v1091 = vld [vmem:[%s10 + $0x60] sm:$0xf]
    %v1092 = vld [vmem:[%s10 + $0x64] sm:$0xf]
    %v1093 = vld [vmem:[%s10 + $0x68] sm:$0xf]
    %v1094 = vld [vmem:[%s10 + $0x6c] sm:$0xf]
    %v1095 = vld [vmem:[%s10 + $0x70] sm:$0xf]
    %v1096 = vld [vmem:[%s10 + $0x74] sm:$0xf]
    %v1097 = vld [vmem:[%s10 + $0x78] sm:$0xf]
    %v1098 = vld [vmem:[%s10 + $0x7c] sm:$0xf]
    %v1099 = vld [vmem:[%s11] sm:$0x1]
    %v1101 = vlaneseq
    %v1102 = vshrl.u32 %v1101, 7
    %v1103 = vsub.s32 0, %v1102
    %v1104 = vrot.slane %v1099, %v1103
    %v1138 = vunpack.c.l.b16 %v1067
    %v1139 = vunpack.c.l.b16 %v1068
    %v1140 = vunpack.c.l.b16 %v1069
    %v1141 = vunpack.c.l.b16 %v1070
    %v1142 = vunpack.c.l.b16 %v1071
    %v1143 = vunpack.c.l.b16 %v1072
    %v1144 = vunpack.c.l.b16 %v1073
    %v1145 = vunpack.c.l.b16 %v1074
    %v1146 = vunpack.c.l.b16 %v1075
    %v1147 = vunpack.c.l.b16 %v1076
    %v1148 = vunpack.c.l.b16 %v1077
    %v1149 = vunpack.c.l.b16 %v1078
    %v1150 = vunpack.c.l.b16 %v1079
    %v1151 = vunpack.c.l.b16 %v1080
    %v1152 = vunpack.c.l.b16 %v1081
    %v1153 = vunpack.c.l.b16 %v1082
    %v1154 = vunpack.c.l.b16 %v1083
    %v1155 = vunpack.c.l.b16 %v1084
    %v1156 = vunpack.c.l.b16 %v1085
    %v1157 = vunpack.c.l.b16 %v1086
    %v1158 = vunpack.c.l.b16 %v1087
    %v1159 = vunpack.c.l.b16 %v1088
    %v1160 = vunpack.c.l.b16 %v1089
    %v1161 = vunpack.c.l.b16 %v1090
    %v1162 = vunpack.c.l.b16 %v1091
    %v1163 = vunpack.c.l.b16 %v1092
    %v1164 = vunpack.c.l.b16 %v1093
    %v1165 = vunpack.c.l.b16 %v1094
    %v1166 = vunpack.c.l.b16 %v1095
    %v1167 = vunpack.c.l.b16 %v1096
    %v1168 = vunpack.c.l.b16 %v1097
    %v1169 = vunpack.c.l.b16 %v1098
    %v1170 = vpack.c.b16 %v1139, %v1138
    %v1171 = vpack.c.b16 %v1141, %v1140
    %v1172 = vpack.c.b16 %v1143, %v1142
    %v1173 = vpack.c.b16 %v1145, %v1144
    %v1174 = vpack.c.b16 %v1147, %v1146
    %v1175 = vpack.c.b16 %v1149, %v1148
    %v1176 = vpack.c.b16 %v1151, %v1150
    %v1177 = vpack.c.b16 %v1153, %v1152
    %v1178 = vpack.c.b16 %v1155, %v1154
    %v1179 = vpack.c.b16 %v1157, %v1156
    %v1180 = vpack.c.b16 %v1159, %v1158
    %v1181 = vpack.c.b16 %v1161, %v1160
    %v1182 = vpack.c.b16 %v1163, %v1162
    %v1183 = vpack.c.b16 %v1165, %v1164
    %v1184 = vpack.c.b16 %v1167, %v1166
    %v1185 = vpack.c.b16 %v1169, %v1168
    %1202 = vmatprep.subr.bf16.mxu0 0
    %1203 = vmatpush1.bf16.msra.mxu0 %v1170
    %1204 = vmatprep.subr.bf16.mxu0 0
    %1205 = vmatpush1.bf16.msra.mxu0 %v1171
    %1206 = vmatprep.subr.bf16.mxu0 0
    %1207 = vmatpush1.bf16.msra.mxu0 %v1172
    %1208 = vmatprep.subr.bf16.mxu0 0
    %1209 = vmatpush1.bf16.msra.mxu0 %v1173
    %1210 = vmatprep.subr.bf16.mxu0 0
    %1211 = vmatpush1.bf16.msra.mxu0 %v1174
    %1212 = vmatprep.subr.bf16.mxu0 0
    %1213 = vmatpush1.bf16.msra.mxu0 %v1175
    %1214 = vmatprep.subr.bf16.mxu0 0
    %1215 = vmatpush1.bf16.msra.mxu0 %v1176
    %1216 = vmatprep.subr.bf16.mxu0 0
    %1217 = vmatpush1.bf16.msra.mxu0 %v1177
    %1218 = vmatprep.subr.bf16.mxu0 0
    %1219 = vmatpush1.bf16.msra.mxu0 %v1178
    %1220 = vmatprep.subr.bf16.mxu0 0
    %1221 = vmatpush1.bf16.msra.mxu0 %v1179
    %1222 = vmatprep.subr.bf16.mxu0 0
    %1223 = vmatpush1.bf16.msra.mxu0 %v1180
    %1224 = vmatprep.subr.bf16.mxu0 0
    %1225 = vmatpush1.bf16.msra.mxu0 %v1181
    %1226 = vmatprep.subr.bf16.mxu0 0
    %1227 = vmatpush1.bf16.msra.mxu0 %v1182
    %1228 = vmatprep.subr.bf16.mxu0 0
    %1229 = vmatpush1.bf16.msra.mxu0 %v1183
    %1230 = vmatprep.subr.bf16.mxu0 0
    %1231 = vmatpush1.bf16.msra.mxu0 %v1184
    %1232 = vmatprep.subr.bf16.mxu0 0
    %1233 = vmatpush1.bf16.msra.mxu0 %v1185
    %1234 = vmatprep.mubr.bf16.mxu0 %v1064
    %1235 = vmatmul.mubr.bf16.gmra.mrb[0].mxu0 %v1063
    %v1236 = vpop.f32.mrb[0].mxu0
    %v1237 = vadd.f32 %v1104, %v1236
    %v1238 = vpop.f32.mrb[0].mxu0
    %v1239 = vpop.f32.mrb[0].mxu0
    %v1240 = vadd.f32 %v1104, %v1239
    %v1241 = vpop.f32.mrb[0].mxu0
    %1242 = vmatprep.mubr.bf16.mxu0 %v1066
    %1243 = vmatmul.mubr.bf16.gmra.mrb[0].mxu0 %v1065
    %v1244 = vpop.f32.mrb[0].mxu0
    %v1245 = vadd.f32 %v1104, %v1244
    %v1246 = vpop.f32.mrb[0].mxu0
    %v1247 = vpop.f32.mrb[0].mxu0
    %v1248 = vadd.f32 %v1104, %v1247
    %v1249 = vpop.f32.mrb[0].mxu0
    %1250 = vdwg.mxu0
    %v1251 = vadd.f32 %v888, %v1237
    %v1252 = vadd.f32 %v889, %v1240
    %v1253 = vadd.f32 %v890, %v1245
    %v1254 = vadd.f32 %v891, %v1248
    %v1255 = vld [vmem:[#allocation6] sm:$0x1]
    %v1256 = vld [vmem:[%s13] sm:$0x1]
    %1257 = vadd.xlane.f32.xlu0 %v1251
    %v1258 = vpop.xlane.xlu0 %1257
    %1259 = vadd.xlane.f32.xlu0 %v1252
    %v1260 = vpop.xlane.xlu0 %1259
    %1261 = vadd.xlane.f32.xlu0 %v1253
    %v1262 = vpop.xlane.xlu0 %1261
    %1263 = vadd.xlane.f32.xlu0 %v1254
    %v1264 = vpop.xlane.xlu0 %1263
    %v1265 = vmul.f32 %v1258, %v835
    %v1266 = vmul.f32 %v1260, %v835
    %v1267 = vmul.f32 %v1262, %v835
    %v1268 = vmul.f32 %v1264, %v835
    %v1269 = vsub.f32 %v1251, %v1265
    %v1270 = vsub.f32 %v1252, %v1266
    %v1271 = vsub.f32 %v1253, %v1267
    %v1272 = vsub.f32 %v1254, %v1268
    %v1273 = vmul.f32 %v1269, %v1269
    %v1274 = vmul.f32 %v1270, %v1270
    %v1275 = vmul.f32 %v1271, %v1271
    %v1276 = vmul.f32 %v1272, %v1272
    %1277 = vadd.xlane.f32.xlu0 %v1273
    %v1278 = vpop.xlane.xlu0 %1277
    %1279 = vadd.xlane.f32.xlu0 %v1274
    %v1280 = vpop.xlane.xlu0 %1279
    %1281 = vadd.xlane.f32.xlu0 %v1275
    %v1282 = vpop.xlane.xlu0 %1281
    %1283 = vadd.xlane.f32.xlu0 %v1276
    %v1284 = vpop.xlane.xlu0 %1283
    %v1285 = vmul.f32 %v1278, %v835
    %v1286 = vmul.f32 %v1280, %v835
    %v1287 = vmul.f32 %v1282, %v835
    %v1288 = vmul.f32 %v1284, %v835
    %v1289 = vadd.f32 %v1285, 1e-05
    %v1290 = vadd.f32 %v1286, 1e-05
    %v1291 = vadd.f32 %v1287, 1e-05
    %v1292 = vadd.f32 %v1288, 1e-05
    %v1293 = vrsqrt.pop %v1289
    %v1294 = vrsqrt.pop %v1290
    %v1295 = vrsqrt.pop %v1291
    %v1296 = vrsqrt.pop %v1292
    %v1297 = vmul.f32 %v1269, %v1293
    %v1298 = vmul.f32 %v1270, %v1294
    %v1299 = vmul.f32 %v1271, %v1295
    %v1300 = vmul.f32 %v1272, %v1296
    %v1302 = vlaneseq
    %v1303 = vshrl.u32 %v1302, 7
    %v1304 = vsub.s32 0, %v1303
    %v1305 = vrot.slane %v1255, %v1304
    %v1307 = vmul.f32 %v1297, %v1305
    %v1308 = vmul.f32 %v1298, %v1305
    %v1309 = vmul.f32 %v1299, %v1305
    %v1310 = vmul.f32 %v1300, %v1305
    %v1312 = vlaneseq
    %v1313 = vshrl.u32 %v1312, 7
    %v1314 = vsub.s32 0, %v1313
    %v1315 = vrot.slane %v1256, %v1314
    %v1317 = vadd.f32 %v1307, %v1315
    %v1318 = vadd.f32 %v1308, %v1315
    %v1319 = vadd.f32 %v1309, %v1315
    %v1320 = vadd.f32 %v1310, %v1315
    %v1321 = vpack.c.bf16 %v1318, %v1317
    %v1322 = vpack.c.bf16 %v1320, %v1319
    %s1323 = scalar_lea.vmem %s2, 192
    %v1324 = vld [vmem:[%s1323] sm:$0xff]
    %v1325 = vld [vmem:[%s1323 + $0x8] sm:$0xf]
    %v1326 = vld [vmem:[%s1323 + $0xc] sm:$0xff]
    %v1327 = vld [vmem:[%s1323 + $0x14] sm:$0xf]
    %v1328 = vld [vmem:[%s1323 + $0x18] sm:$0xff]
    %v1329 = vld [vmem:[%s1323 + $0x20] sm:$0xf]
    %v1330 = vld [vmem:[%s1323 + $0x24] sm:$0xff]
    %v1331 = vld [vmem:[%s1323 + $0x2c] sm:$0xf]
    %v1332 = vld [vmem:[%s1323 + $0x30] sm:$0xff]
    %v1333 = vld [vmem:[%s1323 + $0x38] sm:$0xf]
    %v1334 = vld [vmem:[%s1323 + $0x3c] sm:$0xff]
    %v1335 = vld [vmem:[%s1323 + $0x44] sm:$0xf]
    %v1336 = vld [vmem:[%s1323 + $0x48] sm:$0xff]
    %v1337 = vld [vmem:[%s1323 + $0x50] sm:$0xf]
    %v1338 = vld [vmem:[%s1323 + $0x54] sm:$0xff]
    %v1339 = vld [vmem:[%s1323 + $0x5c] sm:$0xf]
    %v1340 = vld [vmem:[%s1323 + $0x60] sm:$0xff]
    %v1341 = vld [vmem:[%s1323 + $0x68] sm:$0xf]
    %v1342 = vld [vmem:[%s1323 + $0x6c] sm:$0xff]
    %v1343 = vld [vmem:[%s1323 + $0x74] sm:$0xf]
    %v1344 = vld [vmem:[%s1323 + $0x78] sm:$0xff]
    %v1345 = vld [vmem:[%s1323 + $0x80] sm:$0xf]
    %v1346 = vld [vmem:[%s1323 + $0x84] sm:$0xff]
    %v1347 = vld [vmem:[%s1323 + $0x8c] sm:$0xf]
    %v1348 = vld [vmem:[%s1323 + $0x90] sm:$0xff]
    %v1349 = vld [vmem:[%s1323 + $0x98] sm:$0xf]
    %v1350 = vld [vmem:[%s1323 + $0x9c] sm:$0xff]
    %v1351 = vld [vmem:[%s1323 + $0xa4] sm:$0xf]
    %v1352 = vld [vmem:[%s1323 + $0xa8] sm:$0xff]
    %v1353 = vld [vmem:[%s1323 + $0xb0] sm:$0xf]
    %v1354 = vld [vmem:[%s1323 + $0xb4] sm:$0xff]
    %v1355 = vld [vmem:[%s1323 + $0xbc] sm:$0xf]
    %s1356 = scalar_lea.vmem %s3, 3
    %v1357 = vld [vmem:[%s1356] sm:$0x7]
    %v1359 = vlaneseq
    %v1360 = vshrl.u32 %v1359, 7
    %v1361 = vsub.s32 0, %v1360
    %v1362 = vrot.slane %v1357, %v1361
    %v1363 = vlaneseq
    %v1364 = vshrl.u32 %v1363, 7
    %v1365 = vsub.s32 1, %v1364
    %v1366 = vrot.slane %v1357, %v1365
    %v1367 = vlaneseq
    %v1368 = vshrl.u32 %v1367, 7
    %v1369 = vsub.s32 2, %v1368
    %v1370 = vrot.slane %v1357, %v1369
    %v1406 = vunpack.c.l.b16 %v1324
    %v1407 = vunpack.c.h.b16 %v1324
    %v1408 = vunpack.c.l.b16 %v1325
    %v1409 = vunpack.c.l.b16 %v1326
    %v1410 = vunpack.c.h.b16 %v1326
    %v1411 = vunpack.c.l.b16 %v1327
    %v1412 = vunpack.c.l.b16 %v1328
    %v1413 = vunpack.c.h.b16 %v1328
    %v1414 = vunpack.c.l.b16 %v1329
    %v1415 = vunpack.c.l.b16 %v1330
    %v1416 = vunpack.c.h.b16 %v1330
    %v1417 = vunpack.c.l.b16 %v1331
    %v1418 = vunpack.c.l.b16 %v1332
    %v1419 = vunpack.c.h.b16 %v1332
    %v1420 = vunpack.c.l.b16 %v1333
    %v1421 = vunpack.c.l.b16 %v1334
    %v1422 = vunpack.c.h.b16 %v1334
    %v1423 = vunpack.c.l.b16 %v1335
    %v1424 = vunpack.c.l.b16 %v1336
    %v1425 = vunpack.c.h.b16 %v1336
    %v1426 = vunpack.c.l.b16 %v1337
    %v1427 = vunpack.c.l.b16 %v1338
    %v1428 = vunpack.c.h.b16 %v1338
    %v1429 = vunpack.c.l.b16 %v1339
    %v1430 = vunpack.c.l.b16 %v1340
    %v1431 = vunpack.c.h.b16 %v1340
    %v1432 = vunpack.c.l.b16 %v1341
    %v1433 = vunpack.c.l.b16 %v1342
    %v1434 = vunpack.c.h.b16 %v1342
    %v1435 = vunpack.c.l.b16 %v1343
    %v1436 = vunpack.c.l.b16 %v1344
    %v1437 = vunpack.c.h.b16 %v1344
    %v1438 = vunpack.c.l.b16 %v1345
    %v1439 = vunpack.c.l.b16 %v1346
    %v1440 = vunpack.c.h.b16 %v1346
    %v1441 = vunpack.c.l.b16 %v1347
    %v1442 = vunpack.c.l.b16 %v1348
    %v1443 = vunpack.c.h.b16 %v1348
    %v1444 = vunpack.c.l.b16 %v1349
    %v1445 = vunpack.c.l.b16 %v1350
    %v1446 = vunpack.c.h.b16 %v1350
    %v1447 = vunpack.c.l.b16 %v1351
    %v1448 = vunpack.c.l.b16 %v1352
    %v1449 = vunpack.c.h.b16 %v1352
    %v1450 = vunpack.c.l.b16 %v1353
    %v1451 = vunpack.c.l.b16 %v1354
    %v1452 = vunpack.c.h.b16 %v1354
    %v1453 = vunpack.c.l.b16 %v1355
    %v1454 = vpack.c.b16 %v1409, %v1406
    %v1455 = vpack.c.b16 %v1410, %v1407
    %v1456 = vpack.c.b16 %v1411, %v1408
    %v1457 = vpack.c.b16 %v1415, %v1412
    %v1458 = vpack.c.b16 %v1416, %v1413
    %v1459 = vpack.c.b16 %v1417, %v1414
    %v1460 = vpack.c.b16 %v1421, %v1418
    %v1461 = vpack.c.b16 %v1422, %v1419
    %v1462 = vpack.c.b16 %v1423, %v1420
    %v1463 = vpack.c.b16 %v1427, %v1424
    %v1464 = vpack.c.b16 %v1428, %v1425
    %v1465 = vpack.c.b16 %v1429, %v1426
    %v1466 = vpack.c.b16 %v1433, %v1430
    %v1467 = vpack.c.b16 %v1434, %v1431
    %v1468 = vpack.c.b16 %v1435, %v1432
    %v1469 = vpack.c.b16 %v1439, %v1436
    %v1470 = vpack.c.b16 %v1440, %v1437
    %v1471 = vpack.c.b16 %v1441, %v1438
    %v1472 = vpack.c.b16 %v1445, %v1442
    %v1473 = vpack.c.b16 %v1446, %v1443
    %v1474 = vpack.c.b16 %v1447, %v1444
    %v1475 = vpack.c.b16 %v1451, %v1448
    %v1476 = vpack.c.b16 %v1452, %v1449
    %v1477 = vpack.c.b16 %v1453, %v1450
    %1502 = vmatprep.subr.bf16.mxu0 %v1455
    %1503 = vmatpush1.bf16.msra.mxu0 %v1454
    %1504 = vmatprep.subr.bf16.mxu0 %v1458
    %1505 = vmatpush1.bf16.msra.mxu0 %v1457
    %1506 = vmatprep.subr.bf16.mxu0 %v1461
    %1507 = vmatpush1.bf16.msra.mxu0 %v1460
    %1508 = vmatprep.subr.bf16.mxu0 %v1464
    %1509 = vmatpush1.bf16.msra.mxu0 %v1463
    %1510 = vmatprep.subr.bf16.mxu0 %v1467
    %1511 = vmatpush1.bf16.msra.mxu0 %v1466
    %1512 = vmatprep.subr.bf16.mxu0 %v1470
    %1513 = vmatpush1.bf16.msra.mxu0 %v1469
    %1514 = vmatprep.subr.bf16.mxu0 %v1473
    %1515 = vmatpush1.bf16.msra.mxu0 %v1472
    %1516 = vmatprep.subr.bf16.mxu0 %v1476
    %1517 = vmatpush1.bf16.msra.mxu0 %v1475
    %1518 = vmatprep.subr.bf16.mxu0 0
    %1519 = vmatpush1.bf16.msra.mxu0 0
    %1520 = vmatprep.subr.bf16.mxu0 0
    %1521 = vmatpush1.bf16.msra.mxu0 0
    %1522 = vmatprep.subr.bf16.mxu0 0
    %1523 = vmatpush1.bf16.msra.mxu0 0
    %1524 = vmatprep.subr.bf16.mxu0 0
    %1525 = vmatpush1.bf16.msra.mxu0 0
    %1526 = vmatprep.subr.bf16.mxu0 0
    %1527 = vmatpush1.bf16.msra.mxu0 0
    %1528 = vmatprep.subr.bf16.mxu0 0
    %1529 = vmatpush1.bf16.msra.mxu0 0
    %1530 = vmatprep.subr.bf16.mxu0 0
    %1531 = vmatpush1.bf16.msra.mxu0 0
    %1532 = vmatprep.subr.bf16.mxu0 0
    %1533 = vmatpush1.bf16.msra.mxu0 0
    %1534 = vmatprep.mubr.bf16.mxu0 0
    %1535 = vmatmul.mubr.bf16.gmra.mrb[0].mxu0 %v1321
    %v1536 = vpop.f32.mrb[0].mxu0
    %v1537 = vadd.f32 %v1362, %v1536
    %v1538 = vpop.f32.mrb[0].mxu0
    %v1539 = vadd.f32 %v1366, %v1538
    %v1540 = vpop.f32.mrb[0].mxu0
    %v1541 = vadd.f32 %v1362, %v1540
    %v1542 = vpop.f32.mrb[0].mxu0
    %v1543 = vadd.f32 %v1366, %v1542
    %1544 = vmatprep.mubr.bf16.mxu0 0
    %1545 = vmatmul.mubr.bf16.gmra.mrb[0].mxu0 %v1322
    %v1546 = vpop.f32.mrb[0].mxu0
    %v1547 = vadd.f32 %v1362, %v1546
    %v1548 = vpop.f32.mrb[0].mxu0
    %v1549 = vadd.f32 %v1366, %v1548
    %v1550 = vpop.f32.mrb[0].mxu0
    %v1551 = vadd.f32 %v1362, %v1550
    %v1552 = vpop.f32.mrb[0].mxu0
    %v1553 = vadd.f32 %v1366, %v1552
    %1554 = vdwg.mxu0
    %1555 = vmatprep.subr.bf16.mxu0 0
    %1556 = vmatpush1.bf16.msra.mxu0 %v1456
    %1557 = vmatprep.subr.bf16.mxu0 0
    %1558 = vmatpush1.bf16.msra.mxu0 %v1459
    %1559 = vmatprep.subr.bf16.mxu0 0
    %1560 = vmatpush1.bf16.msra.mxu0 %v1462
    %1561 = vmatprep.subr.bf16.mxu0 0
    %1562 = vmatpush1.bf16.msra.mxu0 %v1465
    %1563 = vmatprep.subr.bf16.mxu0 0
    %1564 = vmatpush1.bf16.msra.mxu0 %v1468
    %1565 = vmatprep.subr.bf16.mxu0 0
    %1566 = vmatpush1.bf16.msra.mxu0 %v1471
    %1567 = vmatprep.subr.bf16.mxu0 0
    %1568 = vmatpush1.bf16.msra.mxu0 %v1474
    %1569 = vmatprep.subr.bf16.mxu0 0
    %1570 = vmatpush1.bf16.msra.mxu0 %v1477
    %1571 = vmatprep.subr.bf16.mxu0 0
    %1572 = vmatpush1.bf16.msra.mxu0 0
    %1573 = vmatprep.subr.bf16.mxu0 0
    %1574 = vmatpush1.bf16.msra.mxu0 0
    %1575 = vmatprep.subr.bf16.mxu0 0
    %1576 = vmatpush1.bf16.msra.mxu0 0
    %1577 = vmatprep.subr.bf16.mxu0 0
    %1578 = vmatpush1.bf16.msra.mxu0 0
    %1579 = vmatprep.subr.bf16.mxu0 0
    %1580 = vmatpush1.bf16.msra.mxu0 0
    %1581 = vmatprep.subr.bf16.mxu0 0
    %1582 = vmatpush1.bf16.msra.mxu0 0
    %1583 = vmatprep.subr.bf16.mxu0 0
    %1584 = vmatpush1.bf16.msra.mxu0 0
    %1585 = vmatprep.subr.bf16.mxu0 0
    %1586 = vmatpush1.bf16.msra.mxu0 0
    %1587 = vmatprep.mubr.bf16.mxu0 0
    %1588 = vmatmul.mubr.bf16.gmra.mrb[0].mxu0 %v1321
    %v1589 = vpop.f32.mrb[0].mxu0
    %v1590 = vadd.f32 %v1370, %v1589
    %v1591 = vpop.f32.mrb[0].mxu0
    %v1592 = vpop.f32.mrb[0].mxu0
    %v1593 = vadd.f32 %v1370, %v1592
    %v1594 = vpop.f32.mrb[0].mxu0
    %1595 = vmatprep.mubr.bf16.mxu0 0
    %1596 = vmatmul.mubr.bf16.gmra.mrb[0].mxu0 %v1322
    %v1597 = vpop.f32.mrb[0].mxu0
    %v1598 = vadd.f32 %v1370, %v1597
    %v1599 = vpop.f32.mrb[0].mxu0
    %v1600 = vpop.f32.mrb[0].mxu0
    %v1601 = vadd.f32 %v1370, %v1600
    %v1602 = vpop.f32.mrb[0].mxu0
    %1603 = vdwg.mxu0
    %v1604 = vmul.f32 %v1537, %v1539
    %v1605 = vmul.f32 %v1541, %v1543
    %v1606 = vmul.f32 %v1547, %v1549
    %v1607 = vmul.f32 %v1551, %v1553
    %v1608 = vpack.c.bf16 %v1605, %v1604
    %v1609 = vpack.c.bf16 %v1607, %v1606
    %1610 = vmatprep.subr.bf16.mxu0 0
    %1611 = vmatpush1.bf16.msra.mxu0 %v527
    %1612 = vmatprep.subr.bf16.mxu0 0
    %1613 = vmatpush1.bf16.msra.mxu0 %v528
    %1614 = vmatprep.subr.bf16.mxu0 0
    %1615 = vmatpush1.bf16.msra.mxu0 %v529
    %1616 = vmatprep.subr.bf16.mxu0 0
    %1617 = vmatpush1.bf16.msra.mxu0 %v530
    %1618 = vmatprep.subr.bf16.mxu0 0
    %1619 = vmatpush1.bf16.msra.mxu0 %v531
    %1620 = vmatprep.subr.bf16.mxu0 0
    %1621 = vmatpush1.bf16.msra.mxu0 %v532
    %1622 = vmatprep.subr.bf16.mxu0 0
    %1623 = vmatpush1.bf16.msra.mxu0 %v533
    %1624 = vmatprep.subr.bf16.mxu0 0
    %1625 = vmatpush1.bf16.msra.mxu0 %v534
    %1626 = vmatprep.subr.bf16.mxu0 0
    %1627 = vmatpush1.bf16.msra.mxu0 0
    %1628 = vmatprep.subr.bf16.mxu0 0
    %1629 = vmatpush1.bf16.msra.mxu0 0
    %1630 = vmatprep.subr.bf16.mxu0 0
    %1631 = vmatpush1.bf16.msra.mxu0 0
    %1632 = vmatprep.subr.bf16.mxu0 0
    %1633 = vmatpush1.bf16.msra.mxu0 0
    %1634 = vmatprep.subr.bf16.mxu0 0
    %1635 = vmatpush1.bf16.msra.mxu0 0
    %1636 = vmatprep.subr.bf16.mxu0 0
    %1637 = vmatpush1.bf16.msra.mxu0 0
    %1638 = vmatprep.subr.bf16.mxu0 0
    %1639 = vmatpush1.bf16.msra.mxu0 0
    %1640 = vmatprep.subr.bf16.mxu0 0
    %1641 = vmatpush1.bf16.msra.mxu0 0
    %1642 = vmatprep.mubr.bf16.mxu0 0
    %1643 = vmatmul.mubr.bf16.gmra.mrb[0].mxu0 %v1608
    %v1644 = vpop.f32.mrb[0].mxu0
    %v1645 = vadd.f32 0.0, %v1644
    %v1646 = vpop.f32.mrb[0].mxu0
    %v1647 = vpop.f32.mrb[0].mxu0
    %v1648 = vadd.f32 0.0, %v1647
    %v1649 = vpop.f32.mrb[0].mxu0
    %1650 = vmatprep.mubr.bf16.mxu0 0
    %1651 = vmatmul.mubr.bf16.gmra.mrb[0].mxu0 %v1609
    %v1652 = vpop.f32.mrb[0].mxu0
    %v1653 = vadd.f32 0.0, %v1652
    %v1654 = vpop.f32.mrb[0].mxu0
    %v1655 = vpop.f32.mrb[0].mxu0
    %v1656 = vadd.f32 0.0, %v1655
    %v1657 = vpop.f32.mrb[0].mxu0
    %1658 = vdwg.mxu0
    %v1659 = vmul.f32 %v1537, %v1549
    %v1660 = vmul.f32 %v1541, %v1553
    %v1661 = vmul.f32 %v1547, %v1539
    %v1662 = vmul.f32 %v1551, %v1543
    %v1663 = vpack.c.bf16 %v1660, %v1659
    %v1664 = vpack.c.bf16 %v1662, %v1661
    %1665 = vmatprep.subr.bf16.mxu0 0
    %1666 = vmatpush1.bf16.msra.mxu0 %v527
    %1667 = vmatprep.subr.bf16.mxu0 0
    %1668 = vmatpush1.bf16.msra.mxu0 %v528
    %1669 = vmatprep.subr.bf16.mxu0 0
    %1670 = vmatpush1.bf16.msra.mxu0 %v529
    %1671 = vmatprep.subr.bf16.mxu0 0
    %1672 = vmatpush1.bf16.msra.mxu0 %v530
    %1673 = vmatprep.subr.bf16.mxu0 0
    %1674 = vmatpush1.bf16.msra.mxu0 %v531
    %1675 = vmatprep.subr.bf16.mxu0 0
    %1676 = vmatpush1.bf16.msra.mxu0 %v532
    %1677 = vmatprep.subr.bf16.mxu0 0
    %1678 = vmatpush1.bf16.msra.mxu0 %v533
    %1679 = vmatprep.subr.bf16.mxu0 0
    %1680 = vmatpush1.bf16.msra.mxu0 %v534
    %1681 = vmatprep.subr.bf16.mxu0 0
    %1682 = vmatpush1.bf16.msra.mxu0 0
    %1683 = vmatprep.subr.bf16.mxu0 0
    %1684 = vmatpush1.bf16.msra.mxu0 0
    %1685 = vmatprep.subr.bf16.mxu0 0
    %1686 = vmatpush1.bf16.msra.mxu0 0
    %1687 = vmatprep.subr.bf16.mxu0 0
    %1688 = vmatpush1.bf16.msra.mxu0 0
    %1689 = vmatprep.subr.bf16.mxu0 0
    %1690 = vmatpush1.bf16.msra.mxu0 0
    %1691 = vmatprep.subr.bf16.mxu0 0
    %1692 = vmatpush1.bf16.msra.mxu0 0
    %1693 = vmatprep.subr.bf16.mxu0 0
    %1694 = vmatpush1.bf16.msra.mxu0 0
    %1695 = vmatprep.subr.bf16.mxu0 0
    %1696 = vmatpush1.bf16.msra.mxu0 0
    %1697 = vmatprep.mubr.bf16.mxu0 0
    %1698 = vmatmul.mubr.bf16.gmra.mrb[0].mxu0 %v1663
    %v1699 = vpop.f32.mrb[0].mxu0
    %v1700 = vadd.f32 0.0, %v1699
    %v1701 = vpop.f32.mrb[0].mxu0
    %v1702 = vpop.f32.mrb[0].mxu0
    %v1703 = vadd.f32 0.0, %v1702
    %v1704 = vpop.f32.mrb[0].mxu0
    %1705 = vmatprep.mubr.bf16.mxu0 0
    %1706 = vmatmul.mubr.bf16.gmra.mrb[0].mxu0 %v1664
    %v1707 = vpop.f32.mrb[0].mxu0
    %v1708 = vadd.f32 0.0, %v1707
    %v1709 = vpop.f32.mrb[0].mxu0
    %v1710 = vpop.f32.mrb[0].mxu0
    %v1711 = vadd.f32 0.0, %v1710
    %v1712 = vpop.f32.mrb[0].mxu0
    %1713 = vdwg.mxu0
    %v1714 = vmax.f32 %v1645, %v1700
    %v1715 = vmax.f32 %v1648, %v1703
    %v1716 = vmax.f32 %v1653, %v1708
    %v1717 = vmax.f32 %v1656, %v1711
    %v1718 = vsub.f32 %v1645, %v1714
    %v1719 = vsub.f32 %v1648, %v1715
    %v1720 = vsub.f32 %v1653, %v1716
    %v1721 = vsub.f32 %v1656, %v1717
    %v1722 = vmul.f32 %v1718, 1.442695
    %v1723 = vpow.pop %v1722
    %v1724 = vmul.f32 %v1719, 1.442695
    %v1725 = vpow.pop %v1724
    %v1726 = vmul.f32 %v1720, 1.442695
    %v1727 = vpow.pop %v1726
    %v1728 = vmul.f32 %v1721, 1.442695
    %v1729 = vpow.pop %v1728
    %v1730 = vsub.f32 %v1700, %v1714
    %v1731 = vsub.f32 %v1703, %v1715
    %v1732 = vsub.f32 %v1708, %v1716
    %v1733 = vsub.f32 %v1711, %v1717
    %v1734 = vmul.f32 %v1730, 1.442695
    %v1735 = vpow.pop %v1734
    %v1736 = vmul.f32 %v1731, 1.442695
    %v1737 = vpow.pop %v1736
    %v1738 = vmul.f32 %v1732, 1.442695
    %v1739 = vpow.pop %v1738
    %v1740 = vmul.f32 %v1733, 1.442695
    %v1741 = vpow.pop %v1740
    %v1742 = vadd.f32 %v1723, %v1735
    %v1743 = vadd.f32 %v1725, %v1737
    %v1744 = vadd.f32 %v1727, %v1739
    %v1745 = vadd.f32 %v1729, %v1741
    %v1746 = vmul.f32 %v1723, %v1590
    %v1747 = vmul.f32 %v1725, %v1593
    %v1748 = vmul.f32 %v1727, %v1598
    %v1749 = vmul.f32 %v1729, %v1601
    %v1750 = vmul.f32 %v1735, %v1598
    %v1751 = vmul.f32 %v1737, %v1601
    %v1752 = vmul.f32 %v1739, %v1590
    %v1753 = vmul.f32 %v1741, %v1593
    %v1754 = vadd.f32 %v1746, %v1750
    %v1755 = vadd.f32 %v1747, %v1751
    %v1756 = vadd.f32 %v1748, %v1752
    %v1757 = vadd.f32 %v1749, %v1753
    %v1758 = vrcp.pop %v1742
    %v1759 = vrcp.pop %v1743
    %v1760 = vrcp.pop %v1744
    %v1761 = vrcp.pop %v1745
    %v1762 = vmul.f32 %v1754, %v1758
    %v1763 = vmul.f32 %v1755, %v1759
    %v1764 = vmul.f32 %v1756, %v1760
    %v1765 = vmul.f32 %v1757, %v1761
    %v1766 = vpack.c.bf16 %v1763, %v1762
    %v1767 = vpack.c.bf16 %v1765, %v1764
    %s1768 = scalar_lea.vmem [#allocation4], 64
    %v1769 = vld [vmem:[%s1768] sm:$0xf]
    %v1770 = vld [vmem:[%s1768 + $0x4] sm:$0xf]
    %v1771 = vld [vmem:[%s1768 + $0x8] sm:$0xf]
    %v1772 = vld [vmem:[%s1768 + $0xc] sm:$0xf]
    %v1773 = vld [vmem:[%s1768 + $0x10] sm:$0xf]
    %v1774 = vld [vmem:[%s1768 + $0x14] sm:$0xf]
    %v1775 = vld [vmem:[%s1768 + $0x18] sm:$0xf]
    %v1776 = vld [vmem:[%s1768 + $0x1c] sm:$0xf]
    %v1777 = vld [vmem:[%s1768 + $0x20] sm:$0xf]
    %v1778 = vld [vmem:[%s1768 + $0x24] sm:$0xf]
    %v1779 = vld [vmem:[%s1768 + $0x28] sm:$0xf]
    %v1780 = vld [vmem:[%s1768 + $0x2c] sm:$0xf]
    %v1781 = vld [vmem:[%s1768 + $0x30] sm:$0xf]
    %v1782 = vld [vmem:[%s1768 + $0x34] sm:$0xf]
    %v1783 = vld [vmem:[%s1768 + $0x38] sm:$0xf]
    %v1784 = vld [vmem:[%s1768 + $0x3c] sm:$0xf]
    %s1785 = scalar_lea.vmem %s5, 1
    %v1786 = vld [vmem:[%s1785] sm:$0x1]
    %v1788 = vlaneseq
    %v1789 = vshrl.u32 %v1788, 7
    %v1790 = vsub.s32 0, %v1789
    %v1791 = vrot.slane %v1786, %v1790
    %v1809 = vunpack.c.l.b16 %v1769
    %v1810 = vunpack.c.l.b16 %v1770
    %v1811 = vunpack.c.l.b16 %v1771
    %v1812 = vunpack.c.l.b16 %v1772
    %v1813 = vunpack.c.l.b16 %v1773
    %v1814 = vunpack.c.l.b16 %v1774
    %v1815 = vunpack.c.l.b16 %v1775
    %v1816 = vunpack.c.l.b16 %v1776
    %v1817 = vunpack.c.l.b16 %v1777
    %v1818 = vunpack.c.l.b16 %v1778
    %v1819 = vunpack.c.l.b16 %v1779
    %v1820 = vunpack.c.l.b16 %v1780
    %v1821 = vunpack.c.l.b16 %v1781
    %v1822 = vunpack.c.l.b16 %v1782
    %v1823 = vunpack.c.l.b16 %v1783
    %v1824 = vunpack.c.l.b16 %v1784
    %v1825 = vpack.c.b16 %v1810, %v1809
    %v1826 = vpack.c.b16 %v1812, %v1811
    %v1827 = vpack.c.b16 %v1814, %v1813
    %v1828 = vpack.c.b16 %v1816, %v1815
    %v1829 = vpack.c.b16 %v1818, %v1817
    %v1830 = vpack.c.b16 %v1820, %v1819
    %v1831 = vpack.c.b16 %v1822, %v1821
    %v1832 = vpack.c.b16 %v1824, %v1823
    %1841 = vmatprep.subr.bf16.mxu0 0
    %1842 = vmatpush1.bf16.msra.mxu0 %v1825
    %1843 = vmatprep.subr.bf16.mxu0 0
    %1844 = vmatpush1.bf16.msra.mxu0 %v1826
    %1845 = vmatprep.subr.bf16.mxu0 0
    %1846 = vmatpush1.bf16.msra.mxu0 %v1827
    %1847 = vmatprep.subr.bf16.mxu0 0
    %1848 = vmatpush1.bf16.msra.mxu0 %v1828
    %1849 = vmatprep.subr.bf16.mxu0 0
    %1850 = vmatpush1.bf16.msra.mxu0 %v1829
    %1851 = vmatprep.subr.bf16.mxu0 0
    %1852 = vmatpush1.bf16.msra.mxu0 %v1830
    %1853 = vmatprep.subr.bf16.mxu0 0
    %1854 = vmatpush1.bf16.msra.mxu0 %v1831
    %1855 = vmatprep.subr.bf16.mxu0 0
    %1856 = vmatpush1.bf16.msra.mxu0 %v1832
    %1857 = vmatprep.subr.bf16.mxu0 0
    %1858 = vmatpush1.bf16.msra.mxu0 0
    %1859 = vmatprep.subr.bf16.mxu0 0
    %1860 = vmatpush1.bf16.msra.mxu0 0
    %1861 = vmatprep.subr.bf16.mxu0 0
    %1862 = vmatpush1.bf16.msra.mxu0 0
    %1863 = vmatprep.subr.bf16.mxu0 0
    %1864 = vmatpush1.bf16.msra.mxu0 0
    %1865 = vmatprep.subr.bf16.mxu0 0
    %1866 = vmatpush1.bf16.msra.mxu0 0
    %1867 = vmatprep.subr.bf16.mxu0 0
    %1868 = vmatpush1.bf16.msra.mxu0 0
    %1869 = vmatprep.subr.bf16.mxu0 0
    %1870 = vmatpush1.bf16.msra.mxu0 0
    %1871 = vmatprep.subr.bf16.mxu0 0
    %1872 = vmatpush1.bf16.msra.mxu0 0
    %1873 = vmatprep.mubr.bf16.mxu0 0
    %1874 = vmatmul.mubr.bf16.gmra.mrb[0].mxu0 %v1766
    %v1875 = vpop.f32.mrb[0].mxu0
    %v1876 = vadd.f32 %v1791, %v1875
    %v1877 = vpop.f32.mrb[0].mxu0
    %v1878 = vpop.f32.mrb[0].mxu0
    %v1879 = vadd.f32 %v1791, %v1878
    %v1880 = vpop.f32.mrb[0].mxu0
    %1881 = vmatprep.mubr.bf16.mxu0 0
    %1882 = vmatmul.mubr.bf16.gmra.mrb[0].mxu0 %v1767
    %v1883 = vpop.f32.mrb[0].mxu0
    %v1884 = vadd.f32 %v1791, %v1883
    %v1885 = vpop.f32.mrb[0].mxu0
    %v1886 = vpop.f32.mrb[0].mxu0
    %v1887 = vadd.f32 %v1791, %v1886
    %v1888 = vpop.f32.mrb[0].mxu0
    %1889 = vdwg.mxu0
    %v1890 = vadd.f32 %v1317, %v1876
    %v1891 = vadd.f32 %v1318, %v1879
    %v1892 = vadd.f32 %v1319, %v1884
    %v1893 = vadd.f32 %v1320, %v1887
    %s1894 = scalar_lea.vmem %s6, 1
    %v1895 = vld [vmem:[%s1894] sm:$0x1]
    %s1896 = scalar_lea.vmem %s7, 1
    %v1897 = vld [vmem:[%s1896] sm:$0x1]
    %1898 = vadd.xlane.f32.xlu0 %v1890
    %v1899 = vpop.xlane.xlu0 %1898
    %1900 = vadd.xlane.f32.xlu0 %v1891
    %v1901 = vpop.xlane.xlu0 %1900
    %1902 = vadd.xlane.f32.xlu0 %v1892
    %v1903 = vpop.xlane.xlu0 %1902
    %1904 = vadd.xlane.f32.xlu0 %v1893
    %v1905 = vpop.xlane.xlu0 %1904
    %v1906 = vmul.f32 %v1899, %v835
    %v1907 = vmul.f32 %v1901, %v835
    %v1908 = vmul.f32 %v1903, %v835
    %v1909 = vmul.f32 %v1905, %v835
    %v1910 = vsub.f32 %v1890, %v1906
    %v1911 = vsub.f32 %v1891, %v1907
    %v1912 = vsub.f32 %v1892, %v1908
    %v1913 = vsub.f32 %v1893, %v1909
    %v1914 = vmul.f32 %v1910, %v1910
    %v1915 = vmul.f32 %v1911, %v1911
    %v1916 = vmul.f32 %v1912, %v1912
    %v1917 = vmul.f32 %v1913, %v1913
    %1918 = vadd.xlane.f32.xlu0 %v1914
    %v1919 = vpop.xlane.xlu0 %1918
    %1920 = vadd.xlane.f32.xlu0 %v1915
    %v1921 = vpop.xlane.xlu0 %1920
    %1922 = vadd.xlane.f32.xlu0 %v1916
    %v1923 = vpop.xlane.xlu0 %1922
    %1924 = vadd.xlane.f32.xlu0 %v1917
    %v1925 = vpop.xlane.xlu0 %1924
    %v1926 = vmul.f32 %v1919, %v835
    %v1927 = vmul.f32 %v1921, %v835
    %v1928 = vmul.f32 %v1923, %v835
    %v1929 = vmul.f32 %v1925, %v835
    %v1930 = vadd.f32 %v1926, 1e-05
    %v1931 = vadd.f32 %v1927, 1e-05
    %v1932 = vadd.f32 %v1928, 1e-05
    %v1933 = vadd.f32 %v1929, 1e-05
    %v1934 = vrsqrt.pop %v1930
    %v1935 = vrsqrt.pop %v1931
    %v1936 = vrsqrt.pop %v1932
    %v1937 = vrsqrt.pop %v1933
    %v1938 = vmul.f32 %v1910, %v1934
    %v1939 = vmul.f32 %v1911, %v1935
    %v1940 = vmul.f32 %v1912, %v1936
    %v1941 = vmul.f32 %v1913, %v1937
    %v1943 = vlaneseq
    %v1944 = vshrl.u32 %v1943, 7
    %v1945 = vsub.s32 0, %v1944
    %v1946 = vrot.slane %v1895, %v1945
    %v1948 = vmul.f32 %v1938, %v1946
    %v1949 = vmul.f32 %v1939, %v1946
    %v1950 = vmul.f32 %v1940, %v1946
    %v1951 = vmul.f32 %v1941, %v1946
    %v1953 = vlaneseq
    %v1954 = vshrl.u32 %v1953, 7
    %v1955 = vsub.s32 0, %v1954
    %v1956 = vrot.slane %v1897, %v1955
    %v1958 = vadd.f32 %v1948, %v1956
    %v1959 = vadd.f32 %v1949, %v1956
    %v1960 = vadd.f32 %v1950, %v1956
    %v1961 = vadd.f32 %v1951, %v1956
    %v1962 = vpack.c.bf16 %v1959, %v1958
    %v1963 = vpack.c.bf16 %v1961, %v1960
    %s1964 = scalar_lea.vmem %s8, 128
    %v1965 = vld [vmem:[%s1964] sm:$0xff]
    %v1966 = vld [vmem:[%s1964 + $0x8] sm:$0xff]
    %v1967 = vld [vmem:[%s1964 + $0x10] sm:$0xff]
    %v1968 = vld [vmem:[%s1964 + $0x18] sm:$0xff]
    %v1969 = vld [vmem:[%s1964 + $0x20] sm:$0xff]
    %v1970 = vld [vmem:[%s1964 + $0x28] sm:$0xff]
    %v1971 = vld [vmem:[%s1964 + $0x30] sm:$0xff]
    %v1972 = vld [vmem:[%s1964 + $0x38] sm:$0xff]
    %v1973 = vld [vmem:[%s1964 + $0x40] sm:$0xff]
    %v1974 = vld [vmem:[%s1964 + $0x48] sm:$0xff]
    %v1975 = vld [vmem:[%s1964 + $0x50] sm:$0xff]
    %v1976 = vld [vmem:[%s1964 + $0x58] sm:$0xff]
    %v1977 = vld [vmem:[%s1964 + $0x60] sm:$0xff]
    %v1978 = vld [vmem:[%s1964 + $0x68] sm:$0xff]
    %v1979 = vld [vmem:[%s1964 + $0x70] sm:$0xff]
    %v1980 = vld [vmem:[%s1964 + $0x78] sm:$0xff]
    %s1981 = scalar_lea.vmem %s9, 2
    %v1982 = vld [vmem:[%s1981] sm:$0x3]
    %v1984 = vlaneseq
    %v1985 = vshrl.u32 %v1984, 7
    %v1986 = vsub.s32 0, %v1985
    %v1987 = vrot.slane %v1982, %v1986
    %v1988 = vlaneseq
    %v1989 = vshrl.u32 %v1988, 7
    %v1990 = vsub.s32 1, %v1989
    %v1991 = vrot.slane %v1982, %v1990
    %v2010 = vunpack.c.l.b16 %v1965
    %v2011 = vunpack.c.h.b16 %v1965
    %v2012 = vunpack.c.l.b16 %v1966
    %v2013 = vunpack.c.h.b16 %v1966
    %v2014 = vunpack.c.l.b16 %v1967
    %v2015 = vunpack.c.h.b16 %v1967
    %v2016 = vunpack.c.l.b16 %v1968
    %v2017 = vunpack.c.h.b16 %v1968
    %v2018 = vunpack.c.l.b16 %v1969
    %v2019 = vunpack.c.h.b16 %v1969
    %v2020 = vunpack.c.l.b16 %v1970
    %v2021 = vunpack.c.h.b16 %v1970
    %v2022 = vunpack.c.l.b16 %v1971
    %v2023 = vunpack.c.h.b16 %v1971
    %v2024 = vunpack.c.l.b16 %v1972
    %v2025 = vunpack.c.h.b16 %v1972
    %v2026 = vunpack.c.l.b16 %v1973
    %v2027 = vunpack.c.h.b16 %v1973
    %v2028 = vunpack.c.l.b16 %v1974
    %v2029 = vunpack.c.h.b16 %v1974
    %v2030 = vunpack.c.l.b16 %v1975
    %v2031 = vunpack.c.h.b16 %v1975
    %v2032 = vunpack.c.l.b16 %v1976
    %v2033 = vunpack.c.h.b16 %v1976
    %v2034 = vunpack.c.l.b16 %v1977
    %v2035 = vunpack.c.h.b16 %v1977
    %v2036 = vunpack.c.l.b16 %v1978
    %v2037 = vunpack.c.h.b16 %v1978
    %v2038 = vunpack.c.l.b16 %v1979
    %v2039 = vunpack.c.h.b16 %v1979
    %v2040 = vunpack.c.l.b16 %v1980
    %v2041 = vunpack.c.h.b16 %v1980
    %v2042 = vpack.c.b16 %v2012, %v2010
    %v2043 = vpack.c.b16 %v2013, %v2011
    %v2044 = vpack.c.b16 %v2016, %v2014
    %v2045 = vpack.c.b16 %v2017, %v2015
    %v2046 = vpack.c.b16 %v2020, %v2018
    %v2047 = vpack.c.b16 %v2021, %v2019
    %v2048 = vpack.c.b16 %v2024, %v2022
    %v2049 = vpack.c.b16 %v2025, %v2023
    %v2050 = vpack.c.b16 %v2028, %v2026
    %v2051 = vpack.c.b16 %v2029, %v2027
    %v2052 = vpack.c.b16 %v2032, %v2030
    %v2053 = vpack.c.b16 %v2033, %v2031
    %v2054 = vpack.c.b16 %v2036, %v2034
    %v2055 = vpack.c.b16 %v2037, %v2035
    %v2056 = vpack.c.b16 %v2040, %v2038
    %v2057 = vpack.c.b16 %v2041, %v2039
    %2074 = vmatprep.subr.bf16.mxu0 %v2043
    %2075 = vmatpush1.bf16.msra.mxu0 %v2042
    %2076 = vmatprep.subr.bf16.mxu0 %v2045
    %2077 = vmatpush1.bf16.msra.mxu0 %v2044
    %2078 = vmatprep.subr.bf16.mxu0 %v2047
    %2079 = vmatpush1.bf16.msra.mxu0 %v2046
    %2080 = vmatprep.subr.bf16.mxu0 %v2049
    %2081 = vmatpush1.bf16.msra.mxu0 %v2048
    %2082 = vmatprep.subr.bf16.mxu0 %v2051
    %2083 = vmatpush1.bf16.msra.mxu0 %v2050
    %2084 = vmatprep.subr.bf16.mxu0 %v2053
    %2085 = vmatpush1.bf16.msra.mxu0 %v2052
    %2086 = vmatprep.subr.bf16.mxu0 %v2055
    %2087 = vmatpush1.bf16.msra.mxu0 %v2054
    %2088 = vmatprep.subr.bf16.mxu0 %v2057
    %2089 = vmatpush1.bf16.msra.mxu0 %v2056
    %2090 = vmatprep.subr.bf16.mxu0 0
    %2091 = vmatpush1.bf16.msra.mxu0 0
    %2092 = vmatprep.subr.bf16.mxu0 0
    %2093 = vmatpush1.bf16.msra.mxu0 0
    %2094 = vmatprep.subr.bf16.mxu0 0
    %2095 = vmatpush1.bf16.msra.mxu0 0
    %2096 = vmatprep.subr.bf16.mxu0 0
    %2097 = vmatpush1.bf16.msra.mxu0 0
    %2098 = vmatprep.subr.bf16.mxu0 0
    %2099 = vmatpush1.bf16.msra.mxu0 0
    %2100 = vmatprep.subr.bf16.mxu0 0
    %2101 = vmatpush1.bf16.msra.mxu0 0
    %2102 = vmatprep.subr.bf16.mxu0 0
    %2103 = vmatpush1.bf16.msra.mxu0 0
    %2104 = vmatprep.subr.bf16.mxu0 0
    %2105 = vmatpush1.bf16.msra.mxu0 0
    %2106 = vmatprep.mubr.bf16.mxu0 0
    %2107 = vmatmul.mubr.bf16.gmra.mrb[0].mxu0 %v1962
    %v2108 = vpop.f32.mrb[0].mxu0
    %v2109 = vadd.f32 %v1987, %v2108
    %v2110 = vpop.f32.mrb[0].mxu0
    %v2111 = vadd.f32 %v1991, %v2110
    %v2112 = vpop.f32.mrb[0].mxu0
    %v2113 = vadd.f32 %v1987, %v2112
    %v2114 = vpop.f32.mrb[0].mxu0
    %v2115 = vadd.f32 %v1991, %v2114
    %2116 = vmatprep.mubr.bf16.mxu0 0
    %2117 = vmatmul.mubr.bf16.gmra.mrb[0].mxu0 %v1963
    %v2118 = vpop.f32.mrb[0].mxu0
    %v2119 = vadd.f32 %v1987, %v2118
    %v2120 = vpop.f32.mrb[0].mxu0
    %v2121 = vadd.f32 %v1991, %v2120
    %v2122 = vpop.f32.mrb[0].mxu0
    %v2123 = vadd.f32 %v1987, %v2122
    %v2124 = vpop.f32.mrb[0].mxu0
    %v2125 = vadd.f32 %v1991, %v2124
    %2126 = vdwg.mxu0
    %v2127 = vmax.f32 %v2109, 0.0
    %v2128 = vmax.f32 %v2111, 0.0
    %v2129 = vmax.f32 %v2113, 0.0
    %v2130 = vmax.f32 %v2115, 0.0
    %v2131 = vmax.f32 %v2119, 0.0
    %v2132 = vmax.f32 %v2121, 0.0
    %v2133 = vmax.f32 %v2123, 0.0
    %v2134 = vmax.f32 %v2125, 0.0
    %v2135 = vpack.c.bf16 %v2129, %v2127
    %v2136 = vpack.c.bf16 %v2130, %v2128
    %v2137 = vpack.c.bf16 %v2133, %v2131
    %v2138 = vpack.c.bf16 %v2134, %v2132
    %s2139 = scalar_lea.vmem %s10, 128
    %v2140 = vld [vmem:[%s2139] sm:$0xf]
    %v2141 = vld [vmem:[%s2139 + $0x4] sm:$0xf]
    %v2142 = vld [vmem:[%s2139 + $0x8] sm:$0xf]
    %v2143 = vld [vmem:[%s2139 + $0xc] sm:$0xf]
    %v2144 = vld [vmem:[%s2139 + $0x10] sm:$0xf]
    %v2145 = vld [vmem:[%s2139 + $0x14] sm:$0xf]
    %v2146 = vld [vmem:[%s2139 + $0x18] sm:$0xf]
    %v2147 = vld [vmem:[%s2139 + $0x1c] sm:$0xf]
    %v2148 = vld [vmem:[%s2139 + $0x20] sm:$0xf]
    %v2149 = vld [vmem:[%s2139 + $0x24] sm:$0xf]
    %v2150 = vld [vmem:[%s2139 + $0x28] sm:$0xf]
    %v2151 = vld [vmem:[%s2139 + $0x2c] sm:$0xf]
    %v2152 = vld [vmem:[%s2139 + $0x30] sm:$0xf]
    %v2153 = vld [vmem:[%s2139 + $0x34] sm:$0xf]
    %v2154 = vld [vmem:[%s2139 + $0x38] sm:$0xf]
    %v2155 = vld [vmem:[%s2139 + $0x3c] sm:$0xf]
    %v2156 = vld [vmem:[%s2139 + $0x40] sm:$0xf]
    %v2157 = vld [vmem:[%s2139 + $0x44] sm:$0xf]
    %v2158 = vld [vmem:[%s2139 + $0x48] sm:$0xf]
    %v2159 = vld [vmem:[%s2139 + $0x4c] sm:$0xf]
    %v2160 = vld [vmem:[%s2139 + $0x50] sm:$0xf]
    %v2161 = vld [vmem:[%s2139 + $0x54] sm:$0xf]
    %v2162 = vld [vmem:[%s2139 + $0x58] sm:$0xf]
    %v2163 = vld [vmem:[%s2139 + $0x5c] sm:$0xf]
    %v2164 = vld [vmem:[%s2139 + $0x60] sm:$0xf]
    %v2165 = vld [vmem:[%s2139 + $0x64] sm:$0xf]
    %v2166 = vld [vmem:[%s2139 + $0x68] sm:$0xf]
    %v2167 = vld [vmem:[%s2139 + $0x6c] sm:$0xf]
    %v2168 = vld [vmem:[%s2139 + $0x70] sm:$0xf]
    %v2169 = vld [vmem:[%s2139 + $0x74] sm:$0xf]
    %v2170 = vld [vmem:[%s2139 + $0x78] sm:$0xf]
    %v2171 = vld [vmem:[%s2139 + $0x7c] sm:$0xf]
    %s2172 = scalar_lea.vmem %s11, 1
    %v2173 = vld [vmem:[%s2172] sm:$0x1]
    %v2175 = vlaneseq
    %v2176 = vshrl.u32 %v2175, 7
    %v2177 = vsub.s32 0, %v2176
    %v2178 = vrot.slane %v2173, %v2177
    %v2212 = vunpack.c.l.b16 %v2140
    %v2213 = vunpack.c.l.b16 %v2141
    %v2214 = vunpack.c.l.b16 %v2142
    %v2215 = vunpack.c.l.b16 %v2143
    %v2216 = vunpack.c.l.b16 %v2144
    %v2217 = vunpack.c.l.b16 %v2145
    %v2218 = vunpack.c.l.b16 %v2146
    %v2219 = vunpack.c.l.b16 %v2147
    %v2220 = vunpack.c.l.b16 %v2148
    %v2221 = vunpack.c.l.b16 %v2149
    %v2222 = vunpack.c.l.b16 %v2150
    %v2223 = vunpack.c.l.b16 %v2151
    %v2224 = vunpack.c.l.b16 %v2152
    %v2225 = vunpack.c.l.b16 %v2153
    %v2226 = vunpack.c.l.b16 %v2154
    %v2227 = vunpack.c.l.b16 %v2155
    %v2228 = vunpack.c.l.b16 %v2156
    %v2229 = vunpack.c.l.b16 %v2157
    %v2230 = vunpack.c.l.b16 %v2158
    %v2231 = vunpack.c.l.b16 %v2159
    %v2232 = vunpack.c.l.b16 %v2160
    %v2233 = vunpack.c.l.b16 %v2161
    %v2234 = vunpack.c.l.b16 %v2162
    %v2235 = vunpack.c.l.b16 %v2163
    %v2236 = vunpack.c.l.b16 %v2164
    %v2237 = vunpack.c.l.b16 %v2165
    %v2238 = vunpack.c.l.b16 %v2166
    %v2239 = vunpack.c.l.b16 %v2167
    %v2240 = vunpack.c.l.b16 %v2168
    %v2241 = vunpack.c.l.b16 %v2169
    %v2242 = vunpack.c.l.b16 %v2170
    %v2243 = vunpack.c.l.b16 %v2171
    %v2244 = vpack.c.b16 %v2213, %v2212
    %v2245 = vpack.c.b16 %v2215, %v2214
    %v2246 = vpack.c.b16 %v2217, %v2216
    %v2247 = vpack.c.b16 %v2219, %v2218
    %v2248 = vpack.c.b16 %v2221, %v2220
    %v2249 = vpack.c.b16 %v2223, %v2222
    %v2250 = vpack.c.b16 %v2225, %v2224
    %v2251 = vpack.c.b16 %v2227, %v2226
    %v2252 = vpack.c.b16 %v2229, %v2228
    %v2253 = vpack.c.b16 %v2231, %v2230
    %v2254 = vpack.c.b16 %v2233, %v2232
    %v2255 = vpack.c.b16 %v2235, %v2234
    %v2256 = vpack.c.b16 %v2237, %v2236
    %v2257 = vpack.c.b16 %v2239, %v2238
    %v2258 = vpack.c.b16 %v2241, %v2240
    %v2259 = vpack.c.b16 %v2243, %v2242
    %2276 = vmatprep.subr.bf16.mxu0 0
    %2277 = vmatpush1.bf16.msra.mxu0 %v2244
    %2278 = vmatprep.subr.bf16.mxu0 0
    %2279 = vmatpush1.bf16.msra.mxu0 %v2245
    %2280 = vmatprep.subr.bf16.mxu0 0
    %2281 = vmatpush1.bf16.msra.mxu0 %v2246
    %2282 = vmatprep.subr.bf16.mxu0 0
    %2283 = vmatpush1.bf16.msra.mxu0 %v2247
    %2284 = vmatprep.subr.bf16.mxu0 0
    %2285 = vmatpush1.bf16.msra.mxu0 %v2248
    %2286 = vmatprep.subr.bf16.mxu0 0
    %2287 = vmatpush1.bf16.msra.mxu0 %v2249
    %2288 = vmatprep.subr.bf16.mxu0 0
    %2289 = vmatpush1.bf16.msra.mxu0 %v2250
    %2290 = vmatprep.subr.bf16.mxu0 0
    %2291 = vmatpush1.bf16.msra.mxu0 %v2251
    %2292 = vmatprep.subr.bf16.mxu0 0
    %2293 = vmatpush1.bf16.msra.mxu0 %v2252
    %2294 = vmatprep.subr.bf16.mxu0 0
    %2295 = vmatpush1.bf16.msra.mxu0 %v2253
    %2296 = vmatprep.subr.bf16.mxu0 0
    %2297 = vmatpush1.bf16.msra.mxu0 %v2254
    %2298 = vmatprep.subr.bf16.mxu0 0
    %2299 = vmatpush1.bf16.msra.mxu0 %v2255
    %2300 = vmatprep.subr.bf16.mxu0 0
    %2301 = vmatpush1.bf16.msra.mxu0 %v2256
    %2302 = vmatprep.subr.bf16.mxu0 0
    %2303 = vmatpush1.bf16.msra.mxu0 %v2257
    %2304 = vmatprep.subr.bf16.mxu0 0
    %2305 = vmatpush1.bf16.msra.mxu0 %v2258
    %2306 = vmatprep.subr.bf16.mxu0 0
    %2307 = vmatpush1.bf16.msra.mxu0 %v2259
    %2308 = vmatprep.mubr.bf16.mxu0 %v2136
    %2309 = vmatmul.mubr.bf16.gmra.mrb[0].mxu0 %v2135
    %v2310 = vpop.f32.mrb[0].mxu0
    %v2311 = vadd.f32 %v2178, %v2310
    %v2312 = vpop.f32.mrb[0].mxu0
    %v2313 = vpop.f32.mrb[0].mxu0
    %v2314 = vpop.f32.mrb[0].mxu0
    %2315 = vmatprep.mubr.bf16.mxu0 %v2138
    %2316 = vmatmul.mubr.bf16.gmra.mrb[0].mxu0 %v2137
    %v2317 = vpop.f32.mrb[0].mxu0
    %v2318 = vadd.f32 %v2178, %v2317
    %v2319 = vpop.f32.mrb[0].mxu0
    %v2320 = vpop.f32.mrb[0].mxu0
    %v2321 = vpop.f32.mrb[0].mxu0
    %2322 = vdwg.mxu0
    %v2323 = vadd.f32 %v1958, %v2311
    %v2324 = vadd.f32 %v1960, %v2318
    %s2325 = scalar_lea.vmem [#allocation6], 1
    %v2326 = vld [vmem:[%s2325] sm:$0x1]
    %s2327 = scalar_lea.vmem %s13, 1
    %v2328 = vld [vmem:[%s2327] sm:$0x1]
    %2329 = vadd.xlane.f32.xlu0 %v2323
    %v2330 = vpop.xlane.xlu0 %2329
    %2331 = vadd.xlane.f32.xlu0 %v2324
    %v2332 = vpop.xlane.xlu0 %2331
    %v2333 = vmul.f32 %v2330, %v835
    %v2334 = vmul.f32 %v2332, %v835
    %v2335 = vsub.f32 %v2323, %v2333
    %v2336 = vsub.f32 %v2324, %v2334
    %v2337 = vmul.f32 %v2335, %v2335
    %v2338 = vmul.f32 %v2336, %v2336
    %2339 = vadd.xlane.f32.xlu0 %v2337
    %v2340 = vpop.xlane.xlu0 %2339
    %2341 = vadd.xlane.f32.xlu0 %v2338
    %v2342 = vpop.xlane.xlu0 %2341
    %v2343 = vmul.f32 %v2340, %v835
    %v2344 = vmul.f32 %v2342, %v835
    %v2345 = vadd.f32 %v2343, 1e-05
    %v2346 = vadd.f32 %v2344, 1e-05
    %v2347 = vrsqrt.pop %v2345
    %v2348 = vrsqrt.pop %v2346
    %v2349 = vmul.f32 %v2335, %v2347
    %v2350 = vmul.f32 %v2336, %v2348
    %v2352 = vlaneseq
    %v2353 = vshrl.u32 %v2352, 7
    %v2354 = vsub.s32 0, %v2353
    %v2355 = vrot.slane %v2326, %v2354
    %v2357 = vmul.f32 %v2349, %v2355
    %v2358 = vmul.f32 %v2350, %v2355
    %v2360 = vlaneseq
    %v2361 = vshrl.u32 %v2360, 7
    %v2362 = vsub.s32 0, %v2361
    %v2363 = vrot.slane %v2328, %v2362
    %v2365 = vadd.f32 %v2357, %v2363
    %v2366 = vadd.f32 %v2358, %v2363
    %v2367 = vpack.c.bf16 %v2366, %v2365
    %v2368 = vld [vmem:[#allocation7] sm:$0xf]
    %v2369 = vld [vmem:[#allocation7 + $0x4] sm:$0xf]
    %v2370 = vld [vmem:[#allocation7 + $0x8] sm:$0xf]
    %v2371 = vld [vmem:[#allocation7 + $0xc] sm:$0xf]
    %v2372 = vld [vmem:[#allocation7 + $0x10] sm:$0xf]
    %v2373 = vld [vmem:[#allocation7 + $0x14] sm:$0xf]
    %v2374 = vld [vmem:[#allocation7 + $0x18] sm:$0xf]
    %v2375 = vld [vmem:[#allocation7 + $0x1c] sm:$0xf]
    %v2376 = vld [vmem:[#allocation7 + $0x20] sm:$0xf]
    %v2377 = vld [vmem:[#allocation7 + $0x24] sm:$0xf]
    %v2378 = vld [vmem:[#allocation7 + $0x28] sm:$0xf]
    %v2379 = vld [vmem:[#allocation7 + $0x2c] sm:$0xf]
    %v2380 = vld [vmem:[#allocation7 + $0x30] sm:$0xf]
    %v2381 = vld [vmem:[#allocation7 + $0x34] sm:$0xf]
    %v2382 = vld [vmem:[#allocation7 + $0x38] sm:$0xf]
    %v2383 = vld [vmem:[#allocation7 + $0x3c] sm:$0xf]
    %v2384 = vld [vmem:[#allocation9] sm:$0x1]
    %v2386 = vlaneseq
    %v2387 = vshrl.u32 %v2386, 7
    %v2388 = vsub.s32 0, %v2387
    %v2389 = vrot.slane %v2384, %v2388
    %v2407 = vunpack.c.l.b16 %v2368
    %v2408 = vunpack.c.l.b16 %v2369
    %v2409 = vunpack.c.l.b16 %v2370
    %v2410 = vunpack.c.l.b16 %v2371
    %v2411 = vunpack.c.l.b16 %v2372
    %v2412 = vunpack.c.l.b16 %v2373
    %v2413 = vunpack.c.l.b16 %v2374
    %v2414 = vunpack.c.l.b16 %v2375
    %v2415 = vunpack.c.l.b16 %v2376
    %v2416 = vunpack.c.l.b16 %v2377
    %v2417 = vunpack.c.l.b16 %v2378
    %v2418 = vunpack.c.l.b16 %v2379
    %v2419 = vunpack.c.l.b16 %v2380
    %v2420 = vunpack.c.l.b16 %v2381
    %v2421 = vunpack.c.l.b16 %v2382
    %v2422 = vunpack.c.l.b16 %v2383
    %v2423 = vpack.c.b16 %v2408, %v2407
    %v2424 = vpack.c.b16 %v2410, %v2409
    %v2425 = vpack.c.b16 %v2412, %v2411
    %v2426 = vpack.c.b16 %v2414, %v2413
    %v2427 = vpack.c.b16 %v2416, %v2415
    %v2428 = vpack.c.b16 %v2418, %v2417
    %v2429 = vpack.c.b16 %v2420, %v2419
    %v2430 = vpack.c.b16 %v2422, %v2421
    %2439 = vmatprep.subr.bf16.mxu0 0
    %2440 = vmatpush1.bf16.msra.mxu0 %v2423
    %2441 = vmatprep.subr.bf16.mxu0 0
    %2442 = vmatpush1.bf16.msra.mxu0 %v2424
    %2443 = vmatprep.subr.bf16.mxu0 0
    %2444 = vmatpush1.bf16.msra.mxu0 %v2425
    %2445 = vmatprep.subr.bf16.mxu0 0
    %2446 = vmatpush1.bf16.msra.mxu0 %v2426
    %2447 = vmatprep.subr.bf16.mxu0 0
    %2448 = vmatpush1.bf16.msra.mxu0 %v2427
    %2449 = vmatprep.subr.bf16.mxu0 0
    %2450 = vmatpush1.bf16.msra.mxu0 %v2428
    %2451 = vmatprep.subr.bf16.mxu0 0
    %2452 = vmatpush1.bf16.msra.mxu0 %v2429
    %2453 = vmatprep.subr.bf16.mxu0 0
    %2454 = vmatpush1.bf16.msra.mxu0 %v2430
    %2455 = vmatprep.subr.bf16.mxu0 0
    %2456 = vmatpush1.bf16.msra.mxu0 0
    %2457 = vmatprep.subr.bf16.mxu0 0
    %2458 = vmatpush1.bf16.msra.mxu0 0
    %2459 = vmatprep.subr.bf16.mxu0 0
    %2460 = vmatpush1.bf16.msra.mxu0 0
    %2461 = vmatprep.subr.bf16.mxu0 0
    %2462 = vmatpush1.bf16.msra.mxu0 0
    %2463 = vmatprep.subr.bf16.mxu0 0
    %2464 = vmatpush1.bf16.msra.mxu0 0
    %2465 = vmatprep.subr.bf16.mxu0 0
    %2466 = vmatpush1.bf16.msra.mxu0 0
    %2467 = vmatprep.subr.bf16.mxu0 0
    %2468 = vmatpush1.bf16.msra.mxu0 0
    %2469 = vmatprep.subr.bf16.mxu0 0
    %2470 = vmatpush1.bf16.msra.mxu0 0
    %2471 = vmatprep.mubr.bf16.mxu0 0
    %2472 = vmatmul.mubr.bf16.gmra.mrb[0].mxu0 %v2367
    %v2473 = vpop.f32.mrb[0].mxu0
    %v2474 = vadd.f32 %v2389, %v2473
    %v2475 = vpop.f32.mrb[0].mxu0
    %v2476 = vpop.f32.mrb[0].mxu0
    %v2477 = vadd.f32 %v2389, %v2476
    %v2478 = vpop.f32.mrb[0].mxu0
    %2479 = vdwg.mxu0
    %v2480 = vld [vmem:[#allocation10] sm:$0x1]
    %v2481 = vld [vmem:[#allocation12] sm:$0x1]
    %2482 = vadd.xlane.f32.xlu0 %v2474
    %v2483 = vpop.xlane.xlu0 %2482
    %2484 = vadd.xlane.f32.xlu0 %v2477
    %v2485 = vpop.xlane.xlu0 %2484
    %v2486 = vmul.f32 %v2483, %v835
    %v2487 = vmul.f32 %v2485, %v835
    %v2488 = vsub.f32 %v2474, %v2486
    %v2489 = vsub.f32 %v2477, %v2487
    %v2490 = vmul.f32 %v2488, %v2488
    %v2491 = vmul.f32 %v2489, %v2489
    %2492 = vadd.xlane.f32.xlu0 %v2490
    %v2493 = vpop.xlane.xlu0 %2492
    %2494 = vadd.xlane.f32.xlu0 %v2491
    %v2495 = vpop.xlane.xlu0 %2494
    %v2496 = vmul.f32 %v2493, %v835
    %v2497 = vmul.f32 %v2495, %v835
    %v2498 = vadd.f32 %v2496, 1e-05
    %v2499 = vadd.f32 %v2497, 1e-05
    %v2500 = vrsqrt.pop %v2498
    %v2501 = vrsqrt.pop %v2499
    %v2502 = vmul.f32 %v2488, %v2500
    %v2503 = vmul.f32 %v2489, %v2501
    %v2505 = vlaneseq
    %v2506 = vshrl.u32 %v2505, 7
    %v2507 = vsub.s32 0, %v2506
    %v2508 = vrot.slane %v2480, %v2507
    %v2510 = vmul.f32 %v2502, %v2508
    %v2511 = vmul.f32 %v2503, %v2508
    %v2513 = vlaneseq
    %v2514 = vshrl.u32 %v2513, 7
    %v2515 = vsub.s32 0, %v2514
    %v2516 = vrot.slane %v2481, %v2515
    %v2518 = vadd.f32 %v2510, %v2516
    %v2519 = vadd.f32 %v2511, %v2516
    %v2520 = vmax.f32 %v2518, 0.0
    %v2521 = vmax.f32 %v2519, 0.0
    %v2522 = vpack.c.bf16 %v2521, %v2520
    %v2523 = vld [vmem:[#allocation13] sm:$0xf]
    %v2524 = vld [vmem:[#allocation13 + $0x4] sm:$0xf]
    %v2525 = vld [vmem:[#allocation13 + $0x8] sm:$0xf]
    %v2526 = vld [vmem:[#allocation13 + $0xc] sm:$0xf]
    %v2527 = vld [vmem:[#allocation13 + $0x10] sm:$0xf]
    %v2528 = vld [vmem:[#allocation13 + $0x14] sm:$0xf]
    %v2529 = vld [vmem:[#allocation13 + $0x18] sm:$0xf]
    %v2530 = vld [vmem:[#allocation13 + $0x1c] sm:$0xf]
    %v2531 = vld [vmem:[#allocation13 + $0x20] sm:$0xf]
    %v2532 = vld [vmem:[#allocation13 + $0x24] sm:$0xf]
    %v2533 = vld [vmem:[#allocation13 + $0x28] sm:$0xf]
    %v2534 = vld [vmem:[#allocation13 + $0x2c] sm:$0xf]
    %v2535 = vld [vmem:[#allocation13 + $0x30] sm:$0xf]
    %v2536 = vld [vmem:[#allocation13 + $0x34] sm:$0xf]
    %v2537 = vld [vmem:[#allocation13 + $0x38] sm:$0xf]
    %v2538 = vld [vmem:[#allocation13 + $0x3c] sm:$0xf]
    %v2539 = vld [vmem:[#allocation15] sm:$0x1]
    %v2541 = vlaneseq
    %v2542 = vshrl.u32 %v2541, 7
    %v2543 = vsub.s32 0, %v2542
    %v2544 = vrot.slane %v2539, %v2543
    %v2562 = vunpack.c.l.b16 %v2523
    %v2563 = vunpack.c.l.b16 %v2524
    %v2564 = vunpack.c.l.b16 %v2525
    %v2565 = vunpack.c.l.b16 %v2526
    %v2566 = vunpack.c.l.b16 %v2527
    %v2567 = vunpack.c.l.b16 %v2528
    %v2568 = vunpack.c.l.b16 %v2529
    %v2569 = vunpack.c.l.b16 %v2530
    %v2570 = vunpack.c.l.b16 %v2531
    %v2571 = vunpack.c.l.b16 %v2532
    %v2572 = vunpack.c.l.b16 %v2533
    %v2573 = vunpack.c.l.b16 %v2534
    %v2574 = vunpack.c.l.b16 %v2535
    %v2575 = vunpack.c.l.b16 %v2536
    %v2576 = vunpack.c.l.b16 %v2537
    %v2577 = vunpack.c.l.b16 %v2538
    %v2578 = vpack.c.b16 %v2563, %v2562
    %v2579 = vpack.c.b16 %v2565, %v2564
    %v2580 = vpack.c.b16 %v2567, %v2566
    %v2581 = vpack.c.b16 %v2569, %v2568
    %v2582 = vpack.c.b16 %v2571, %v2570
    %v2583 = vpack.c.b16 %v2573, %v2572
    %v2584 = vpack.c.b16 %v2575, %v2574
    %v2585 = vpack.c.b16 %v2577, %v2576
    %2594 = vmatprep.subr.bf16.mxu0 0
    %2595 = vmatpush1.bf16.msra.mxu0 %v2578
    %2596 = vmatprep.subr.bf16.mxu0 0
    %2597 = vmatpush1.bf16.msra.mxu0 %v2579
    %2598 = vmatprep.subr.bf16.mxu0 0
    %2599 = vmatpush1.bf16.msra.mxu0 %v2580
    %2600 = vmatprep.subr.bf16.mxu0 0
    %2601 = vmatpush1.bf16.msra.mxu0 %v2581
    %2602 = vmatprep.subr.bf16.mxu0 0
    %2603 = vmatpush1.bf16.msra.mxu0 %v2582
    %2604 = vmatprep.subr.bf16.mxu0 0
    %2605 = vmatpush1.bf16.msra.mxu0 %v2583
    %2606 = vmatprep.subr.bf16.mxu0 0
    %2607 = vmatpush1.bf16.msra.mxu0 %v2584
    %2608 = vmatprep.subr.bf16.mxu0 0
    %2609 = vmatpush1.bf16.msra.mxu0 %v2585
    %2610 = vmatprep.subr.bf16.mxu0 0
    %2611 = vmatpush1.bf16.msra.mxu0 0
    %2612 = vmatprep.subr.bf16.mxu0 0
    %2613 = vmatpush1.bf16.msra.mxu0 0
    %2614 = vmatprep.subr.bf16.mxu0 0
    %2615 = vmatpush1.bf16.msra.mxu0 0
    %2616 = vmatprep.subr.bf16.mxu0 0
    %2617 = vmatpush1.bf16.msra.mxu0 0
    %2618 = vmatprep.subr.bf16.mxu0 0
    %2619 = vmatpush1.bf16.msra.mxu0 0
    %2620 = vmatprep.subr.bf16.mxu0 0
    %2621 = vmatpush1.bf16.msra.mxu0 0
    %2622 = vmatprep.subr.bf16.mxu0 0
    %2623 = vmatpush1.bf16.msra.mxu0 0
    %2624 = vmatprep.subr.bf16.mxu0 0
    %2625 = vmatpush1.bf16.msra.mxu0 0
    %2626 = vmatprep.mubr.bf16.mxu0 0
    %2627 = vmatmul.mubr.bf16.gmra.mrb[0].mxu0 %v2522
    %v2628 = vpop.f32.mrb[0].mxu0
    %v2629 = vadd.f32 %v2544, %v2628
    %v2630 = vpop.f32.mrb[0].mxu0
    %v2631 = vpop.f32.mrb[0].mxu0
    %v2632 = vadd.f32 %v2544, %v2631
    %v2633 = vpop.f32.mrb[0].mxu0
    %2634 = vdwg.mxu0
    %2635 = vst [vmem:[%s20] sm:$0xff] %v2629
    %2636 = vst [vmem:[%s20 + $0x18] sm:$0xff] %v2632
    %s2637 = scalar_lea.vmem [#allocation7], 64
    %v2638 = vld [vmem:[%s2637] sm:$0xf]
    %v2639 = vld [vmem:[%s2637 + $0x4] sm:$0xf]
    %v2640 = vld [vmem:[%s2637 + $0x8] sm:$0xf]
    %v2641 = vld [vmem:[%s2637 + $0xc] sm:$0xf]
    %v2642 = vld [vmem:[%s2637 + $0x10] sm:$0xf]
    %v2643 = vld [vmem:[%s2637 + $0x14] sm:$0xf]
    %v2644 = vld [vmem:[%s2637 + $0x18] sm:$0xf]
    %v2645 = vld [vmem:[%s2637 + $0x1c] sm:$0xf]
    %v2646 = vld [vmem:[%s2637 + $0x20] sm:$0xf]
    %v2647 = vld [vmem:[%s2637 + $0x24] sm:$0xf]
    %v2648 = vld [vmem:[%s2637 + $0x28] sm:$0xf]
    %v2649 = vld [vmem:[%s2637 + $0x2c] sm:$0xf]
    %v2650 = vld [vmem:[%s2637 + $0x30] sm:$0xf]
    %v2651 = vld [vmem:[%s2637 + $0x34] sm:$0xf]
    %v2652 = vld [vmem:[%s2637 + $0x38] sm:$0xf]
    %v2653 = vld [vmem:[%s2637 + $0x3c] sm:$0xf]
    %s2654 = scalar_lea.vmem [#allocation9], 1
    %v2655 = vld [vmem:[%s2654] sm:$0x1]
    %v2657 = vlaneseq
    %v2658 = vshrl.u32 %v2657, 7
    %v2659 = vsub.s32 0, %v2658
    %v2660 = vrot.slane %v2655, %v2659
    %v2678 = vunpack.c.l.b16 %v2638
    %v2679 = vunpack.c.l.b16 %v2639
    %v2680 = vunpack.c.l.b16 %v2640
    %v2681 = vunpack.c.l.b16 %v2641
    %v2682 = vunpack.c.l.b16 %v2642
    %v2683 = vunpack.c.l.b16 %v2643
    %v2684 = vunpack.c.l.b16 %v2644
    %v2685 = vunpack.c.l.b16 %v2645
    %v2686 = vunpack.c.l.b16 %v2646
    %v2687 = vunpack.c.l.b16 %v2647
    %v2688 = vunpack.c.l.b16 %v2648
    %v2689 = vunpack.c.l.b16 %v2649
    %v2690 = vunpack.c.l.b16 %v2650
    %v2691 = vunpack.c.l.b16 %v2651
    %v2692 = vunpack.c.l.b16 %v2652
    %v2693 = vunpack.c.l.b16 %v2653
    %v2694 = vpack.c.b16 %v2679, %v2678
    %v2695 = vpack.c.b16 %v2681, %v2680
    %v2696 = vpack.c.b16 %v2683, %v2682
    %v2697 = vpack.c.b16 %v2685, %v2684
    %v2698 = vpack.c.b16 %v2687, %v2686
    %v2699 = vpack.c.b16 %v2689, %v2688
    %v2700 = vpack.c.b16 %v2691, %v2690
    %v2701 = vpack.c.b16 %v2693, %v2692
    %2710 = vmatprep.subr.bf16.mxu0 0
    %2711 = vmatpush1.bf16.msra.mxu0 %v2694
    %2712 = vmatprep.subr.bf16.mxu0 0
    %2713 = vmatpush1.bf16.msra.mxu0 %v2695
    %2714 = vmatprep.subr.bf16.mxu0 0
    %2715 = vmatpush1.bf16.msra.mxu0 %v2696
    %2716 = vmatprep.subr.bf16.mxu0 0
    %2717 = vmatpush1.bf16.msra.mxu0 %v2697
    %2718 = vmatprep.subr.bf16.mxu0 0
    %2719 = vmatpush1.bf16.msra.mxu0 %v2698
    %2720 = vmatprep.subr.bf16.mxu0 0
    %2721 = vmatpush1.bf16.msra.mxu0 %v2699
    %2722 = vmatprep.subr.bf16.mxu0 0
    %2723 = vmatpush1.bf16.msra.mxu0 %v2700
    %2724 = vmatprep.subr.bf16.mxu0 0
    %2725 = vmatpush1.bf16.msra.mxu0 %v2701
    %2726 = vmatprep.subr.bf16.mxu0 0
    %2727 = vmatpush1.bf16.msra.mxu0 0
    %2728 = vmatprep.subr.bf16.mxu0 0
    %2729 = vmatpush1.bf16.msra.mxu0 0
    %2730 = vmatprep.subr.bf16.mxu0 0
    %2731 = vmatpush1.bf16.msra.mxu0 0
    %2732 = vmatprep.subr.bf16.mxu0 0
    %2733 = vmatpush1.bf16.msra.mxu0 0
    %2734 = vmatprep.subr.bf16.mxu0 0
    %2735 = vmatpush1.bf16.msra.mxu0 0
    %2736 = vmatprep.subr.bf16.mxu0 0
    %2737 = vmatpush1.bf16.msra.mxu0 0
    %2738 = vmatprep.subr.bf16.mxu0 0
    %2739 = vmatpush1.bf16.msra.mxu0 0
    %2740 = vmatprep.subr.bf16.mxu0 0
    %2741 = vmatpush1.bf16.msra.mxu0 0
    %2742 = vmatprep.mubr.bf16.mxu0 0
    %2743 = vmatmul.mubr.bf16.gmra.mrb[0].mxu0 %v2367
    %v2744 = vpop.f32.mrb[0].mxu0
    %v2745 = vadd.f32 %v2660, %v2744
    %v2746 = vpop.f32.mrb[0].mxu0
    %v2747 = vpop.f32.mrb[0].mxu0
    %v2748 = vadd.f32 %v2660, %v2747
    %v2749 = vpop.f32.mrb[0].mxu0
    %2750 = vdwg.mxu0
    %s2751 = scalar_lea.vmem [#allocation10], 1
    %v2752 = vld [vmem:[%s2751] sm:$0x1]
    %s2753 = scalar_lea.vmem [#allocation12], 1
    %v2754 = vld [vmem:[%s2753] sm:$0x1]
    %2755 = vadd.xlane.f32.xlu0 %v2745
    %v2756 = vpop.xlane.xlu0 %2755
    %2757 = vadd.xlane.f32.xlu0 %v2748
    %v2758 = vpop.xlane.xlu0 %2757
    %v2759 = vmul.f32 %v2756, %v835
    %v2760 = vmul.f32 %v2758, %v835
    %v2761 = vsub.f32 %v2745, %v2759
    %v2762 = vsub.f32 %v2748, %v2760
    %v2763 = vmul.f32 %v2761, %v2761
    %v2764 = vmul.f32 %v2762, %v2762
    %2765 = vadd.xlane.f32.xlu0 %v2763
    %v2766 = vpop.xlane.xlu0 %2765
    %2767 = vadd.xlane.f32.xlu0 %v2764
    %v2768 = vpop.xlane.xlu0 %2767
    %v2769 = vmul.f32 %v2766, %v835
    %v2770 = vmul.f32 %v2768, %v835
    %v2771 = vadd.f32 %v2769, 1e-05
    %v2772 = vadd.f32 %v2770, 1e-05
    %v2773 = vrsqrt.pop %v2771
    %v2774 = vrsqrt.pop %v2772
    %v2775 = vmul.f32 %v2761, %v2773
    %v2776 = vmul.f32 %v2762, %v2774
    %v2778 = vlaneseq
    %v2779 = vshrl.u32 %v2778, 7
    %v2780 = vsub.s32 0, %v2779
    %v2781 = vrot.slane %v2752, %v2780
    %v2783 = vmul.f32 %v2775, %v2781
    %v2784 = vmul.f32 %v2776, %v2781
    %v2786 = vlaneseq
    %v2787 = vshrl.u32 %v2786, 7
    %v2788 = vsub.s32 0, %v2787
    %v2789 = vrot.slane %v2754, %v2788
    %v2791 = vadd.f32 %v2783, %v2789
    %v2792 = vadd.f32 %v2784, %v2789
    %v2793 = vmax.f32 %v2791, 0.0
    %v2794 = vmax.f32 %v2792, 0.0
    %v2795 = vpack.c.bf16 %v2794, %v2793
    %s2796 = scalar_lea.vmem [#allocation13], 64
    %v2797 = vld [vmem:[%s2796] sm:$0xf]
    %v2798 = vld [vmem:[%s2796 + $0x4] sm:$0xf]
    %v2799 = vld [vmem:[%s2796 + $0x8] sm:$0xf]
    %v2800 = vld [vmem:[%s2796 + $0xc] sm:$0xf]
    %v2801 = vld [vmem:[%s2796 + $0x10] sm:$0xf]
    %v2802 = vld [vmem:[%s2796 + $0x14] sm:$0xf]
    %v2803 = vld [vmem:[%s2796 + $0x18] sm:$0xf]
    %v2804 = vld [vmem:[%s2796 + $0x1c] sm:$0xf]
    %v2805 = vld [vmem:[%s2796 + $0x20] sm:$0xf]
    %v2806 = vld [vmem:[%s2796 + $0x24] sm:$0xf]
    %v2807 = vld [vmem:[%s2796 + $0x28] sm:$0xf]
    %v2808 = vld [vmem:[%s2796 + $0x2c] sm:$0xf]
    %v2809 = vld [vmem:[%s2796 + $0x30] sm:$0xf]
    %v2810 = vld [vmem:[%s2796 + $0x34] sm:$0xf]
    %v2811 = vld [vmem:[%s2796 + $0x38] sm:$0xf]
    %v2812 = vld [vmem:[%s2796 + $0x3c] sm:$0xf]
    %s2813 = scalar_lea.vmem [#allocation15], 1
    %v2814 = vld [vmem:[%s2813] sm:$0x1]
    %v2816 = vlaneseq
    %v2817 = vshrl.u32 %v2816, 7
    %v2818 = vsub.s32 0, %v2817
    %v2819 = vrot.slane %v2814, %v2818
    %v2837 = vunpack.c.l.b16 %v2797
    %v2838 = vunpack.c.l.b16 %v2798
    %v2839 = vunpack.c.l.b16 %v2799
    %v2840 = vunpack.c.l.b16 %v2800
    %v2841 = vunpack.c.l.b16 %v2801
    %v2842 = vunpack.c.l.b16 %v2802
    %v2843 = vunpack.c.l.b16 %v2803
    %v2844 = vunpack.c.l.b16 %v2804
    %v2845 = vunpack.c.l.b16 %v2805
    %v2846 = vunpack.c.l.b16 %v2806
    %v2847 = vunpack.c.l.b16 %v2807
    %v2848 = vunpack.c.l.b16 %v2808
    %v2849 = vunpack.c.l.b16 %v2809
    %v2850 = vunpack.c.l.b16 %v2810
    %v2851 = vunpack.c.l.b16 %v2811
    %v2852 = vunpack.c.l.b16 %v2812
    %v2853 = vpack.c.b16 %v2838, %v2837
    %v2854 = vpack.c.b16 %v2840, %v2839
    %v2855 = vpack.c.b16 %v2842, %v2841
    %v2856 = vpack.c.b16 %v2844, %v2843
    %v2857 = vpack.c.b16 %v2846, %v2845
    %v2858 = vpack.c.b16 %v2848, %v2847
    %v2859 = vpack.c.b16 %v2850, %v2849
    %v2860 = vpack.c.b16 %v2852, %v2851
    %2869 = vmatprep.subr.bf16.mxu0 0
    %2870 = vmatpush1.bf16.msra.mxu0 %v2853
    %2871 = vmatprep.subr.bf16.mxu0 0
    %2872 = vmatpush1.bf16.msra.mxu0 %v2854
    %2873 = vmatprep.subr.bf16.mxu0 0
    %2874 = vmatpush1.bf16.msra.mxu0 %v2855
    %2875 = vmatprep.subr.bf16.mxu0 0
    %2876 = vmatpush1.bf16.msra.mxu0 %v2856
    %2877 = vmatprep.subr.bf16.mxu0 0
    %2878 = vmatpush1.bf16.msra.mxu0 %v2857
    %2879 = vmatprep.subr.bf16.mxu0 0
    %2880 = vmatpush1.bf16.msra.mxu0 %v2858
    %2881 = vmatprep.subr.bf16.mxu0 0
    %2882 = vmatpush1.bf16.msra.mxu0 %v2859
    %2883 = vmatprep.subr.bf16.mxu0 0
    %2884 = vmatpush1.bf16.msra.mxu0 %v2860
    %2885 = vmatprep.subr.bf16.mxu0 0
    %2886 = vmatpush1.bf16.msra.mxu0 0
    %2887 = vmatprep.subr.bf16.mxu0 0
    %2888 = vmatpush1.bf16.msra.mxu0 0
    %2889 = vmatprep.subr.bf16.mxu0 0
    %2890 = vmatpush1.bf16.msra.mxu0 0
    %2891 = vmatprep.subr.bf16.mxu0 0
    %2892 = vmatpush1.bf16.msra.mxu0 0
    %2893 = vmatprep.subr.bf16.mxu0 0
    %2894 = vmatpush1.bf16.msra.mxu0 0
    %2895 = vmatprep.subr.bf16.mxu0 0
    %2896 = vmatpush1.bf16.msra.mxu0 0
    %2897 = vmatprep.subr.bf16.mxu0 0
    %2898 = vmatpush1.bf16.msra.mxu0 0
    %2899 = vmatprep.subr.bf16.mxu0 0
    %2900 = vmatpush1.bf16.msra.mxu0 0
    %2901 = vmatprep.mubr.bf16.mxu0 0
    %2902 = vmatmul.mubr.bf16.gmra.mrb[0].mxu0 %v2795
    %v2903 = vpop.f32.mrb[0].mxu0
    %v2904 = vadd.f32 %v2819, %v2903
    %v2905 = vpop.f32.mrb[0].mxu0
    %v2906 = vpop.f32.mrb[0].mxu0
    %v2907 = vadd.f32 %v2819, %v2906
    %v2908 = vpop.f32.mrb[0].mxu0
    %2909 = vdwg.mxu0
    %2910 = vst [vmem:[%s20 + $0x8] sm:$0xff] %v2904
    %2911 = vst [vmem:[%s20 + $0x20] sm:$0xff] %v2907
    %s2912 = scalar_lea.vmem [#allocation7], 128
    %v2913 = vld [vmem:[%s2912] sm:$0xf]
    %v2914 = vld [vmem:[%s2912 + $0x4] sm:$0xf]
    %v2915 = vld [vmem:[%s2912 + $0x8] sm:$0xf]
    %v2916 = vld [vmem:[%s2912 + $0xc] sm:$0xf]
    %v2917 = vld [vmem:[%s2912 + $0x10] sm:$0xf]
    %v2918 = vld [vmem:[%s2912 + $0x14] sm:$0xf]
    %v2919 = vld [vmem:[%s2912 + $0x18] sm:$0xf]
    %v2920 = vld [vmem:[%s2912 + $0x1c] sm:$0xf]
    %v2921 = vld [vmem:[%s2912 + $0x20] sm:$0xf]
    %v2922 = vld [vmem:[%s2912 + $0x24] sm:$0xf]
    %v2923 = vld [vmem:[%s2912 + $0x28] sm:$0xf]
    %v2924 = vld [vmem:[%s2912 + $0x2c] sm:$0xf]
    %v2925 = vld [vmem:[%s2912 + $0x30] sm:$0xf]
    %v2926 = vld [vmem:[%s2912 + $0x34] sm:$0xf]
    %v2927 = vld [vmem:[%s2912 + $0x38] sm:$0xf]
    %v2928 = vld [vmem:[%s2912 + $0x3c] sm:$0xf]
    %s2929 = scalar_lea.vmem [#allocation9], 2
    %v2930 = vld [vmem:[%s2929] sm:$0x1]
    %v2932 = vlaneseq
    %v2933 = vshrl.u32 %v2932, 7
    %v2934 = vsub.s32 0, %v2933
    %v2935 = vrot.slane %v2930, %v2934
    %v2953 = vunpack.c.l.b16 %v2913
    %v2954 = vunpack.c.l.b16 %v2914
    %v2955 = vunpack.c.l.b16 %v2915
    %v2956 = vunpack.c.l.b16 %v2916
    %v2957 = vunpack.c.l.b16 %v2917
    %v2958 = vunpack.c.l.b16 %v2918
    %v2959 = vunpack.c.l.b16 %v2919
    %v2960 = vunpack.c.l.b16 %v2920
    %v2961 = vunpack.c.l.b16 %v2921
    %v2962 = vunpack.c.l.b16 %v2922
    %v2963 = vunpack.c.l.b16 %v2923
    %v2964 = vunpack.c.l.b16 %v2924
    %v2965 = vunpack.c.l.b16 %v2925
    %v2966 = vunpack.c.l.b16 %v2926
    %v2967 = vunpack.c.l.b16 %v2927
    %v2968 = vunpack.c.l.b16 %v2928
    %v2969 = vpack.c.b16 %v2954, %v2953
    %v2970 = vpack.c.b16 %v2956, %v2955
    %v2971 = vpack.c.b16 %v2958, %v2957
    %v2972 = vpack.c.b16 %v2960, %v2959
    %v2973 = vpack.c.b16 %v2962, %v2961
    %v2974 = vpack.c.b16 %v2964, %v2963
    %v2975 = vpack.c.b16 %v2966, %v2965
    %v2976 = vpack.c.b16 %v2968, %v2967
    %2985 = vmatprep.subr.bf16.mxu0 0
    %2986 = vmatpush1.bf16.msra.mxu0 %v2969
    %2987 = vmatprep.subr.bf16.mxu0 0
    %2988 = vmatpush1.bf16.msra.mxu0 %v2970
    %2989 = vmatprep.subr.bf16.mxu0 0
    %2990 = vmatpush1.bf16.msra.mxu0 %v2971
    %2991 = vmatprep.subr.bf16.mxu0 0
    %2992 = vmatpush1.bf16.msra.mxu0 %v2972
    %2993 = vmatprep.subr.bf16.mxu0 0
    %2994 = vmatpush1.bf16.msra.mxu0 %v2973
    %2995 = vmatprep.subr.bf16.mxu0 0
    %2996 = vmatpush1.bf16.msra.mxu0 %v2974
    %2997 = vmatprep.subr.bf16.mxu0 0
    %2998 = vmatpush1.bf16.msra.mxu0 %v2975
    %2999 = vmatprep.subr.bf16.mxu0 0
    %3000 = vmatpush1.bf16.msra.mxu0 %v2976
    %3001 = vmatprep.subr.bf16.mxu0 0
    %3002 = vmatpush1.bf16.msra.mxu0 0
    %3003 = vmatprep.subr.bf16.mxu0 0
    %3004 = vmatpush1.bf16.msra.mxu0 0
    %3005 = vmatprep.subr.bf16.mxu0 0
    %3006 = vmatpush1.bf16.msra.mxu0 0
    %3007 = vmatprep.subr.bf16.mxu0 0
    %3008 = vmatpush1.bf16.msra.mxu0 0
    %3009 = vmatprep.subr.bf16.mxu0 0
    %3010 = vmatpush1.bf16.msra.mxu0 0
    %3011 = vmatprep.subr.bf16.mxu0 0
    %3012 = vmatpush1.bf16.msra.mxu0 0
    %3013 = vmatprep.subr.bf16.mxu0 0
    %3014 = vmatpush1.bf16.msra.mxu0 0
    %3015 = vmatprep.subr.bf16.mxu0 0
    %3016 = vmatpush1.bf16.msra.mxu0 0
    %3017 = vmatprep.mubr.bf16.mxu0 0
    %3018 = vmatmul.mubr.bf16.gmra.mrb[0].mxu0 %v2367
    %v3019 = vpop.f32.mrb[0].mxu0
    %v3020 = vadd.f32 %v2935, %v3019
    %v3021 = vpop.f32.mrb[0].mxu0
    %v3022 = vpop.f32.mrb[0].mxu0
    %v3023 = vadd.f32 %v2935, %v3022
    %v3024 = vpop.f32.mrb[0].mxu0
    %3025 = vdwg.mxu0
    %s3026 = scalar_lea.vmem [#allocation10], 2
    %v3027 = vld [vmem:[%s3026] sm:$0x1]
    %s3028 = scalar_lea.vmem [#allocation12], 2
    %v3029 = vld [vmem:[%s3028] sm:$0x1]
    %3030 = vadd.xlane.f32.xlu0 %v3020
    %v3031 = vpop.xlane.xlu0 %3030
    %3032 = vadd.xlane.f32.xlu0 %v3023
    %v3033 = vpop.xlane.xlu0 %3032
    %v3034 = vmul.f32 %v3031, %v835
    %v3035 = vmul.f32 %v3033, %v835
    %v3036 = vsub.f32 %v3020, %v3034
    %v3037 = vsub.f32 %v3023, %v3035
    %v3038 = vmul.f32 %v3036, %v3036
    %v3039 = vmul.f32 %v3037, %v3037
    %3040 = vadd.xlane.f32.xlu0 %v3038
    %v3041 = vpop.xlane.xlu0 %3040
    %3042 = vadd.xlane.f32.xlu0 %v3039
    %v3043 = vpop.xlane.xlu0 %3042
    %v3044 = vmul.f32 %v3041, %v835
    %v3045 = vmul.f32 %v3043, %v835
    %v3046 = vadd.f32 %v3044, 1e-05
    %v3047 = vadd.f32 %v3045, 1e-05
    %v3048 = vrsqrt.pop %v3046
    %v3049 = vrsqrt.pop %v3047
    %v3050 = vmul.f32 %v3036, %v3048
    %v3051 = vmul.f32 %v3037, %v3049
    %v3053 = vlaneseq
    %v3054 = vshrl.u32 %v3053, 7
    %v3055 = vsub.s32 0, %v3054
    %v3056 = vrot.slane %v3027, %v3055
    %v3058 = vmul.f32 %v3050, %v3056
    %v3059 = vmul.f32 %v3051, %v3056
    %v3061 = vlaneseq
    %v3062 = vshrl.u32 %v3061, 7
    %v3063 = vsub.s32 0, %v3062
    %v3064 = vrot.slane %v3029, %v3063
    %v3066 = vadd.f32 %v3058, %v3064
    %v3067 = vadd.f32 %v3059, %v3064
    %v3068 = vmax.f32 %v3066, 0.0
    %v3069 = vmax.f32 %v3067, 0.0
    %v3070 = vpack.c.bf16 %v3069, %v3068
    %s3071 = scalar_lea.vmem [#allocation13], 128
    %v3072 = vld [vmem:[%s3071] sm:$0xf]
    %v3073 = vld [vmem:[%s3071 + $0x4] sm:$0xf]
    %v3074 = vld [vmem:[%s3071 + $0x8] sm:$0xf]
    %v3075 = vld [vmem:[%s3071 + $0xc] sm:$0xf]
    %v3076 = vld [vmem:[%s3071 + $0x10] sm:$0xf]
    %v3077 = vld [vmem:[%s3071 + $0x14] sm:$0xf]
    %v3078 = vld [vmem:[%s3071 + $0x18] sm:$0xf]
    %v3079 = vld [vmem:[%s3071 + $0x1c] sm:$0xf]
    %v3080 = vld [vmem:[%s3071 + $0x20] sm:$0xf]
    %v3081 = vld [vmem:[%s3071 + $0x24] sm:$0xf]
    %v3082 = vld [vmem:[%s3071 + $0x28] sm:$0xf]
    %v3083 = vld [vmem:[%s3071 + $0x2c] sm:$0xf]
    %v3084 = vld [vmem:[%s3071 + $0x30] sm:$0xf]
    %v3085 = vld [vmem:[%s3071 + $0x34] sm:$0xf]
    %v3086 = vld [vmem:[%s3071 + $0x38] sm:$0xf]
    %v3087 = vld [vmem:[%s3071 + $0x3c] sm:$0xf]
    %s3088 = scalar_lea.vmem [#allocation15], 2
    %v3089 = vld [vmem:[%s3088] sm:$0x1]
    %v3091 = vlaneseq
    %v3092 = vshrl.u32 %v3091, 7
    %v3093 = vsub.s32 0, %v3092
    %v3094 = vrot.slane %v3089, %v3093
    %v3112 = vunpack.c.l.b16 %v3072
    %v3113 = vunpack.c.l.b16 %v3073
    %v3114 = vunpack.c.l.b16 %v3074
    %v3115 = vunpack.c.l.b16 %v3075
    %v3116 = vunpack.c.l.b16 %v3076
    %v3117 = vunpack.c.l.b16 %v3077
    %v3118 = vunpack.c.l.b16 %v3078
    %v3119 = vunpack.c.l.b16 %v3079
    %v3120 = vunpack.c.l.b16 %v3080
    %v3121 = vunpack.c.l.b16 %v3081
    %v3122 = vunpack.c.l.b16 %v3082
    %v3123 = vunpack.c.l.b16 %v3083
    %v3124 = vunpack.c.l.b16 %v3084
    %v3125 = vunpack.c.l.b16 %v3085
    %v3126 = vunpack.c.l.b16 %v3086
    %v3127 = vunpack.c.l.b16 %v3087
    %v3128 = vpack.c.b16 %v3113, %v3112
    %v3129 = vpack.c.b16 %v3115, %v3114
    %v3130 = vpack.c.b16 %v3117, %v3116
    %v3131 = vpack.c.b16 %v3119, %v3118
    %v3132 = vpack.c.b16 %v3121, %v3120
    %v3133 = vpack.c.b16 %v3123, %v3122
    %v3134 = vpack.c.b16 %v3125, %v3124
    %v3135 = vpack.c.b16 %v3127, %v3126
    %3144 = vmatprep.subr.bf16.mxu0 0
    %3145 = vmatpush1.bf16.msra.mxu0 %v3128
    %3146 = vmatprep.subr.bf16.mxu0 0
    %3147 = vmatpush1.bf16.msra.mxu0 %v3129
    %3148 = vmatprep.subr.bf16.mxu0 0
    %3149 = vmatpush1.bf16.msra.mxu0 %v3130
    %3150 = vmatprep.subr.bf16.mxu0 0
    %3151 = vmatpush1.bf16.msra.mxu0 %v3131
    %3152 = vmatprep.subr.bf16.mxu0 0
    %3153 = vmatpush1.bf16.msra.mxu0 %v3132
    %3154 = vmatprep.subr.bf16.mxu0 0
    %3155 = vmatpush1.bf16.msra.mxu0 %v3133
    %3156 = vmatprep.subr.bf16.mxu0 0
    %3157 = vmatpush1.bf16.msra.mxu0 %v3134
    %3158 = vmatprep.subr.bf16.mxu0 0
    %3159 = vmatpush1.bf16.msra.mxu0 %v3135
    %3160 = vmatprep.subr.bf16.mxu0 0
    %3161 = vmatpush1.bf16.msra.mxu0 0
    %3162 = vmatprep.subr.bf16.mxu0 0
    %3163 = vmatpush1.bf16.msra.mxu0 0
    %3164 = vmatprep.subr.bf16.mxu0 0
    %3165 = vmatpush1.bf16.msra.mxu0 0
    %3166 = vmatprep.subr.bf16.mxu0 0
    %3167 = vmatpush1.bf16.msra.mxu0 0
    %3168 = vmatprep.subr.bf16.mxu0 0
    %3169 = vmatpush1.bf16.msra.mxu0 0
    %3170 = vmatprep.subr.bf16.mxu0 0
    %3171 = vmatpush1.bf16.msra.mxu0 0
    %3172 = vmatprep.subr.bf16.mxu0 0
    %3173 = vmatpush1.bf16.msra.mxu0 0
    %3174 = vmatprep.subr.bf16.mxu0 0
    %3175 = vmatpush1.bf16.msra.mxu0 0
    %3176 = vmatprep.mubr.bf16.mxu0 0
    %3177 = vmatmul.mubr.bf16.gmra.mrb[0].mxu0 %v3070
    %v3178 = vpop.f32.mrb[0].mxu0
    %v3179 = vadd.f32 %v3094, %v3178
    %v3180 = vpop.f32.mrb[0].mxu0
    %v3181 = vpop.f32.mrb[0].mxu0
    %v3182 = vadd.f32 %v3094, %v3181
    %v3183 = vpop.f32.mrb[0].mxu0
    %3184 = vdwg.mxu0
    %3185 = vst [vmem:[%s20 + $0x10] sm:$0xff] %v3179
    %3186 = vst [vmem:[%s20 + $0x28] sm:$0xff] %v3182
    // Predicated region
    $region118: #{_lambda_.1} parent=1 // pred_check
      _
    $region119: #{_lambda_.1} parent=1 // pred_check_branch
      %3188 = sbr.rel (0) target = $region121
    $region120: #{_lambda_.1} parent=1 // pred_region
      _
    $region121: #{_lambda_.1} parent=1 // pred_fallthru
      _
    // Predicated region
    $region122: #{_lambda_.1} parent=1 // pred_check
      _
    $region123: #{_lambda_.1} parent=1 // pred_check_branch
      %3190 = sbr.rel (0) target = $region125
    $region124: #{_lambda_.1} parent=1 // pred_region
      _
    $region125: #{_lambda_.1} parent=1 // pred_fallthru
      _
    %3191 = vsyncpa [#allocation3], 1
    %3192 = vsyncpa [#allocation5], 1
    %3193 = vsyncpa [#allocation8], 1
    %3194 = vsyncpa [#allocation11], 1
    %3195 = vsyncpa [#allocation14], 1

</llo_original>
